<compile_context>
chip_gen: v7x
topology: tpu7x:2x2x1
jax: 0.10.0
libtpu: 0.0.40
codegen_flags: <defaults>
</compile_context>

<pallas_src>
import functools

import jax
import jax.numpy as jnp
import numpy as np
from jax import lax
from jax.experimental import pallas as pl
from jax.experimental.pallas import tpu as pltpu


# ---------------------------------------------------------------------------
# One fused kernel: QKV projection + multi-head attention + output projection.
# ---------------------------------------------------------------------------
def _fused_attention_kernel(x_ref, wqkv_ref, bqkv_ref, wout_ref, bout_ref,
                            o_ref, *, batch, seq, heads):
    dim = wout_ref.shape[0]
    d = dim // heads

    x = x_ref[...]                                              # (b*n, dim)

    # 1) QKV projection. Q columns of w_qkv / b_qkv are pre-scaled by dim**-0.5
    #    at parameter-prep time, so no per-element scale multiply in-kernel.
    qkv = jnp.dot(x, wqkv_ref[...],
                  preferred_element_type=jnp.float32) + bqkv_ref[...]  # (b*n, 3*dim) f32
    q = qkv[:, 0 * dim:1 * dim]
    k = qkv[:, 1 * dim:2 * dim]
    v = qkv[:, 2 * dim:3 * dim]

    # 2) Per-(batch, head) softmax attention on VMEM-resident data; results are
    #    assembled into a lane-dense (b*n, dim) context slab (heads along lanes).
    batch_rows = []
    for bi in range(batch):
        r0 = bi * seq
        head_cols = []
        for h in range(heads):
            c0 = h * d
            qh = q[r0:r0 + seq, c0:c0 + d]                      # (n, d)
            kh = k[r0:r0 + seq, c0:c0 + d]                      # (n, d)
            vh = v[r0:r0 + seq, c0:c0 + d]                      # (n, d)
            # q @ k^T without materializing a transposed copy of k.
            s = lax.dot_general(qh, kh, (((1,), (1,)), ((), ())),
                                preferred_element_type=jnp.float32)  # (n, n)
            m = jnp.max(s, axis=-1, keepdims=True)
            e = jnp.exp(s - m)
            # Exact reciprocal: self-check asserts 1e-5 vs. reference.
            p = e * pl.reciprocal(jnp.sum(e, axis=-1, keepdims=True), approx=False)
            head_cols.append(jnp.dot(p, vh,
                                     preferred_element_type=jnp.float32))  # (n, d)
        batch_rows.append(jnp.concatenate(head_cols, axis=1))   # (n, dim)
    ctx = jnp.concatenate(batch_rows, axis=0)                   # (b*n, dim)

    # 3) Output projection. Dropout (do1) is identity at inference.
    out = jnp.dot(ctx, wout_ref[...],
                  preferred_element_type=jnp.float32) + bout_ref[...]
    o_ref[...] = out.astype(o_ref.dtype)


def prepare_params(params, dim):
    """One-time (outside the hot path) constant-fold of the softmax scale into
    the Q columns of the QKV projection. Module semantics: scale = dim**-0.5."""
    scale = dim ** (-0.5)
    col_scale = jnp.concatenate(
        [jnp.full((dim,), scale, params["w_qkv"].dtype),
         jnp.ones((2 * dim,), params["w_qkv"].dtype)])
    return {
        "w_qkv": params["w_qkv"] * col_scale[None, :],
        "b_qkv": params["b_qkv"] * col_scale,
        "w_out": params["w_out"],
        "b_out": params["b_out"],
    }


def attention_forward(x, prepped_params, heads):
    """x: (b, n, dim); prepped_params from prepare_params(). Returns (b, n, dim)."""
    b, n, dim = x.shape
    x2d = x.reshape(b * n, dim)
    kernel = functools.partial(_fused_attention_kernel,
                               batch=b, seq=n, heads=heads)
    out2d = pl.pallas_call(
        kernel,
        out_shape=jax.ShapeDtypeStruct((b * n, dim), x.dtype),
        in_specs=[
            pl.BlockSpec((b * n, dim), lambda: (0, 0)),
            pl.BlockSpec((dim, 3 * dim), lambda: (0, 0)),
            pl.BlockSpec((1, 3 * dim), lambda: (0, 0)),
            pl.BlockSpec((dim, dim), lambda: (0, 0)),
            pl.BlockSpec((1, dim), lambda: (0, 0)),
        ],
        out_specs=pl.BlockSpec((b * n, dim), lambda: (0, 0)),
        # Explicit, conservative VMEM budget: safe on v5e/v6e (128 MiB) and
        # within the v7x 64 MiB / 32 MiB-scoped limit.
        compiler_params=pltpu.CompilerParams(vmem_limit_bytes=32 * 1024 * 1024),
    )(x2d,
      prepped_params["w_qkv"], prepped_params["b_qkv"].reshape(1, -1),
      prepped_params["w_out"], prepped_params["b_out"].reshape(1, -1))
    return out2d.reshape(b, n, dim)


# ---------------------------------------------------------------------------
# Pure-JAX reference (semantics of the PyTorch forward with mask=None, eval).
# ---------------------------------------------------------------------------
def attention_reference(x, params, heads):
    b, n, dim = x.shape
    d = dim // heads
    scale = dim ** (-0.5)
    qkv = x @ params["w_qkv"] + params["b_qkv"]
    qkv = qkv.reshape(b, n, 3, heads, d)
    q, k, v = (jnp.transpose(qkv[:, :, i], (0, 2, 1, 3)) for i in range(3))
    dots = jnp.einsum("bhid,bhjd->bhij", q, k) * scale
    attn = jax.nn.softmax(dots, axis=-1)
    out = jnp.einsum("bhij,bhjd->bhid", attn, v)
    out = jnp.transpose(out, (0, 2, 1, 3)).reshape(b, n, dim)
    return out @ params["w_out"] + params["b_out"]


if __name__ == "__main__":
    # Small shapes consistent with the module: batch=2, seq=8, dim=32, heads=8.
    B, N, DIM, HEADS = 2, 8, 32, 8

    key = jax.random.PRNGKey(0)
    k_x, k_wq, k_bq, k_wo, k_bo = jax.random.split(key, 5)

    x = jax.random.normal(k_x, (B, N, DIM), dtype=jnp.float32)

    # Deterministic parameter init (shapes match nn.Linear(dim, 3*dim) / nn.Linear(dim, dim)).
    params = {
        "w_qkv": jax.random.normal(k_wq, (DIM, 3 * DIM), dtype=jnp.float32) * 0.05,
        "b_qkv": jax.random.normal(k_bq, (3 * DIM,), dtype=jnp.float32) * 0.05,
        "w_out": jax.random.normal(k_wo, (DIM, DIM), dtype=jnp.float32) * 0.05,
        "b_out": jax.random.normal(k_bo, (DIM,), dtype=jnp.float32) * 0.05,
    }

    # One-time parameter prep (scale folded into Q projection), then jit the forward.
    prepped = prepare_params(params, DIM)
    fwd = jax.jit(functools.partial(attention_forward, heads=HEADS))

    out = fwd(x, prepped)
    out = jax.block_until_ready(out)

    ref = attention_reference(x, params, HEADS)
    np.testing.assert_allclose(np.asarray(out), np.asarray(ref), rtol=1e-5, atol=1e-5)

    print("KERNEL_OK")
</pallas_src>

<mosaic_0001>
module attributes {stable_mosaic.version = 11 : i64} {
  func.func @_fused_attention_kernel(%arg0: memref<16x32xf32, #tpu.memory_space<vmem>>, %arg1: memref<32x96xf32, #tpu.memory_space<vmem>>, %arg2: memref<1x96xf32, #tpu.memory_space<vmem>>, %arg3: memref<32x32xf32, #tpu.memory_space<vmem>>, %arg4: memref<1x32xf32, #tpu.memory_space<vmem>>, %arg5: memref<16x32xf32, #tpu.memory_space<vmem>>) attributes {dimension_semantics = [], scalar_prefetch = 0 : i64, scratch_operands = 0 : i64, tpu.core_type = #tpu.core_type<tc>} {
    %c0 = arith.constant 0 : index
    %c0_0 = arith.constant 0 : index
    %0 = vector.load %arg0[%c0, %c0_0] : memref<16x32xf32, #tpu.memory_space<vmem>>, vector<16x32xf32>
    %c0_1 = arith.constant 0 : index
    %c0_2 = arith.constant 0 : index
    %1 = vector.load %arg1[%c0_1, %c0_2] : memref<32x96xf32, #tpu.memory_space<vmem>>, vector<32x96xf32>
    %cst = arith.constant dense<0.000000e+00> : vector<16x96xf32>
    %2 = tpu.matmul %0, %1, %cst {dimension_numbers = #tpu.dot_dimension_numbers<[1], [0], [0], [1], [0, 0, 1, 1], [], []>} : vector<16x32xf32>, vector<32x96xf32>, vector<16x96xf32> -> vector<16x96xf32>
    %c0_3 = arith.constant 0 : index
    %c0_4 = arith.constant 0 : index
    %3 = vector.load %arg2[%c0_3, %c0_4] : memref<1x96xf32, #tpu.memory_space<vmem>>, vector<1x96xf32>
    %4 = vector.broadcast %3 : vector<1x96xf32> to vector<16x96xf32>
    %5 = arith.addf %2, %4 : vector<16x96xf32>
    %6 = vector.extract_strided_slice %5 {offsets = [0, 0], sizes = [16, 32], strides = [1, 1]} : vector<16x96xf32> to vector<16x32xf32>
    %7 = vector.extract_strided_slice %5 {offsets = [0, 32], sizes = [16, 32], strides = [1, 1]} : vector<16x96xf32> to vector<16x32xf32>
    %8 = vector.extract_strided_slice %5 {offsets = [0, 64], sizes = [16, 32], strides = [1, 1]} : vector<16x96xf32> to vector<16x32xf32>
    %9 = vector.extract_strided_slice %6 {offsets = [0, 0], sizes = [8, 4], strides = [1, 1]} : vector<16x32xf32> to vector<8x4xf32>
    %10 = vector.extract_strided_slice %7 {offsets = [0, 0], sizes = [8, 4], strides = [1, 1]} : vector<16x32xf32> to vector<8x4xf32>
    %11 = vector.extract_strided_slice %8 {offsets = [0, 0], sizes = [8, 4], strides = [1, 1]} : vector<16x32xf32> to vector<8x4xf32>
    %cst_5 = arith.constant dense<0.000000e+00> : vector<8x8xf32>
    %12 = tpu.matmul %9, %10, %cst_5 {dimension_numbers = #tpu.dot_dimension_numbers<[1], [1], [0], [0], [0, 0, 1, 0], [], []>} : vector<8x4xf32>, vector<8x4xf32>, vector<8x8xf32> -> vector<8x8xf32>
    %cst_6 = arith.constant dense<0xFF800000> : vector<8xf32>
    %13 = vector.multi_reduction <maximumf>, %12, %cst_6 [1] : vector<8x8xf32> to vector<8xf32>
    %14 = vector.shape_cast %13 : vector<8xf32> to vector<8x1xf32>
    %15 = vector.broadcast %14 : vector<8x1xf32> to vector<8x8xf32>
    %16 = arith.subf %12, %15 : vector<8x8xf32>
    %17 = math.exp %16 : vector<8x8xf32>
    %cst_7 = arith.constant dense<0.000000e+00> : vector<8xf32>
    %18 = vector.multi_reduction <add>, %17, %cst_7 [1] : vector<8x8xf32> to vector<8xf32>
    %19 = vector.shape_cast %18 : vector<8xf32> to vector<8x1xf32>
    %20 = tpu.reciprocal %19 : vector<8x1xf32> -> vector<8x1xf32>
    %21 = vector.broadcast %20 : vector<8x1xf32> to vector<8x8xf32>
    %22 = arith.mulf %17, %21 : vector<8x8xf32>
    %cst_8 = arith.constant dense<0.000000e+00> : vector<8x4xf32>
    %23 = tpu.matmul %22, %11, %cst_8 {dimension_numbers = #tpu.dot_dimension_numbers<[1], [0], [0], [1], [0, 0, 1, 1], [], []>} : vector<8x8xf32>, vector<8x4xf32>, vector<8x4xf32> -> vector<8x4xf32>
    %24 = vector.extract_strided_slice %6 {offsets = [0, 4], sizes = [8, 4], strides = [1, 1]} : vector<16x32xf32> to vector<8x4xf32>
    %25 = vector.extract_strided_slice %7 {offsets = [0, 4], sizes = [8, 4], strides = [1, 1]} : vector<16x32xf32> to vector<8x4xf32>
    %26 = vector.extract_strided_slice %8 {offsets = [0, 4], sizes = [8, 4], strides = [1, 1]} : vector<16x32xf32> to vector<8x4xf32>
    %cst_9 = arith.constant dense<0.000000e+00> : vector<8x8xf32>
    %27 = tpu.matmul %24, %25, %cst_9 {dimension_numbers = #tpu.dot_dimension_numbers<[1], [1], [0], [0], [0, 0, 1, 0], [], []>} : vector<8x4xf32>, vector<8x4xf32>, vector<8x8xf32> -> vector<8x8xf32>
    %cst_10 = arith.constant dense<0xFF800000> : vector<8xf32>
    %28 = vector.multi_reduction <maximumf>, %27, %cst_10 [1] : vector<8x8xf32> to vector<8xf32>
    %29 = vector.shape_cast %28 : vector<8xf32> to vector<8x1xf32>
    %30 = vector.broadcast %29 : vector<8x1xf32> to vector<8x8xf32>
    %31 = arith.subf %27, %30 : vector<8x8xf32>
    %32 = math.exp %31 : vector<8x8xf32>
    %cst_11 = arith.constant dense<0.000000e+00> : vector<8xf32>
    %33 = vector.multi_reduction <add>, %32, %cst_11 [1] : vector<8x8xf32> to vector<8xf32>
    %34 = vector.shape_cast %33 : vector<8xf32> to vector<8x1xf32>
    %35 = tpu.reciprocal %34 : vector<8x1xf32> -> vector<8x1xf32>
    %36 = vector.broadcast %35 : vector<8x1xf32> to vector<8x8xf32>
    %37 = arith.mulf %32, %36 : vector<8x8xf32>
    %cst_12 = arith.constant dense<0.000000e+00> : vector<8x4xf32>
    %38 = tpu.matmul %37, %26, %cst_12 {dimension_numbers = #tpu.dot_dimension_numbers<[1], [0], [0], [1], [0, 0, 1, 1], [], []>} : vector<8x8xf32>, vector<8x4xf32>, vector<8x4xf32> -> vector<8x4xf32>
    %39 = vector.extract_strided_slice %6 {offsets = [0, 8], sizes = [8, 4], strides = [1, 1]} : vector<16x32xf32> to vector<8x4xf32>
    %40 = vector.extract_strided_slice %7 {offsets = [0, 8], sizes = [8, 4], strides = [1, 1]} : vector<16x32xf32> to vector<8x4xf32>
    %41 = vector.extract_strided_slice %8 {offsets = [0, 8], sizes = [8, 4], strides = [1, 1]} : vector<16x32xf32> to vector<8x4xf32>
    %cst_13 = arith.constant dense<0.000000e+00> : vector<8x8xf32>
    %42 = tpu.matmul %39, %40, %cst_13 {dimension_numbers = #tpu.dot_dimension_numbers<[1], [1], [0], [0], [0, 0, 1, 0], [], []>} : vector<8x4xf32>, vector<8x4xf32>, vector<8x8xf32> -> vector<8x8xf32>
    %cst_14 = arith.constant dense<0xFF800000> : vector<8xf32>
    %43 = vector.multi_reduction <maximumf>, %42, %cst_14 [1] : vector<8x8xf32> to vector<8xf32>
    %44 = vector.shape_cast %43 : vector<8xf32> to vector<8x1xf32>
    %45 = vector.broadcast %44 : vector<8x1xf32> to vector<8x8xf32>
    %46 = arith.subf %42, %45 : vector<8x8xf32>
    %47 = math.exp %46 : vector<8x8xf32>
    %cst_15 = arith.constant dense<0.000000e+00> : vector<8xf32>
    %48 = vector.multi_reduction <add>, %47, %cst_15 [1] : vector<8x8xf32> to vector<8xf32>
    %49 = vector.shape_cast %48 : vector<8xf32> to vector<8x1xf32>
    %50 = tpu.reciprocal %49 : vector<8x1xf32> -> vector<8x1xf32>
    %51 = vector.broadcast %50 : vector<8x1xf32> to vector<8x8xf32>
    %52 = arith.mulf %47, %51 : vector<8x8xf32>
    %cst_16 = arith.constant dense<0.000000e+00> : vector<8x4xf32>
    %53 = tpu.matmul %52, %41, %cst_16 {dimension_numbers = #tpu.dot_dimension_numbers<[1], [0], [0], [1], [0, 0, 1, 1], [], []>} : vector<8x8xf32>, vector<8x4xf32>, vector<8x4xf32> -> vector<8x4xf32>
    %54 = vector.extract_strided_slice %6 {offsets = [0, 12], sizes = [8, 4], strides = [1, 1]} : vector<16x32xf32> to vector<8x4xf32>
    %55 = vector.extract_strided_slice %7 {offsets = [0, 12], sizes = [8, 4], strides = [1, 1]} : vector<16x32xf32> to vector<8x4xf32>
    %56 = vector.extract_strided_slice %8 {offsets = [0, 12], sizes = [8, 4], strides = [1, 1]} : vector<16x32xf32> to vector<8x4xf32>
    %cst_17 = arith.constant dense<0.000000e+00> : vector<8x8xf32>
    %57 = tpu.matmul %54, %55, %cst_17 {dimension_numbers = #tpu.dot_dimension_numbers<[1], [1], [0], [0], [0, 0, 1, 0], [], []>} : vector<8x4xf32>, vector<8x4xf32>, vector<8x8xf32> -> vector<8x8xf32>
    %cst_18 = arith.constant dense<0xFF800000> : vector<8xf32>
    %58 = vector.multi_reduction <maximumf>, %57, %cst_18 [1] : vector<8x8xf32> to vector<8xf32>
    %59 = vector.shape_cast %58 : vector<8xf32> to vector<8x1xf32>
    %60 = vector.broadcast %59 : vector<8x1xf32> to vector<8x8xf32>
    %61 = arith.subf %57, %60 : vector<8x8xf32>
    %62 = math.exp %61 : vector<8x8xf32>
    %cst_19 = arith.constant dense<0.000000e+00> : vector<8xf32>
    %63 = vector.multi_reduction <add>, %62, %cst_19 [1] : vector<8x8xf32> to vector<8xf32>
    %64 = vector.shape_cast %63 : vector<8xf32> to vector<8x1xf32>
    %65 = tpu.reciprocal %64 : vector<8x1xf32> -> vector<8x1xf32>
    %66 = vector.broadcast %65 : vector<8x1xf32> to vector<8x8xf32>
    %67 = arith.mulf %62, %66 : vector<8x8xf32>
    %cst_20 = arith.constant dense<0.000000e+00> : vector<8x4xf32>
    %68 = tpu.matmul %67, %56, %cst_20 {dimension_numbers = #tpu.dot_dimension_numbers<[1], [0], [0], [1], [0, 0, 1, 1], [], []>} : vector<8x8xf32>, vector<8x4xf32>, vector<8x4xf32> -> vector<8x4xf32>
    %69 = vector.extract_strided_slice %6 {offsets = [0, 16], sizes = [8, 4], strides = [1, 1]} : vector<16x32xf32> to vector<8x4xf32>
    %70 = vector.extract_strided_slice %7 {offsets = [0, 16], sizes = [8, 4], strides = [1, 1]} : vector<16x32xf32> to vector<8x4xf32>
    %71 = vector.extract_strided_slice %8 {offsets = [0, 16], sizes = [8, 4], strides = [1, 1]} : vector<16x32xf32> to vector<8x4xf32>
    %cst_21 = arith.constant dense<0.000000e+00> : vector<8x8xf32>
    %72 = tpu.matmul %69, %70, %cst_21 {dimension_numbers = #tpu.dot_dimension_numbers<[1], [1], [0], [0], [0, 0, 1, 0], [], []>} : vector<8x4xf32>, vector<8x4xf32>, vector<8x8xf32> -> vector<8x8xf32>
    %cst_22 = arith.constant dense<0xFF800000> : vector<8xf32>
    %73 = vector.multi_reduction <maximumf>, %72, %cst_22 [1] : vector<8x8xf32> to vector<8xf32>
    %74 = vector.shape_cast %73 : vector<8xf32> to vector<8x1xf32>
    %75 = vector.broadcast %74 : vector<8x1xf32> to vector<8x8xf32>
    %76 = arith.subf %72, %75 : vector<8x8xf32>
    %77 = math.exp %76 : vector<8x8xf32>
    %cst_23 = arith.constant dense<0.000000e+00> : vector<8xf32>
    %78 = vector.multi_reduction <add>, %77, %cst_23 [1] : vector<8x8xf32> to vector<8xf32>
    %79 = vector.shape_cast %78 : vector<8xf32> to vector<8x1xf32>
    %80 = tpu.reciprocal %79 : vector<8x1xf32> -> vector<8x1xf32>
    %81 = vector.broadcast %80 : vector<8x1xf32> to vector<8x8xf32>
    %82 = arith.mulf %77, %81 : vector<8x8xf32>
    %cst_24 = arith.constant dense<0.000000e+00> : vector<8x4xf32>
    %83 = tpu.matmul %82, %71, %cst_24 {dimension_numbers = #tpu.dot_dimension_numbers<[1], [0], [0], [1], [0, 0, 1, 1], [], []>} : vector<8x8xf32>, vector<8x4xf32>, vector<8x4xf32> -> vector<8x4xf32>
    %84 = vector.extract_strided_slice %6 {offsets = [0, 20], sizes = [8, 4], strides = [1, 1]} : vector<16x32xf32> to vector<8x4xf32>
    %85 = vector.extract_strided_slice %7 {offsets = [0, 20], sizes = [8, 4], strides = [1, 1]} : vector<16x32xf32> to vector<8x4xf32>
    %86 = vector.extract_strided_slice %8 {offsets = [0, 20], sizes = [8, 4], strides = [1, 1]} : vector<16x32xf32> to vector<8x4xf32>
    %cst_25 = arith.constant dense<0.000000e+00> : vector<8x8xf32>
    %87 = tpu.matmul %84, %85, %cst_25 {dimension_numbers = #tpu.dot_dimension_numbers<[1], [1], [0], [0], [0, 0, 1, 0], [], []>} : vector<8x4xf32>, vector<8x4xf32>, vector<8x8xf32> -> vector<8x8xf32>
    %cst_26 = arith.constant dense<0xFF800000> : vector<8xf32>
    %88 = vector.multi_reduction <maximumf>, %87, %cst_26 [1] : vector<8x8xf32> to vector<8xf32>
    %89 = vector.shape_cast %88 : vector<8xf32> to vector<8x1xf32>
    %90 = vector.broadcast %89 : vector<8x1xf32> to vector<8x8xf32>
    %91 = arith.subf %87, %90 : vector<8x8xf32>
    %92 = math.exp %91 : vector<8x8xf32>
    %cst_27 = arith.constant dense<0.000000e+00> : vector<8xf32>
    %93 = vector.multi_reduction <add>, %92, %cst_27 [1] : vector<8x8xf32> to vector<8xf32>
    %94 = vector.shape_cast %93 : vector<8xf32> to vector<8x1xf32>
    %95 = tpu.reciprocal %94 : vector<8x1xf32> -> vector<8x1xf32>
    %96 = vector.broadcast %95 : vector<8x1xf32> to vector<8x8xf32>
    %97 = arith.mulf %92, %96 : vector<8x8xf32>
    %cst_28 = arith.constant dense<0.000000e+00> : vector<8x4xf32>
    %98 = tpu.matmul %97, %86, %cst_28 {dimension_numbers = #tpu.dot_dimension_numbers<[1], [0], [0], [1], [0, 0, 1, 1], [], []>} : vector<8x8xf32>, vector<8x4xf32>, vector<8x4xf32> -> vector<8x4xf32>
    %99 = vector.extract_strided_slice %6 {offsets = [0, 24], sizes = [8, 4], strides = [1, 1]} : vector<16x32xf32> to vector<8x4xf32>
    %100 = vector.extract_strided_slice %7 {offsets = [0, 24], sizes = [8, 4], strides = [1, 1]} : vector<16x32xf32> to vector<8x4xf32>
    %101 = vector.extract_strided_slice %8 {offsets = [0, 24], sizes = [8, 4], strides = [1, 1]} : vector<16x32xf32> to vector<8x4xf32>
    %cst_29 = arith.constant dense<0.000000e+00> : vector<8x8xf32>
    %102 = tpu.matmul %99, %100, %cst_29 {dimension_numbers = #tpu.dot_dimension_numbers<[1], [1], [0], [0], [0, 0, 1, 0], [], []>} : vector<8x4xf32>, vector<8x4xf32>, vector<8x8xf32> -> vector<8x8xf32>
    %cst_30 = arith.constant dense<0xFF800000> : vector<8xf32>
    %103 = vector.multi_reduction <maximumf>, %102, %cst_30 [1] : vector<8x8xf32> to vector<8xf32>
    %104 = vector.shape_cast %103 : vector<8xf32> to vector<8x1xf32>
    %105 = vector.broadcast %104 : vector<8x1xf32> to vector<8x8xf32>
    %106 = arith.subf %102, %105 : vector<8x8xf32>
    %107 = math.exp %106 : vector<8x8xf32>
    %cst_31 = arith.constant dense<0.000000e+00> : vector<8xf32>
    %108 = vector.multi_reduction <add>, %107, %cst_31 [1] : vector<8x8xf32> to vector<8xf32>
    %109 = vector.shape_cast %108 : vector<8xf32> to vector<8x1xf32>
    %110 = tpu.reciprocal %109 : vector<8x1xf32> -> vector<8x1xf32>
    %111 = vector.broadcast %110 : vector<8x1xf32> to vector<8x8xf32>
    %112 = arith.mulf %107, %111 : vector<8x8xf32>
    %cst_32 = arith.constant dense<0.000000e+00> : vector<8x4xf32>
    %113 = tpu.matmul %112, %101, %cst_32 {dimension_numbers = #tpu.dot_dimension_numbers<[1], [0], [0], [1], [0, 0, 1, 1], [], []>} : vector<8x8xf32>, vector<8x4xf32>, vector<8x4xf32> -> vector<8x4xf32>
    %114 = vector.extract_strided_slice %6 {offsets = [0, 28], sizes = [8, 4], strides = [1, 1]} : vector<16x32xf32> to vector<8x4xf32>
    %115 = vector.extract_strided_slice %7 {offsets = [0, 28], sizes = [8, 4], strides = [1, 1]} : vector<16x32xf32> to vector<8x4xf32>
    %116 = vector.extract_strided_slice %8 {offsets = [0, 28], sizes = [8, 4], strides = [1, 1]} : vector<16x32xf32> to vector<8x4xf32>
    %cst_33 = arith.constant dense<0.000000e+00> : vector<8x8xf32>
    %117 = tpu.matmul %114, %115, %cst_33 {dimension_numbers = #tpu.dot_dimension_numbers<[1], [1], [0], [0], [0, 0, 1, 0], [], []>} : vector<8x4xf32>, vector<8x4xf32>, vector<8x8xf32> -> vector<8x8xf32>
    %cst_34 = arith.constant dense<0xFF800000> : vector<8xf32>
    %118 = vector.multi_reduction <maximumf>, %117, %cst_34 [1] : vector<8x8xf32> to vector<8xf32>
    %119 = vector.shape_cast %118 : vector<8xf32> to vector<8x1xf32>
    %120 = vector.broadcast %119 : vector<8x1xf32> to vector<8x8xf32>
    %121 = arith.subf %117, %120 : vector<8x8xf32>
    %122 = math.exp %121 : vector<8x8xf32>
    %cst_35 = arith.constant dense<0.000000e+00> : vector<8xf32>
    %123 = vector.multi_reduction <add>, %122, %cst_35 [1] : vector<8x8xf32> to vector<8xf32>
    %124 = vector.shape_cast %123 : vector<8xf32> to vector<8x1xf32>
    %125 = tpu.reciprocal %124 : vector<8x1xf32> -> vector<8x1xf32>
    %126 = vector.broadcast %125 : vector<8x1xf32> to vector<8x8xf32>
    %127 = arith.mulf %122, %126 : vector<8x8xf32>
    %cst_36 = arith.constant dense<0.000000e+00> : vector<8x4xf32>
    %128 = tpu.matmul %127, %116, %cst_36 {dimension_numbers = #tpu.dot_dimension_numbers<[1], [0], [0], [1], [0, 0, 1, 1], [], []>} : vector<8x8xf32>, vector<8x4xf32>, vector<8x4xf32> -> vector<8x4xf32>
    %129 = tpu.concatenate %23, %38, %53, %68, %83, %98, %113, %128 in 1 : vector<8x4xf32>, vector<8x4xf32>, vector<8x4xf32>, vector<8x4xf32>, vector<8x4xf32>, vector<8x4xf32>, vector<8x4xf32>, vector<8x4xf32> -> vector<8x32xf32>
    %130 = vector.extract_strided_slice %6 {offsets = [8, 0], sizes = [8, 4], strides = [1, 1]} : vector<16x32xf32> to vector<8x4xf32>
    %131 = vector.extract_strided_slice %7 {offsets = [8, 0], sizes = [8, 4], strides = [1, 1]} : vector<16x32xf32> to vector<8x4xf32>
    %132 = vector.extract_strided_slice %8 {offsets = [8, 0], sizes = [8, 4], strides = [1, 1]} : vector<16x32xf32> to vector<8x4xf32>
    %cst_37 = arith.constant dense<0.000000e+00> : vector<8x8xf32>
    %133 = tpu.matmul %130, %131, %cst_37 {dimension_numbers = #tpu.dot_dimension_numbers<[1], [1], [0], [0], [0, 0, 1, 0], [], []>} : vector<8x4xf32>, vector<8x4xf32>, vector<8x8xf32> -> vector<8x8xf32>
    %cst_38 = arith.constant dense<0xFF800000> : vector<8xf32>
    %134 = vector.multi_reduction <maximumf>, %133, %cst_38 [1] : vector<8x8xf32> to vector<8xf32>
    %135 = vector.shape_cast %134 : vector<8xf32> to vector<8x1xf32>
    %136 = vector.broadcast %135 : vector<8x1xf32> to vector<8x8xf32>
    %137 = arith.subf %133, %136 : vector<8x8xf32>
    %138 = math.exp %137 : vector<8x8xf32>
    %cst_39 = arith.constant dense<0.000000e+00> : vector<8xf32>
    %139 = vector.multi_reduction <add>, %138, %cst_39 [1] : vector<8x8xf32> to vector<8xf32>
    %140 = vector.shape_cast %139 : vector<8xf32> to vector<8x1xf32>
    %141 = tpu.reciprocal %140 : vector<8x1xf32> -> vector<8x1xf32>
    %142 = vector.broadcast %141 : vector<8x1xf32> to vector<8x8xf32>
    %143 = arith.mulf %138, %142 : vector<8x8xf32>
    %cst_40 = arith.constant dense<0.000000e+00> : vector<8x4xf32>
    %144 = tpu.matmul %143, %132, %cst_40 {dimension_numbers = #tpu.dot_dimension_numbers<[1], [0], [0], [1], [0, 0, 1, 1], [], []>} : vector<8x8xf32>, vector<8x4xf32>, vector<8x4xf32> -> vector<8x4xf32>
    %145 = vector.extract_strided_slice %6 {offsets = [8, 4], sizes = [8, 4], strides = [1, 1]} : vector<16x32xf32> to vector<8x4xf32>
    %146 = vector.extract_strided_slice %7 {offsets = [8, 4], sizes = [8, 4], strides = [1, 1]} : vector<16x32xf32> to vector<8x4xf32>
    %147 = vector.extract_strided_slice %8 {offsets = [8, 4], sizes = [8, 4], strides = [1, 1]} : vector<16x32xf32> to vector<8x4xf32>
    %cst_41 = arith.constant dense<0.000000e+00> : vector<8x8xf32>
    %148 = tpu.matmul %145, %146, %cst_41 {dimension_numbers = #tpu.dot_dimension_numbers<[1], [1], [0], [0], [0, 0, 1, 0], [], []>} : vector<8x4xf32>, vector<8x4xf32>, vector<8x8xf32> -> vector<8x8xf32>
    %cst_42 = arith.constant dense<0xFF800000> : vector<8xf32>
    %149 = vector.multi_reduction <maximumf>, %148, %cst_42 [1] : vector<8x8xf32> to vector<8xf32>
    %150 = vector.shape_cast %149 : vector<8xf32> to vector<8x1xf32>
    %151 = vector.broadcast %150 : vector<8x1xf32> to vector<8x8xf32>
    %152 = arith.subf %148, %151 : vector<8x8xf32>
    %153 = math.exp %152 : vector<8x8xf32>
    %cst_43 = arith.constant dense<0.000000e+00> : vector<8xf32>
    %154 = vector.multi_reduction <add>, %153, %cst_43 [1] : vector<8x8xf32> to vector<8xf32>
    %155 = vector.shape_cast %154 : vector<8xf32> to vector<8x1xf32>
    %156 = tpu.reciprocal %155 : vector<8x1xf32> -> vector<8x1xf32>
    %157 = vector.broadcast %156 : vector<8x1xf32> to vector<8x8xf32>
    %158 = arith.mulf %153, %157 : vector<8x8xf32>
    %cst_44 = arith.constant dense<0.000000e+00> : vector<8x4xf32>
    %159 = tpu.matmul %158, %147, %cst_44 {dimension_numbers = #tpu.dot_dimension_numbers<[1], [0], [0], [1], [0, 0, 1, 1], [], []>} : vector<8x8xf32>, vector<8x4xf32>, vector<8x4xf32> -> vector<8x4xf32>
    %160 = vector.extract_strided_slice %6 {offsets = [8, 8], sizes = [8, 4], strides = [1, 1]} : vector<16x32xf32> to vector<8x4xf32>
    %161 = vector.extract_strided_slice %7 {offsets = [8, 8], sizes = [8, 4], strides = [1, 1]} : vector<16x32xf32> to vector<8x4xf32>
    %162 = vector.extract_strided_slice %8 {offsets = [8, 8], sizes = [8, 4], strides = [1, 1]} : vector<16x32xf32> to vector<8x4xf32>
    %cst_45 = arith.constant dense<0.000000e+00> : vector<8x8xf32>
    %163 = tpu.matmul %160, %161, %cst_45 {dimension_numbers = #tpu.dot_dimension_numbers<[1], [1], [0], [0], [0, 0, 1, 0], [], []>} : vector<8x4xf32>, vector<8x4xf32>, vector<8x8xf32> -> vector<8x8xf32>
    %cst_46 = arith.constant dense<0xFF800000> : vector<8xf32>
    %164 = vector.multi_reduction <maximumf>, %163, %cst_46 [1] : vector<8x8xf32> to vector<8xf32>
    %165 = vector.shape_cast %164 : vector<8xf32> to vector<8x1xf32>
    %166 = vector.broadcast %165 : vector<8x1xf32> to vector<8x8xf32>
    %167 = arith.subf %163, %166 : vector<8x8xf32>
    %168 = math.exp %167 : vector<8x8xf32>
    %cst_47 = arith.constant dense<0.000000e+00> : vector<8xf32>
    %169 = vector.multi_reduction <add>, %168, %cst_47 [1] : vector<8x8xf32> to vector<8xf32>
    %170 = vector.shape_cast %169 : vector<8xf32> to vector<8x1xf32>
    %171 = tpu.reciprocal %170 : vector<8x1xf32> -> vector<8x1xf32>
    %172 = vector.broadcast %171 : vector<8x1xf32> to vector<8x8xf32>
    %173 = arith.mulf %168, %172 : vector<8x8xf32>
    %cst_48 = arith.constant dense<0.000000e+00> : vector<8x4xf32>
    %174 = tpu.matmul %173, %162, %cst_48 {dimension_numbers = #tpu.dot_dimension_numbers<[1], [0], [0], [1], [0, 0, 1, 1], [], []>} : vector<8x8xf32>, vector<8x4xf32>, vector<8x4xf32> -> vector<8x4xf32>
    %175 = vector.extract_strided_slice %6 {offsets = [8, 12], sizes = [8, 4], strides = [1, 1]} : vector<16x32xf32> to vector<8x4xf32>
    %176 = vector.extract_strided_slice %7 {offsets = [8, 12], sizes = [8, 4], strides = [1, 1]} : vector<16x32xf32> to vector<8x4xf32>
    %177 = vector.extract_strided_slice %8 {offsets = [8, 12], sizes = [8, 4], strides = [1, 1]} : vector<16x32xf32> to vector<8x4xf32>
    %cst_49 = arith.constant dense<0.000000e+00> : vector<8x8xf32>
    %178 = tpu.matmul %175, %176, %cst_49 {dimension_numbers = #tpu.dot_dimension_numbers<[1], [1], [0], [0], [0, 0, 1, 0], [], []>} : vector<8x4xf32>, vector<8x4xf32>, vector<8x8xf32> -> vector<8x8xf32>
    %cst_50 = arith.constant dense<0xFF800000> : vector<8xf32>
    %179 = vector.multi_reduction <maximumf>, %178, %cst_50 [1] : vector<8x8xf32> to vector<8xf32>
    %180 = vector.shape_cast %179 : vector<8xf32> to vector<8x1xf32>
    %181 = vector.broadcast %180 : vector<8x1xf32> to vector<8x8xf32>
    %182 = arith.subf %178, %181 : vector<8x8xf32>
    %183 = math.exp %182 : vector<8x8xf32>
    %cst_51 = arith.constant dense<0.000000e+00> : vector<8xf32>
    %184 = vector.multi_reduction <add>, %183, %cst_51 [1] : vector<8x8xf32> to vector<8xf32>
    %185 = vector.shape_cast %184 : vector<8xf32> to vector<8x1xf32>
    %186 = tpu.reciprocal %185 : vector<8x1xf32> -> vector<8x1xf32>
    %187 = vector.broadcast %186 : vector<8x1xf32> to vector<8x8xf32>
    %188 = arith.mulf %183, %187 : vector<8x8xf32>
    %cst_52 = arith.constant dense<0.000000e+00> : vector<8x4xf32>
    %189 = tpu.matmul %188, %177, %cst_52 {dimension_numbers = #tpu.dot_dimension_numbers<[1], [0], [0], [1], [0, 0, 1, 1], [], []>} : vector<8x8xf32>, vector<8x4xf32>, vector<8x4xf32> -> vector<8x4xf32>
    %190 = vector.extract_strided_slice %6 {offsets = [8, 16], sizes = [8, 4], strides = [1, 1]} : vector<16x32xf32> to vector<8x4xf32>
    %191 = vector.extract_strided_slice %7 {offsets = [8, 16], sizes = [8, 4], strides = [1, 1]} : vector<16x32xf32> to vector<8x4xf32>
    %192 = vector.extract_strided_slice %8 {offsets = [8, 16], sizes = [8, 4], strides = [1, 1]} : vector<16x32xf32> to vector<8x4xf32>
    %cst_53 = arith.constant dense<0.000000e+00> : vector<8x8xf32>
    %193 = tpu.matmul %190, %191, %cst_53 {dimension_numbers = #tpu.dot_dimension_numbers<[1], [1], [0], [0], [0, 0, 1, 0], [], []>} : vector<8x4xf32>, vector<8x4xf32>, vector<8x8xf32> -> vector<8x8xf32>
    %cst_54 = arith.constant dense<0xFF800000> : vector<8xf32>
    %194 = vector.multi_reduction <maximumf>, %193, %cst_54 [1] : vector<8x8xf32> to vector<8xf32>
    %195 = vector.shape_cast %194 : vector<8xf32> to vector<8x1xf32>
    %196 = vector.broadcast %195 : vector<8x1xf32> to vector<8x8xf32>
    %197 = arith.subf %193, %196 : vector<8x8xf32>
    %198 = math.exp %197 : vector<8x8xf32>
    %cst_55 = arith.constant dense<0.000000e+00> : vector<8xf32>
    %199 = vector.multi_reduction <add>, %198, %cst_55 [1] : vector<8x8xf32> to vector<8xf32>
    %200 = vector.shape_cast %199 : vector<8xf32> to vector<8x1xf32>
    %201 = tpu.reciprocal %200 : vector<8x1xf32> -> vector<8x1xf32>
    %202 = vector.broadcast %201 : vector<8x1xf32> to vector<8x8xf32>
    %203 = arith.mulf %198, %202 : vector<8x8xf32>
    %cst_56 = arith.constant dense<0.000000e+00> : vector<8x4xf32>
    %204 = tpu.matmul %203, %192, %cst_56 {dimension_numbers = #tpu.dot_dimension_numbers<[1], [0], [0], [1], [0, 0, 1, 1], [], []>} : vector<8x8xf32>, vector<8x4xf32>, vector<8x4xf32> -> vector<8x4xf32>
    %205 = vector.extract_strided_slice %6 {offsets = [8, 20], sizes = [8, 4], strides = [1, 1]} : vector<16x32xf32> to vector<8x4xf32>
    %206 = vector.extract_strided_slice %7 {offsets = [8, 20], sizes = [8, 4], strides = [1, 1]} : vector<16x32xf32> to vector<8x4xf32>
    %207 = vector.extract_strided_slice %8 {offsets = [8, 20], sizes = [8, 4], strides = [1, 1]} : vector<16x32xf32> to vector<8x4xf32>
    %cst_57 = arith.constant dense<0.000000e+00> : vector<8x8xf32>
    %208 = tpu.matmul %205, %206, %cst_57 {dimension_numbers = #tpu.dot_dimension_numbers<[1], [1], [0], [0], [0, 0, 1, 0], [], []>} : vector<8x4xf32>, vector<8x4xf32>, vector<8x8xf32> -> vector<8x8xf32>
    %cst_58 = arith.constant dense<0xFF800000> : vector<8xf32>
    %209 = vector.multi_reduction <maximumf>, %208, %cst_58 [1] : vector<8x8xf32> to vector<8xf32>
    %210 = vector.shape_cast %209 : vector<8xf32> to vector<8x1xf32>
    %211 = vector.broadcast %210 : vector<8x1xf32> to vector<8x8xf32>
    %212 = arith.subf %208, %211 : vector<8x8xf32>
    %213 = math.exp %212 : vector<8x8xf32>
    %cst_59 = arith.constant dense<0.000000e+00> : vector<8xf32>
    %214 = vector.multi_reduction <add>, %213, %cst_59 [1] : vector<8x8xf32> to vector<8xf32>
    %215 = vector.shape_cast %214 : vector<8xf32> to vector<8x1xf32>
    %216 = tpu.reciprocal %215 : vector<8x1xf32> -> vector<8x1xf32>
    %217 = vector.broadcast %216 : vector<8x1xf32> to vector<8x8xf32>
    %218 = arith.mulf %213, %217 : vector<8x8xf32>
    %cst_60 = arith.constant dense<0.000000e+00> : vector<8x4xf32>
    %219 = tpu.matmul %218, %207, %cst_60 {dimension_numbers = #tpu.dot_dimension_numbers<[1], [0], [0], [1], [0, 0, 1, 1], [], []>} : vector<8x8xf32>, vector<8x4xf32>, vector<8x4xf32> -> vector<8x4xf32>
    %220 = vector.extract_strided_slice %6 {offsets = [8, 24], sizes = [8, 4], strides = [1, 1]} : vector<16x32xf32> to vector<8x4xf32>
    %221 = vector.extract_strided_slice %7 {offsets = [8, 24], sizes = [8, 4], strides = [1, 1]} : vector<16x32xf32> to vector<8x4xf32>
    %222 = vector.extract_strided_slice %8 {offsets = [8, 24], sizes = [8, 4], strides = [1, 1]} : vector<16x32xf32> to vector<8x4xf32>
    %cst_61 = arith.constant dense<0.000000e+00> : vector<8x8xf32>
    %223 = tpu.matmul %220, %221, %cst_61 {dimension_numbers = #tpu.dot_dimension_numbers<[1], [1], [0], [0], [0, 0, 1, 0], [], []>} : vector<8x4xf32>, vector<8x4xf32>, vector<8x8xf32> -> vector<8x8xf32>
    %cst_62 = arith.constant dense<0xFF800000> : vector<8xf32>
    %224 = vector.multi_reduction <maximumf>, %223, %cst_62 [1] : vector<8x8xf32> to vector<8xf32>
    %225 = vector.shape_cast %224 : vector<8xf32> to vector<8x1xf32>
    %226 = vector.broadcast %225 : vector<8x1xf32> to vector<8x8xf32>
    %227 = arith.subf %223, %226 : vector<8x8xf32>
    %228 = math.exp %227 : vector<8x8xf32>
    %cst_63 = arith.constant dense<0.000000e+00> : vector<8xf32>
    %229 = vector.multi_reduction <add>, %228, %cst_63 [1] : vector<8x8xf32> to vector<8xf32>
    %230 = vector.shape_cast %229 : vector<8xf32> to vector<8x1xf32>
    %231 = tpu.reciprocal %230 : vector<8x1xf32> -> vector<8x1xf32>
    %232 = vector.broadcast %231 : vector<8x1xf32> to vector<8x8xf32>
    %233 = arith.mulf %228, %232 : vector<8x8xf32>
    %cst_64 = arith.constant dense<0.000000e+00> : vector<8x4xf32>
    %234 = tpu.matmul %233, %222, %cst_64 {dimension_numbers = #tpu.dot_dimension_numbers<[1], [0], [0], [1], [0, 0, 1, 1], [], []>} : vector<8x8xf32>, vector<8x4xf32>, vector<8x4xf32> -> vector<8x4xf32>
    %235 = vector.extract_strided_slice %6 {offsets = [8, 28], sizes = [8, 4], strides = [1, 1]} : vector<16x32xf32> to vector<8x4xf32>
    %236 = vector.extract_strided_slice %7 {offsets = [8, 28], sizes = [8, 4], strides = [1, 1]} : vector<16x32xf32> to vector<8x4xf32>
    %237 = vector.extract_strided_slice %8 {offsets = [8, 28], sizes = [8, 4], strides = [1, 1]} : vector<16x32xf32> to vector<8x4xf32>
    %cst_65 = arith.constant dense<0.000000e+00> : vector<8x8xf32>
    %238 = tpu.matmul %235, %236, %cst_65 {dimension_numbers = #tpu.dot_dimension_numbers<[1], [1], [0], [0], [0, 0, 1, 0], [], []>} : vector<8x4xf32>, vector<8x4xf32>, vector<8x8xf32> -> vector<8x8xf32>
    %cst_66 = arith.constant dense<0xFF800000> : vector<8xf32>
    %239 = vector.multi_reduction <maximumf>, %238, %cst_66 [1] : vector<8x8xf32> to vector<8xf32>
    %240 = vector.shape_cast %239 : vector<8xf32> to vector<8x1xf32>
    %241 = vector.broadcast %240 : vector<8x1xf32> to vector<8x8xf32>
    %242 = arith.subf %238, %241 : vector<8x8xf32>
    %243 = math.exp %242 : vector<8x8xf32>
    %cst_67 = arith.constant dense<0.000000e+00> : vector<8xf32>
    %244 = vector.multi_reduction <add>, %243, %cst_67 [1] : vector<8x8xf32> to vector<8xf32>
    %245 = vector.shape_cast %244 : vector<8xf32> to vector<8x1xf32>
    %246 = tpu.reciprocal %245 : vector<8x1xf32> -> vector<8x1xf32>
    %247 = vector.broadcast %246 : vector<8x1xf32> to vector<8x8xf32>
    %248 = arith.mulf %243, %247 : vector<8x8xf32>
    %cst_68 = arith.constant dense<0.000000e+00> : vector<8x4xf32>
    %249 = tpu.matmul %248, %237, %cst_68 {dimension_numbers = #tpu.dot_dimension_numbers<[1], [0], [0], [1], [0, 0, 1, 1], [], []>} : vector<8x8xf32>, vector<8x4xf32>, vector<8x4xf32> -> vector<8x4xf32>
    %250 = tpu.concatenate %144, %159, %174, %189, %204, %219, %234, %249 in 1 : vector<8x4xf32>, vector<8x4xf32>, vector<8x4xf32>, vector<8x4xf32>, vector<8x4xf32>, vector<8x4xf32>, vector<8x4xf32>, vector<8x4xf32> -> vector<8x32xf32>
    %251 = tpu.concatenate %129, %250 in 0 : vector<8x32xf32>, vector<8x32xf32> -> vector<16x32xf32>
    %c0_69 = arith.constant 0 : index
    %c0_70 = arith.constant 0 : index
    %252 = vector.load %arg3[%c0_69, %c0_70] : memref<32x32xf32, #tpu.memory_space<vmem>>, vector<32x32xf32>
    %cst_71 = arith.constant dense<0.000000e+00> : vector<16x32xf32>
    %253 = tpu.matmul %251, %252, %cst_71 {dimension_numbers = #tpu.dot_dimension_numbers<[1], [0], [0], [1], [0, 0, 1, 1], [], []>} : vector<16x32xf32>, vector<32x32xf32>, vector<16x32xf32> -> vector<16x32xf32>
    %c0_72 = arith.constant 0 : index
    %c0_73 = arith.constant 0 : index
    %254 = vector.load %arg4[%c0_72, %c0_73] : memref<1x32xf32, #tpu.memory_space<vmem>>, vector<1x32xf32>
    %255 = vector.broadcast %254 : vector<1x32xf32> to vector<16x32xf32>
    %256 = arith.addf %253, %255 : vector<16x32xf32>
    %c0_74 = arith.constant 0 : index
    %c0_75 = arith.constant 0 : index
    %257 = vector.load %arg5[%c0_74, %c0_75] : memref<16x32xf32, #tpu.memory_space<vmem>>, vector<16x32xf32>
    tpu.vector_store %arg5[%c0_74, %c0_75], %256 {strides = array<i32>} : memref<16x32xf32, #tpu.memory_space<vmem>>, vector<16x32xf32>,
    return
  }
}

</mosaic_0001>

<llo_original>
// kernel: attention_forward.1
$region0: #{attention_forward.1}
  #allocation0 [shape = 'u32[]', space=smem, size = 0x4, offset = 0x4, fixed_abs, tag = 'smem constant byte address 0x4 - core index']
  #allocation1 [shape = 'u32[144,128]{1,0:T(1,128)}', space=vmem, size = 0x12000, scoped, tag = 'internal scratch']
  %s0 = inlined_call_operand.hbm [shape: f32[16,32], index: 0, kind: input, shape index: {}]
  %s1 = inlined_call_operand.hbm [shape: f32[32,96], index: 1, kind: input, shape index: {}]
  %s2 = inlined_call_operand.vmem [shape: f32[1,96], index: 2, kind: input, shape index: {}]
  %s3 = inlined_call_operand.hbm [shape: f32[32,32], index: 3, kind: input, shape index: {}]
  %s4 = inlined_call_operand.vmem [shape: f32[1,32], index: 4, kind: input, shape index: {}]
  %s5 = inlined_call_operand.hbm [shape: f32[16,32], index: 5, kind: output, shape index: {}]
  %s6 = sld [smem:[#allocation0]]
  $region42: #{attention_forward.1} parent=0
    _
  %s8 = ssub.s32 1, %s6
  %s9 = scalar_select 0, %s8, %s6
  $region1: #{attention_forward.1} parent=0
    #allocation2 [shape = 'u8[8192]{0}', space=vmem, size = 0x2000, scoped, tag = 'input window, operand 0, single buffered']
    #allocation3 [shape = 's32[1]{0}', space=sflag, size = 0x4, scoped, tag = 'scoped memory for attention_forward.1']
    #allocation4 [shape = 's32[1]{0}', space=sflag, size = 0x4, scoped, tag = 'scoped memory for attention_forward.1']
    #allocation5 [shape = 'u8[16384]{0}', space=vmem, size = 0x4000, scoped, tag = 'input window, operand 1, single buffered']
    #allocation6 [shape = 's32[1]{0}', space=sflag, size = 0x4, scoped, tag = 'scoped memory for attention_forward.1']
    #allocation7 [shape = 'u8[16384]{0}', space=vmem, size = 0x4000, scoped, tag = 'input window, operand 3, single buffered']
    #allocation8 [shape = 'u8[8192]{0}', space=vmem, size = 0x2000, scoped, tag = 'output window, operand 0, single buffered']
    %10 = vsyncpa [#allocation3], 0
    %11 = vsyncpa [#allocation6], 0
    %12 = vsyncpa [#allocation4], 0
    // Predicated region
    $region2: #{attention_forward.1} parent=1 // pred_check
      _
    $region3: #{attention_forward.1} parent=1 // pred_check_branch
      %14 = sbr.rel (0) target = $region5
    $region4: #{attention_forward.1} parent=1 // pred_region
      %s16 = ssub.s32 256, 256
      %17 = vsyncadd [#allocation3], %s16
      %s18 = sshll.u32 [#allocation2], 4
      %s19 = int_to_ptr.vmem [resolvable:$true] %s18
      %24 = dma.hbm_to_vmem [thread:$0]  %s0, 256, %s19, [#allocation3], 128, 128, 8
    $region5: #{attention_forward.1} parent=1 // pred_fallthru
      _
    // Predicated region
    $region6: #{attention_forward.1} parent=1 // pred_check
      _
    $region7: #{attention_forward.1} parent=1 // pred_check_branch
      %26 = sbr.rel (0) target = $region9
    $region8: #{attention_forward.1} parent=1 // pred_region
      %s28 = ssub.s32 512, 512
      %29 = vsyncadd [#allocation6], %s28
      %s30 = sshll.u32 [#allocation5], 4
      %s31 = int_to_ptr.vmem [resolvable:$true] %s30
      %36 = dma.hbm_to_vmem [thread:$0]  %s1, 512, %s31, [#allocation6], 128, 128, 8
    $region9: #{attention_forward.1} parent=1 // pred_fallthru
      _
    // Predicated region
    $region10: #{attention_forward.1} parent=1 // pred_check
      _
    $region11: #{attention_forward.1} parent=1 // pred_check_branch
      %38 = sbr.rel (0) target = $region13
    $region12: #{attention_forward.1} parent=1 // pred_region
      _
    $region13: #{attention_forward.1} parent=1 // pred_fallthru
      _
    // Predicated region
    $region14: #{attention_forward.1} parent=1 // pred_check
      _
    $region15: #{attention_forward.1} parent=1 // pred_check_branch
      %40 = sbr.rel (0) target = $region17
    $region16: #{attention_forward.1} parent=1 // pred_region
      %s42 = ssub.s32 512, 512
      %43 = vsyncadd [#allocation6], %s42
      %s44 = sshll.u32 [#allocation7], 4
      %s45 = int_to_ptr.vmem [resolvable:$true] %s44
      %50 = dma.hbm_to_vmem [thread:$0]  %s3, 512, %s45, [#allocation6], 128, 128, 8
    $region17: #{attention_forward.1} parent=1 // pred_fallthru
      _
    // Predicated region
    $region18: #{attention_forward.1} parent=1 // pred_check
      _
    $region19: #{attention_forward.1} parent=1 // pred_check_branch
      %52 = sbr.rel (0) target = $region21
    $region20: #{attention_forward.1} parent=1 // pred_region
      _
    $region21: #{attention_forward.1} parent=1 // pred_fallthru
      _
    // Predicated region
    $region22: #{attention_forward.1} parent=1 // pred_check
      _
    $region23: #{attention_forward.1} parent=1 // pred_check_branch
      %54 = sbr.rel (0) target = $region25
    $region24: #{attention_forward.1} parent=1 // pred_region
      %55 = dma.done [#allocation3], 256
    $region25: #{attention_forward.1} parent=1 // pred_fallthru
      _
    // Predicated region
    $region26: #{attention_forward.1} parent=1 // pred_check
      _
    $region27: #{attention_forward.1} parent=1 // pred_check_branch
      %57 = sbr.rel (0) target = $region29
    $region28: #{attention_forward.1} parent=1 // pred_region
      %58 = dma.done [#allocation6], 512
    $region29: #{attention_forward.1} parent=1 // pred_fallthru
      _
    // Predicated region
    $region30: #{attention_forward.1} parent=1 // pred_check
      _
    $region31: #{attention_forward.1} parent=1 // pred_check_branch
      %60 = sbr.rel (0) target = $region33
    $region32: #{attention_forward.1} parent=1 // pred_region
      %61 = dma.done [#allocation6], 512
    $region33: #{attention_forward.1} parent=1 // pred_fallthru
      _
    %v62 = vld [vmem:[#allocation2] sm:$0xff]
    %v63 = vld [vmem:[#allocation2 + $0x8] sm:$0xff]
    %v64 = vld [vmem:[#allocation5] sm:$0xff]
    %v65 = vld [vmem:[#allocation5 + $0x8] sm:$0xff]
    %v66 = vld [vmem:[#allocation5 + $0x10] sm:$0xff]
    %v67 = vld [vmem:[#allocation5 + $0x18] sm:$0xff]
    %v68 = vld [vmem:[%s2] sm:$0x1]
    %v70 = vlaneseq
    %v71 = vshrl.u32 %v70, 7
    %v72 = vsub.s32 0, %v71
    %v73 = vrot.slane %v68, %v72
    %vm75 = vcmask 261120
    %v77 = vsel %vm75, %v62, 0
    %v80 = vsel %vm75, %v63, 0
    %82 = vmatprep.subr.mxu0 0.0
    %83 = vmatpush1.msra.mxu0 %v64
    %84 = vmatprep.subr.mxu0 0.0
    %85 = vmatpush1.msra.mxu0 %v65
    %86 = vmatprep.subr.mxu0 0.0
    %87 = vmatpush1.msra.mxu0 %v66
    %88 = vmatprep.subr.mxu0 0.0
    %89 = vmatpush1.msra.mxu0 %v67
    %90 = vmatprep.subr.mxu0 0.0
    %91 = vmatpush1.msra.mxu0 0.0
    %92 = vmatprep.subr.mxu0 0.0
    %93 = vmatpush1.msra.mxu0 0.0
    %94 = vmatprep.subr.mxu0 0.0
    %95 = vmatpush1.msra.mxu0 0.0
    %96 = vmatprep.subr.mxu0 0.0
    %97 = vmatpush1.msra.mxu0 0.0
    %98 = vmatprep.subr.mxu0 0.0
    %99 = vmatpush1.msra.mxu0 0.0
    %100 = vmatprep.subr.mxu0 0.0
    %101 = vmatpush1.msra.mxu0 0.0
    %102 = vmatprep.subr.mxu0 0.0
    %103 = vmatpush1.msra.mxu0 0.0
    %104 = vmatprep.subr.mxu0 0.0
    %105 = vmatpush1.msra.mxu0 0.0
    %106 = vmatprep.subr.mxu0 0.0
    %107 = vmatpush1.msra.mxu0 0.0
    %108 = vmatprep.subr.mxu0 0.0
    %109 = vmatpush1.msra.mxu0 0.0
    %110 = vmatprep.subr.mxu0 0.0
    %111 = vmatpush1.msra.mxu0 0.0
    %112 = vmatprep.subr.mxu0 0.0
    %113 = vmatpush1.msra.mxu0 0.0
    %114 = vmatprep.subr.mxu0 0.0
    %115 = vmatpush1.msra.mxu0 0.0
    %116 = vmatprep.subr.mxu0 0.0
    %117 = vmatpush1.msra.mxu0 0.0
    %118 = vmatprep.subr.mxu0 0.0
    %119 = vmatpush1.msra.mxu0 0.0
    %120 = vmatprep.subr.mxu0 0.0
    %121 = vmatpush1.msra.mxu0 0.0
    %122 = vmatprep.subr.mxu0 0.0
    %123 = vmatpush1.msra.mxu0 0.0
    %124 = vmatprep.subr.mxu0 0.0
    %125 = vmatpush1.msra.mxu0 0.0
    %126 = vmatprep.subr.mxu0 0.0
    %127 = vmatpush1.msra.mxu0 0.0
    %128 = vmatprep.subr.mxu0 0.0
    %129 = vmatpush1.msra.mxu0 0.0
    %130 = vmatprep.subr.mxu0 0.0
    %131 = vmatpush1.msra.mxu0 0.0
    %132 = vmatprep.subr.mxu0 0.0
    %133 = vmatpush1.msra.mxu0 0.0
    %134 = vmatprep.subr.mxu0 0.0
    %135 = vmatpush1.msra.mxu0 0.0
    %136 = vmatprep.subr.mxu0 0.0
    %137 = vmatpush1.msra.mxu0 0.0
    %138 = vmatprep.subr.mxu0 0.0
    %139 = vmatpush1.msra.mxu0 0.0
    %140 = vmatprep.subr.mxu0 0.0
    %141 = vmatpush1.msra.mxu0 0.0
    %142 = vmatprep.subr.mxu0 0.0
    %143 = vmatpush1.msra.mxu0 0.0
    %144 = vmatprep.subr.mxu0 0.0
    %145 = vmatpush1.msra.mxu0 0.0
    %146 = vmatprep.mubr.f32.mxu0 0.0
    %147 = vmatmul.mubr.f32.gmra.mrb[0].mxu0 %v77
    %v148 = vpop.f32.mrb[0].mxu0
    %v149 = vadd.f32 %v73, %v148
    %v150 = vpop.f32.mrb[0].mxu0
    %151 = vmatprep.mubr.f32.mxu0 0.0
    %152 = vmatmul.mubr.f32.gmra.mrb[0].mxu0 %v80
    %v153 = vpop.f32.mrb[0].mxu0
    %v154 = vadd.f32 %v73, %v153
    %v155 = vpop.f32.mrb[0].mxu0
    %156 = vdwg.mxu0
    %158 = vrot.lane.b32.xlu0 %v149, 96
    %v159 = vpop.permute.xlu0 %158
    %vm160 = vcmask 31744
    %v161 = vsel %vm160, %v149, 0
    %v163 = vsel %vm160, %v159, 0
    %165 = vmatprep.subr.mxu0 0.0
    %166 = vmatpush1.xpose.msra.mxu0 %v163
    %167 = vmatprep.subr.mxu0 0.0
    %168 = vmatpush1.xpose.msra.mxu0 0.0
    %169 = vmatprep.subr.mxu0 0.0
    %170 = vmatpush1.xpose.msra.mxu0 0.0
    %171 = vmatprep.subr.mxu0 0.0
    %172 = vmatpush1.xpose.msra.mxu0 0.0
    %173 = vmatprep.subr.mxu0 0.0
    %174 = vmatpush1.xpose.msra.mxu0 0.0
    %175 = vmatprep.subr.mxu0 0.0
    %176 = vmatpush1.xpose.msra.mxu0 0.0
    %177 = vmatprep.subr.mxu0 0.0
    %178 = vmatpush1.xpose.msra.mxu0 0.0
    %179 = vmatprep.subr.mxu0 0.0
    %180 = vmatpush1.xpose.msra.mxu0 0.0
    %181 = vmatprep.subr.mxu0 0.0
    %182 = vmatpush1.xpose.msra.mxu0 0.0
    %183 = vmatprep.subr.mxu0 0.0
    %184 = vmatpush1.xpose.msra.mxu0 0.0
    %185 = vmatprep.subr.mxu0 0.0
    %186 = vmatpush1.xpose.msra.mxu0 0.0
    %187 = vmatprep.subr.mxu0 0.0
    %188 = vmatpush1.xpose.msra.mxu0 0.0
    %189 = vmatprep.subr.mxu0 0.0
    %190 = vmatpush1.xpose.msra.mxu0 0.0
    %191 = vmatprep.subr.mxu0 0.0
    %192 = vmatpush1.xpose.msra.mxu0 0.0
    %193 = vmatprep.subr.mxu0 0.0
    %194 = vmatpush1.xpose.msra.mxu0 0.0
    %195 = vmatprep.subr.mxu0 0.0
    %196 = vmatpush1.xpose.msra.mxu0 0.0
    %197 = vmatprep.subr.mxu0 0.0
    %198 = vmatpush1.xpose.msra.mxu0 0.0
    %199 = vmatprep.subr.mxu0 0.0
    %200 = vmatpush1.xpose.msra.mxu0 0.0
    %201 = vmatprep.subr.mxu0 0.0
    %202 = vmatpush1.xpose.msra.mxu0 0.0
    %203 = vmatprep.subr.mxu0 0.0
    %204 = vmatpush1.xpose.msra.mxu0 0.0
    %205 = vmatprep.subr.mxu0 0.0
    %206 = vmatpush1.xpose.msra.mxu0 0.0
    %207 = vmatprep.subr.mxu0 0.0
    %208 = vmatpush1.xpose.msra.mxu0 0.0
    %209 = vmatprep.subr.mxu0 0.0
    %210 = vmatpush1.xpose.msra.mxu0 0.0
    %211 = vmatprep.subr.mxu0 0.0
    %212 = vmatpush1.xpose.msra.mxu0 0.0
    %213 = vmatprep.subr.mxu0 0.0
    %214 = vmatpush1.xpose.msra.mxu0 0.0
    %215 = vmatprep.subr.mxu0 0.0
    %216 = vmatpush1.xpose.msra.mxu0 0.0
    %217 = vmatprep.subr.mxu0 0.0
    %218 = vmatpush1.xpose.msra.mxu0 0.0
    %219 = vmatprep.subr.mxu0 0.0
    %220 = vmatpush1.xpose.msra.mxu0 0.0
    %221 = vmatprep.subr.mxu0 0.0
    %222 = vmatpush1.xpose.msra.mxu0 0.0
    %223 = vmatprep.subr.mxu0 0.0
    %224 = vmatpush1.xpose.msra.mxu0 0.0
    %225 = vmatprep.subr.mxu0 0.0
    %226 = vmatpush1.xpose.msra.mxu0 0.0
    %227 = vmatprep.subr.mxu0 0.0
    %228 = vmatpush1.xpose.msra.mxu0 0.0
    %229 = vmatprep.mubr.f32.mxu0 0.0
    %230 = vmatmul.mubr.f32.gmra.mrb[0].mxu0 %v161
    %v231 = vpop.f32.mrb[0].mxu0
    %v232 = vadd.f32 0.0, %v231
    %v233 = vpop.f32.mrb[0].mxu0
    %234 = vdwg.mxu0
    %vm235 = vcmask 64512
    %v236 = vsel %vm235, %v232, -inf
    %237 = vmax.xlane.f32.xlu0 %v236
    %v238 = vpop.xlane.xlu0 %237
    %v239 = vsub.f32 %v232, %v238
    %v240 = vmul.f32 %v239, 1.442695
    %v241 = vpow.pop %v240
    %v242 = vsel %vm235, %v241, 0.0
    %243 = vadd.xlane.f32.xlu0 %v242
    %v244 = vpop.xlane.xlu0 %243
    %v245 = vrcp.pop %v244
    %v246 = vmul.f32 %v241, %v245
    %247 = vrot.lane.b32.xlu0 %v149, 64
    %v248 = vpop.permute.xlu0 %247
    %v251 = vsel %vm235, %v246, 0
    %253 = vmatprep.subr.mxu0 0.0
    %254 = vmatpush1.msra.mxu0 %v248
    %255 = vmatprep.subr.mxu0 0.0
    %256 = vmatpush1.msra.mxu0 0.0
    %257 = vmatprep.subr.mxu0 0.0
    %258 = vmatpush1.msra.mxu0 0.0
    %259 = vmatprep.subr.mxu0 0.0
    %260 = vmatpush1.msra.mxu0 0.0
    %261 = vmatprep.subr.mxu0 0.0
    %262 = vmatpush1.msra.mxu0 0.0
    %263 = vmatprep.subr.mxu0 0.0
    %264 = vmatpush1.msra.mxu0 0.0
    %265 = vmatprep.subr.mxu0 0.0
    %266 = vmatpush1.msra.mxu0 0.0
    %267 = vmatprep.subr.mxu0 0.0
    %268 = vmatpush1.msra.mxu0 0.0
    %269 = vmatprep.subr.mxu0 0.0
    %270 = vmatpush1.msra.mxu0 0.0
    %271 = vmatprep.subr.mxu0 0.0
    %272 = vmatpush1.msra.mxu0 0.0
    %273 = vmatprep.subr.mxu0 0.0
    %274 = vmatpush1.msra.mxu0 0.0
    %275 = vmatprep.subr.mxu0 0.0
    %276 = vmatpush1.msra.mxu0 0.0
    %277 = vmatprep.subr.mxu0 0.0
    %278 = vmatpush1.msra.mxu0 0.0
    %279 = vmatprep.subr.mxu0 0.0
    %280 = vmatpush1.msra.mxu0 0.0
    %281 = vmatprep.subr.mxu0 0.0
    %282 = vmatpush1.msra.mxu0 0.0
    %283 = vmatprep.subr.mxu0 0.0
    %284 = vmatpush1.msra.mxu0 0.0
    %285 = vmatprep.subr.mxu0 0.0
    %286 = vmatpush1.msra.mxu0 0.0
    %287 = vmatprep.subr.mxu0 0.0
    %288 = vmatpush1.msra.mxu0 0.0
    %289 = vmatprep.subr.mxu0 0.0
    %290 = vmatpush1.msra.mxu0 0.0
    %291 = vmatprep.subr.mxu0 0.0
    %292 = vmatpush1.msra.mxu0 0.0
    %293 = vmatprep.subr.mxu0 0.0
    %294 = vmatpush1.msra.mxu0 0.0
    %295 = vmatprep.subr.mxu0 0.0
    %296 = vmatpush1.msra.mxu0 0.0
    %297 = vmatprep.subr.mxu0 0.0
    %298 = vmatpush1.msra.mxu0 0.0
    %299 = vmatprep.subr.mxu0 0.0
    %300 = vmatpush1.msra.mxu0 0.0
    %301 = vmatprep.subr.mxu0 0.0
    %302 = vmatpush1.msra.mxu0 0.0
    %303 = vmatprep.subr.mxu0 0.0
    %304 = vmatpush1.msra.mxu0 0.0
    %305 = vmatprep.subr.mxu0 0.0
    %306 = vmatpush1.msra.mxu0 0.0
    %307 = vmatprep.subr.mxu0 0.0
    %308 = vmatpush1.msra.mxu0 0.0
    %309 = vmatprep.subr.mxu0 0.0
    %310 = vmatpush1.msra.mxu0 0.0
    %311 = vmatprep.subr.mxu0 0.0
    %312 = vmatpush1.msra.mxu0 0.0
    %313 = vmatprep.subr.mxu0 0.0
    %314 = vmatpush1.msra.mxu0 0.0
    %315 = vmatprep.subr.mxu0 0.0
    %316 = vmatpush1.msra.mxu0 0.0
    %317 = vmatprep.mubr.f32.mxu0 0.0
    %318 = vmatmul.mubr.f32.gmra.mrb[0].mxu0 %v251
    %v319 = vpop.f32.mrb[0].mxu0
    %v320 = vadd.f32 0.0, %v319
    %v321 = vpop.f32.mrb[0].mxu0
    %322 = vdwg.mxu0
    %323 = vrot.lane.b32.xlu0 %v149, 124
    %v324 = vpop.permute.xlu0 %323
    %325 = vrot.lane.b32.xlu0 %v149, 92
    %v326 = vpop.permute.xlu0 %325
    %v327 = vsel %vm160, %v324, 0
    %v329 = vsel %vm160, %v326, 0
    %331 = vmatprep.subr.mxu0 0.0
    %332 = vmatpush1.xpose.msra.mxu0 %v329
    %333 = vmatprep.subr.mxu0 0.0
    %334 = vmatpush1.xpose.msra.mxu0 0.0
    %335 = vmatprep.subr.mxu0 0.0
    %336 = vmatpush1.xpose.msra.mxu0 0.0
    %337 = vmatprep.subr.mxu0 0.0
    %338 = vmatpush1.xpose.msra.mxu0 0.0
    %339 = vmatprep.subr.mxu0 0.0
    %340 = vmatpush1.xpose.msra.mxu0 0.0
    %341 = vmatprep.subr.mxu0 0.0
    %342 = vmatpush1.xpose.msra.mxu0 0.0
    %343 = vmatprep.subr.mxu0 0.0
    %344 = vmatpush1.xpose.msra.mxu0 0.0
    %345 = vmatprep.subr.mxu0 0.0
    %346 = vmatpush1.xpose.msra.mxu0 0.0
    %347 = vmatprep.subr.mxu0 0.0
    %348 = vmatpush1.xpose.msra.mxu0 0.0
    %349 = vmatprep.subr.mxu0 0.0
    %350 = vmatpush1.xpose.msra.mxu0 0.0
    %351 = vmatprep.subr.mxu0 0.0
    %352 = vmatpush1.xpose.msra.mxu0 0.0
    %353 = vmatprep.subr.mxu0 0.0
    %354 = vmatpush1.xpose.msra.mxu0 0.0
    %355 = vmatprep.subr.mxu0 0.0
    %356 = vmatpush1.xpose.msra.mxu0 0.0
    %357 = vmatprep.subr.mxu0 0.0
    %358 = vmatpush1.xpose.msra.mxu0 0.0
    %359 = vmatprep.subr.mxu0 0.0
    %360 = vmatpush1.xpose.msra.mxu0 0.0
    %361 = vmatprep.subr.mxu0 0.0
    %362 = vmatpush1.xpose.msra.mxu0 0.0
    %363 = vmatprep.subr.mxu0 0.0
    %364 = vmatpush1.xpose.msra.mxu0 0.0
    %365 = vmatprep.subr.mxu0 0.0
    %366 = vmatpush1.xpose.msra.mxu0 0.0
    %367 = vmatprep.subr.mxu0 0.0
    %368 = vmatpush1.xpose.msra.mxu0 0.0
    %369 = vmatprep.subr.mxu0 0.0
    %370 = vmatpush1.xpose.msra.mxu0 0.0
    %371 = vmatprep.subr.mxu0 0.0
    %372 = vmatpush1.xpose.msra.mxu0 0.0
    %373 = vmatprep.subr.mxu0 0.0
    %374 = vmatpush1.xpose.msra.mxu0 0.0
    %375 = vmatprep.subr.mxu0 0.0
    %376 = vmatpush1.xpose.msra.mxu0 0.0
    %377 = vmatprep.subr.mxu0 0.0
    %378 = vmatpush1.xpose.msra.mxu0 0.0
    %379 = vmatprep.subr.mxu0 0.0
    %380 = vmatpush1.xpose.msra.mxu0 0.0
    %381 = vmatprep.subr.mxu0 0.0
    %382 = vmatpush1.xpose.msra.mxu0 0.0
    %383 = vmatprep.subr.mxu0 0.0
    %384 = vmatpush1.xpose.msra.mxu0 0.0
    %385 = vmatprep.subr.mxu0 0.0
    %386 = vmatpush1.xpose.msra.mxu0 0.0
    %387 = vmatprep.subr.mxu0 0.0
    %388 = vmatpush1.xpose.msra.mxu0 0.0
    %389 = vmatprep.subr.mxu0 0.0
    %390 = vmatpush1.xpose.msra.mxu0 0.0
    %391 = vmatprep.subr.mxu0 0.0
    %392 = vmatpush1.xpose.msra.mxu0 0.0
    %393 = vmatprep.subr.mxu0 0.0
    %394 = vmatpush1.xpose.msra.mxu0 0.0
    %395 = vmatprep.mubr.f32.mxu0 0.0
    %396 = vmatmul.mubr.f32.gmra.mrb[0].mxu0 %v327
    %v397 = vpop.f32.mrb[0].mxu0
    %v398 = vadd.f32 0.0, %v397
    %v399 = vpop.f32.mrb[0].mxu0
    %400 = vdwg.mxu0
    %v401 = vsel %vm235, %v398, -inf
    %402 = vmax.xlane.f32.xlu0 %v401
    %v403 = vpop.xlane.xlu0 %402
    %v404 = vsub.f32 %v398, %v403
    %v405 = vmul.f32 %v404, 1.442695
    %v406 = vpow.pop %v405
    %v407 = vsel %vm235, %v406, 0.0
    %408 = vadd.xlane.f32.xlu0 %v407
    %v409 = vpop.xlane.xlu0 %408
    %v410 = vrcp.pop %v409
    %v411 = vmul.f32 %v406, %v410
    %412 = vrot.lane.b32.xlu0 %v149, 60
    %v413 = vpop.permute.xlu0 %412
    %v416 = vsel %vm235, %v411, 0
    %418 = vmatprep.subr.mxu0 0.0
    %419 = vmatpush1.msra.mxu0 %v413
    %420 = vmatprep.subr.mxu0 0.0
    %421 = vmatpush1.msra.mxu0 0.0
    %422 = vmatprep.subr.mxu0 0.0
    %423 = vmatpush1.msra.mxu0 0.0
    %424 = vmatprep.subr.mxu0 0.0
    %425 = vmatpush1.msra.mxu0 0.0
    %426 = vmatprep.subr.mxu0 0.0
    %427 = vmatpush1.msra.mxu0 0.0
    %428 = vmatprep.subr.mxu0 0.0
    %429 = vmatpush1.msra.mxu0 0.0
    %430 = vmatprep.subr.mxu0 0.0
    %431 = vmatpush1.msra.mxu0 0.0
    %432 = vmatprep.subr.mxu0 0.0
    %433 = vmatpush1.msra.mxu0 0.0
    %434 = vmatprep.subr.mxu0 0.0
    %435 = vmatpush1.msra.mxu0 0.0
    %436 = vmatprep.subr.mxu0 0.0
    %437 = vmatpush1.msra.mxu0 0.0
    %438 = vmatprep.subr.mxu0 0.0
    %439 = vmatpush1.msra.mxu0 0.0
    %440 = vmatprep.subr.mxu0 0.0
    %441 = vmatpush1.msra.mxu0 0.0
    %442 = vmatprep.subr.mxu0 0.0
    %443 = vmatpush1.msra.mxu0 0.0
    %444 = vmatprep.subr.mxu0 0.0
    %445 = vmatpush1.msra.mxu0 0.0
    %446 = vmatprep.subr.mxu0 0.0
    %447 = vmatpush1.msra.mxu0 0.0
    %448 = vmatprep.subr.mxu0 0.0
    %449 = vmatpush1.msra.mxu0 0.0
    %450 = vmatprep.subr.mxu0 0.0
    %451 = vmatpush1.msra.mxu0 0.0
    %452 = vmatprep.subr.mxu0 0.0
    %453 = vmatpush1.msra.mxu0 0.0
    %454 = vmatprep.subr.mxu0 0.0
    %455 = vmatpush1.msra.mxu0 0.0
    %456 = vmatprep.subr.mxu0 0.0
    %457 = vmatpush1.msra.mxu0 0.0
    %458 = vmatprep.subr.mxu0 0.0
    %459 = vmatpush1.msra.mxu0 0.0
    %460 = vmatprep.subr.mxu0 0.0
    %461 = vmatpush1.msra.mxu0 0.0
    %462 = vmatprep.subr.mxu0 0.0
    %463 = vmatpush1.msra.mxu0 0.0
    %464 = vmatprep.subr.mxu0 0.0
    %465 = vmatpush1.msra.mxu0 0.0
    %466 = vmatprep.subr.mxu0 0.0
    %467 = vmatpush1.msra.mxu0 0.0
    %468 = vmatprep.subr.mxu0 0.0
    %469 = vmatpush1.msra.mxu0 0.0
    %470 = vmatprep.subr.mxu0 0.0
    %471 = vmatpush1.msra.mxu0 0.0
    %472 = vmatprep.subr.mxu0 0.0
    %473 = vmatpush1.msra.mxu0 0.0
    %474 = vmatprep.subr.mxu0 0.0
    %475 = vmatpush1.msra.mxu0 0.0
    %476 = vmatprep.subr.mxu0 0.0
    %477 = vmatpush1.msra.mxu0 0.0
    %478 = vmatprep.subr.mxu0 0.0
    %479 = vmatpush1.msra.mxu0 0.0
    %480 = vmatprep.subr.mxu0 0.0
    %481 = vmatpush1.msra.mxu0 0.0
    %482 = vmatprep.mubr.f32.mxu0 0.0
    %483 = vmatmul.mubr.f32.gmra.mrb[0].mxu0 %v416
    %v484 = vpop.f32.mrb[0].mxu0
    %v485 = vadd.f32 0.0, %v484
    %v486 = vpop.f32.mrb[0].mxu0
    %487 = vdwg.mxu0
    %488 = vrot.lane.b32.xlu0 %v149, 120
    %v489 = vpop.permute.xlu0 %488
    %490 = vrot.lane.b32.xlu0 %v149, 88
    %v491 = vpop.permute.xlu0 %490
    %v492 = vsel %vm160, %v489, 0
    %v494 = vsel %vm160, %v491, 0
    %496 = vmatprep.subr.mxu0 0.0
    %497 = vmatpush1.xpose.msra.mxu0 %v494
    %498 = vmatprep.subr.mxu0 0.0
    %499 = vmatpush1.xpose.msra.mxu0 0.0
    %500 = vmatprep.subr.mxu0 0.0
    %501 = vmatpush1.xpose.msra.mxu0 0.0
    %502 = vmatprep.subr.mxu0 0.0
    %503 = vmatpush1.xpose.msra.mxu0 0.0
    %504 = vmatprep.subr.mxu0 0.0
    %505 = vmatpush1.xpose.msra.mxu0 0.0
    %506 = vmatprep.subr.mxu0 0.0
    %507 = vmatpush1.xpose.msra.mxu0 0.0
    %508 = vmatprep.subr.mxu0 0.0
    %509 = vmatpush1.xpose.msra.mxu0 0.0
    %510 = vmatprep.subr.mxu0 0.0
    %511 = vmatpush1.xpose.msra.mxu0 0.0
    %512 = vmatprep.subr.mxu0 0.0
    %513 = vmatpush1.xpose.msra.mxu0 0.0
    %514 = vmatprep.subr.mxu0 0.0
    %515 = vmatpush1.xpose.msra.mxu0 0.0
    %516 = vmatprep.subr.mxu0 0.0
    %517 = vmatpush1.xpose.msra.mxu0 0.0
    %518 = vmatprep.subr.mxu0 0.0
    %519 = vmatpush1.xpose.msra.mxu0 0.0
    %520 = vmatprep.subr.mxu0 0.0
    %521 = vmatpush1.xpose.msra.mxu0 0.0
    %522 = vmatprep.subr.mxu0 0.0
    %523 = vmatpush1.xpose.msra.mxu0 0.0
    %524 = vmatprep.subr.mxu0 0.0
    %525 = vmatpush1.xpose.msra.mxu0 0.0
    %526 = vmatprep.subr.mxu0 0.0
    %527 = vmatpush1.xpose.msra.mxu0 0.0
    %528 = vmatprep.subr.mxu0 0.0
    %529 = vmatpush1.xpose.msra.mxu0 0.0
    %530 = vmatprep.subr.mxu0 0.0
    %531 = vmatpush1.xpose.msra.mxu0 0.0
    %532 = vmatprep.subr.mxu0 0.0
    %533 = vmatpush1.xpose.msra.mxu0 0.0
    %534 = vmatprep.subr.mxu0 0.0
    %535 = vmatpush1.xpose.msra.mxu0 0.0
    %536 = vmatprep.subr.mxu0 0.0
    %537 = vmatpush1.xpose.msra.mxu0 0.0
    %538 = vmatprep.subr.mxu0 0.0
    %539 = vmatpush1.xpose.msra.mxu0 0.0
    %540 = vmatprep.subr.mxu0 0.0
    %541 = vmatpush1.xpose.msra.mxu0 0.0
    %542 = vmatprep.subr.mxu0 0.0
    %543 = vmatpush1.xpose.msra.mxu0 0.0
    %544 = vmatprep.subr.mxu0 0.0
    %545 = vmatpush1.xpose.msra.mxu0 0.0
    %546 = vmatprep.subr.mxu0 0.0
    %547 = vmatpush1.xpose.msra.mxu0 0.0
    %548 = vmatprep.subr.mxu0 0.0
    %549 = vmatpush1.xpose.msra.mxu0 0.0
    %550 = vmatprep.subr.mxu0 0.0
    %551 = vmatpush1.xpose.msra.mxu0 0.0
    %552 = vmatprep.subr.mxu0 0.0
    %553 = vmatpush1.xpose.msra.mxu0 0.0
    %554 = vmatprep.subr.mxu0 0.0
    %555 = vmatpush1.xpose.msra.mxu0 0.0
    %556 = vmatprep.subr.mxu0 0.0
    %557 = vmatpush1.xpose.msra.mxu0 0.0
    %558 = vmatprep.subr.mxu0 0.0
    %559 = vmatpush1.xpose.msra.mxu0 0.0
    %560 = vmatprep.mubr.f32.mxu0 0.0
    %561 = vmatmul.mubr.f32.gmra.mrb[0].mxu0 %v492
    %v562 = vpop.f32.mrb[0].mxu0
    %v563 = vadd.f32 0.0, %v562
    %v564 = vpop.f32.mrb[0].mxu0
    %565 = vdwg.mxu0
    %v566 = vsel %vm235, %v563, -inf
    %567 = vmax.xlane.f32.xlu0 %v566
    %v568 = vpop.xlane.xlu0 %567
    %v569 = vsub.f32 %v563, %v568
    %v570 = vmul.f32 %v569, 1.442695
    %v571 = vpow.pop %v570
    %v572 = vsel %vm235, %v571, 0.0
    %573 = vadd.xlane.f32.xlu0 %v572
    %v574 = vpop.xlane.xlu0 %573
    %v575 = vrcp.pop %v574
    %v576 = vmul.f32 %v571, %v575
    %577 = vrot.lane.b32.xlu0 %v149, 56
    %v578 = vpop.permute.xlu0 %577
    %v581 = vsel %vm235, %v576, 0
    %583 = vmatprep.subr.mxu0 0.0
    %584 = vmatpush1.msra.mxu0 %v578
    %585 = vmatprep.subr.mxu0 0.0
    %586 = vmatpush1.msra.mxu0 0.0
    %587 = vmatprep.subr.mxu0 0.0
    %588 = vmatpush1.msra.mxu0 0.0
    %589 = vmatprep.subr.mxu0 0.0
    %590 = vmatpush1.msra.mxu0 0.0
    %591 = vmatprep.subr.mxu0 0.0
    %592 = vmatpush1.msra.mxu0 0.0
    %593 = vmatprep.subr.mxu0 0.0
    %594 = vmatpush1.msra.mxu0 0.0
    %595 = vmatprep.subr.mxu0 0.0
    %596 = vmatpush1.msra.mxu0 0.0
    %597 = vmatprep.subr.mxu0 0.0
    %598 = vmatpush1.msra.mxu0 0.0
    %599 = vmatprep.subr.mxu0 0.0
    %600 = vmatpush1.msra.mxu0 0.0
    %601 = vmatprep.subr.mxu0 0.0
    %602 = vmatpush1.msra.mxu0 0.0
    %603 = vmatprep.subr.mxu0 0.0
    %604 = vmatpush1.msra.mxu0 0.0
    %605 = vmatprep.subr.mxu0 0.0
    %606 = vmatpush1.msra.mxu0 0.0
    %607 = vmatprep.subr.mxu0 0.0
    %608 = vmatpush1.msra.mxu0 0.0
    %609 = vmatprep.subr.mxu0 0.0
    %610 = vmatpush1.msra.mxu0 0.0
    %611 = vmatprep.subr.mxu0 0.0
    %612 = vmatpush1.msra.mxu0 0.0
    %613 = vmatprep.subr.mxu0 0.0
    %614 = vmatpush1.msra.mxu0 0.0
    %615 = vmatprep.subr.mxu0 0.0
    %616 = vmatpush1.msra.mxu0 0.0
    %617 = vmatprep.subr.mxu0 0.0
    %618 = vmatpush1.msra.mxu0 0.0
    %619 = vmatprep.subr.mxu0 0.0
    %620 = vmatpush1.msra.mxu0 0.0
    %621 = vmatprep.subr.mxu0 0.0
    %622 = vmatpush1.msra.mxu0 0.0
    %623 = vmatprep.subr.mxu0 0.0
    %624 = vmatpush1.msra.mxu0 0.0
    %625 = vmatprep.subr.mxu0 0.0
    %626 = vmatpush1.msra.mxu0 0.0
    %627 = vmatprep.subr.mxu0 0.0
    %628 = vmatpush1.msra.mxu0 0.0
    %629 = vmatprep.subr.mxu0 0.0
    %630 = vmatpush1.msra.mxu0 0.0
    %631 = vmatprep.subr.mxu0 0.0
    %632 = vmatpush1.msra.mxu0 0.0
    %633 = vmatprep.subr.mxu0 0.0
    %634 = vmatpush1.msra.mxu0 0.0
    %635 = vmatprep.subr.mxu0 0.0
    %636 = vmatpush1.msra.mxu0 0.0
    %637 = vmatprep.subr.mxu0 0.0
    %638 = vmatpush1.msra.mxu0 0.0
    %639 = vmatprep.subr.mxu0 0.0
    %640 = vmatpush1.msra.mxu0 0.0
    %641 = vmatprep.subr.mxu0 0.0
    %642 = vmatpush1.msra.mxu0 0.0
    %643 = vmatprep.subr.mxu0 0.0
    %644 = vmatpush1.msra.mxu0 0.0
    %645 = vmatprep.subr.mxu0 0.0
    %646 = vmatpush1.msra.mxu0 0.0
    %647 = vmatprep.mubr.f32.mxu0 0.0
    %648 = vmatmul.mubr.f32.gmra.mrb[0].mxu0 %v581
    %v649 = vpop.f32.mrb[0].mxu0
    %v650 = vadd.f32 0.0, %v649
    %v651 = vpop.f32.mrb[0].mxu0
    %652 = vdwg.mxu0
    %653 = vrot.lane.b32.xlu0 %v149, 116
    %v654 = vpop.permute.xlu0 %653
    %655 = vrot.lane.b32.xlu0 %v149, 84
    %v656 = vpop.permute.xlu0 %655
    %v657 = vsel %vm160, %v654, 0
    %v659 = vsel %vm160, %v656, 0
    %661 = vmatprep.subr.mxu0 0.0
    %662 = vmatpush1.xpose.msra.mxu0 %v659
    %663 = vmatprep.subr.mxu0 0.0
    %664 = vmatpush1.xpose.msra.mxu0 0.0
    %665 = vmatprep.subr.mxu0 0.0
    %666 = vmatpush1.xpose.msra.mxu0 0.0
    %667 = vmatprep.subr.mxu0 0.0
    %668 = vmatpush1.xpose.msra.mxu0 0.0
    %669 = vmatprep.subr.mxu0 0.0
    %670 = vmatpush1.xpose.msra.mxu0 0.0
    %671 = vmatprep.subr.mxu0 0.0
    %672 = vmatpush1.xpose.msra.mxu0 0.0
    %673 = vmatprep.subr.mxu0 0.0
    %674 = vmatpush1.xpose.msra.mxu0 0.0
    %675 = vmatprep.subr.mxu0 0.0
    %676 = vmatpush1.xpose.msra.mxu0 0.0
    %677 = vmatprep.subr.mxu0 0.0
    %678 = vmatpush1.xpose.msra.mxu0 0.0
    %679 = vmatprep.subr.mxu0 0.0
    %680 = vmatpush1.xpose.msra.mxu0 0.0
    %681 = vmatprep.subr.mxu0 0.0
    %682 = vmatpush1.xpose.msra.mxu0 0.0
    %683 = vmatprep.subr.mxu0 0.0
    %684 = vmatpush1.xpose.msra.mxu0 0.0
    %685 = vmatprep.subr.mxu0 0.0
    %686 = vmatpush1.xpose.msra.mxu0 0.0
    %687 = vmatprep.subr.mxu0 0.0
    %688 = vmatpush1.xpose.msra.mxu0 0.0
    %689 = vmatprep.subr.mxu0 0.0
    %690 = vmatpush1.xpose.msra.mxu0 0.0
    %691 = vmatprep.subr.mxu0 0.0
    %692 = vmatpush1.xpose.msra.mxu0 0.0
    %693 = vmatprep.subr.mxu0 0.0
    %694 = vmatpush1.xpose.msra.mxu0 0.0
    %695 = vmatprep.subr.mxu0 0.0
    %696 = vmatpush1.xpose.msra.mxu0 0.0
    %697 = vmatprep.subr.mxu0 0.0
    %698 = vmatpush1.xpose.msra.mxu0 0.0
    %699 = vmatprep.subr.mxu0 0.0
    %700 = vmatpush1.xpose.msra.mxu0 0.0
    %701 = vmatprep.subr.mxu0 0.0
    %702 = vmatpush1.xpose.msra.mxu0 0.0
    %703 = vmatprep.subr.mxu0 0.0
    %704 = vmatpush1.xpose.msra.mxu0 0.0
    %705 = vmatprep.subr.mxu0 0.0
    %706 = vmatpush1.xpose.msra.mxu0 0.0
    %707 = vmatprep.subr.mxu0 0.0
    %708 = vmatpush1.xpose.msra.mxu0 0.0
    %709 = vmatprep.subr.mxu0 0.0
    %710 = vmatpush1.xpose.msra.mxu0 0.0
    %711 = vmatprep.subr.mxu0 0.0
    %712 = vmatpush1.xpose.msra.mxu0 0.0
    %713 = vmatprep.subr.mxu0 0.0
    %714 = vmatpush1.xpose.msra.mxu0 0.0
    %715 = vmatprep.subr.mxu0 0.0
    %716 = vmatpush1.xpose.msra.mxu0 0.0
    %717 = vmatprep.subr.mxu0 0.0
    %718 = vmatpush1.xpose.msra.mxu0 0.0
    %719 = vmatprep.subr.mxu0 0.0
    %720 = vmatpush1.xpose.msra.mxu0 0.0
    %721 = vmatprep.subr.mxu0 0.0
    %722 = vmatpush1.xpose.msra.mxu0 0.0
    %723 = vmatprep.subr.mxu0 0.0
    %724 = vmatpush1.xpose.msra.mxu0 0.0
    %725 = vmatprep.mubr.f32.mxu0 0.0
    %726 = vmatmul.mubr.f32.gmra.mrb[0].mxu0 %v657
    %v727 = vpop.f32.mrb[0].mxu0
    %v728 = vadd.f32 0.0, %v727
    %v729 = vpop.f32.mrb[0].mxu0
    %730 = vdwg.mxu0
    %v731 = vsel %vm235, %v728, -inf
    %732 = vmax.xlane.f32.xlu0 %v731
    %v733 = vpop.xlane.xlu0 %732
    %v734 = vsub.f32 %v728, %v733
    %v735 = vmul.f32 %v734, 1.442695
    %v736 = vpow.pop %v735
    %v737 = vsel %vm235, %v736, 0.0
    %738 = vadd.xlane.f32.xlu0 %v737
    %v739 = vpop.xlane.xlu0 %738
    %v740 = vrcp.pop %v739
    %v741 = vmul.f32 %v736, %v740
    %742 = vrot.lane.b32.xlu0 %v149, 52
    %v743 = vpop.permute.xlu0 %742
    %v746 = vsel %vm235, %v741, 0
    %748 = vmatprep.subr.mxu0 0.0
    %749 = vmatpush1.msra.mxu0 %v743
    %750 = vmatprep.subr.mxu0 0.0
    %751 = vmatpush1.msra.mxu0 0.0
    %752 = vmatprep.subr.mxu0 0.0
    %753 = vmatpush1.msra.mxu0 0.0
    %754 = vmatprep.subr.mxu0 0.0
    %755 = vmatpush1.msra.mxu0 0.0
    %756 = vmatprep.subr.mxu0 0.0
    %757 = vmatpush1.msra.mxu0 0.0
    %758 = vmatprep.subr.mxu0 0.0
    %759 = vmatpush1.msra.mxu0 0.0
    %760 = vmatprep.subr.mxu0 0.0
    %761 = vmatpush1.msra.mxu0 0.0
    %762 = vmatprep.subr.mxu0 0.0
    %763 = vmatpush1.msra.mxu0 0.0
    %764 = vmatprep.subr.mxu0 0.0
    %765 = vmatpush1.msra.mxu0 0.0
    %766 = vmatprep.subr.mxu0 0.0
    %767 = vmatpush1.msra.mxu0 0.0
    %768 = vmatprep.subr.mxu0 0.0
    %769 = vmatpush1.msra.mxu0 0.0
    %770 = vmatprep.subr.mxu0 0.0
    %771 = vmatpush1.msra.mxu0 0.0
    %772 = vmatprep.subr.mxu0 0.0
    %773 = vmatpush1.msra.mxu0 0.0
    %774 = vmatprep.subr.mxu0 0.0
    %775 = vmatpush1.msra.mxu0 0.0
    %776 = vmatprep.subr.mxu0 0.0
    %777 = vmatpush1.msra.mxu0 0.0
    %778 = vmatprep.subr.mxu0 0.0
    %779 = vmatpush1.msra.mxu0 0.0
    %780 = vmatprep.subr.mxu0 0.0
    %781 = vmatpush1.msra.mxu0 0.0
    %782 = vmatprep.subr.mxu0 0.0
    %783 = vmatpush1.msra.mxu0 0.0
    %784 = vmatprep.subr.mxu0 0.0
    %785 = vmatpush1.msra.mxu0 0.0
    %786 = vmatprep.subr.mxu0 0.0
    %787 = vmatpush1.msra.mxu0 0.0
    %788 = vmatprep.subr.mxu0 0.0
    %789 = vmatpush1.msra.mxu0 0.0
    %790 = vmatprep.subr.mxu0 0.0
    %791 = vmatpush1.msra.mxu0 0.0
    %792 = vmatprep.subr.mxu0 0.0
    %793 = vmatpush1.msra.mxu0 0.0
    %794 = vmatprep.subr.mxu0 0.0
    %795 = vmatpush1.msra.mxu0 0.0
    %796 = vmatprep.subr.mxu0 0.0
    %797 = vmatpush1.msra.mxu0 0.0
    %798 = vmatprep.subr.mxu0 0.0
    %799 = vmatpush1.msra.mxu0 0.0
    %800 = vmatprep.subr.mxu0 0.0
    %801 = vmatpush1.msra.mxu0 0.0
    %802 = vmatprep.subr.mxu0 0.0
    %803 = vmatpush1.msra.mxu0 0.0
    %804 = vmatprep.subr.mxu0 0.0
    %805 = vmatpush1.msra.mxu0 0.0
    %806 = vmatprep.subr.mxu0 0.0
    %807 = vmatpush1.msra.mxu0 0.0
    %808 = vmatprep.subr.mxu0 0.0
    %809 = vmatpush1.msra.mxu0 0.0
    %810 = vmatprep.subr.mxu0 0.0
    %811 = vmatpush1.msra.mxu0 0.0
    %812 = vmatprep.mubr.f32.mxu0 0.0
    %813 = vmatmul.mubr.f32.gmra.mrb[0].mxu0 %v746
    %v814 = vpop.f32.mrb[0].mxu0
    %v815 = vadd.f32 0.0, %v814
    %v816 = vpop.f32.mrb[0].mxu0
    %817 = vdwg.mxu0
    %818 = vrot.lane.b32.xlu0 %v149, 112
    %v819 = vpop.permute.xlu0 %818
    %820 = vrot.lane.b32.xlu0 %v149, 80
    %v821 = vpop.permute.xlu0 %820
    %v822 = vsel %vm160, %v819, 0
    %v824 = vsel %vm160, %v821, 0
    %826 = vmatprep.subr.mxu0 0.0
    %827 = vmatpush1.xpose.msra.mxu0 %v824
    %828 = vmatprep.subr.mxu0 0.0
    %829 = vmatpush1.xpose.msra.mxu0 0.0
    %830 = vmatprep.subr.mxu0 0.0
    %831 = vmatpush1.xpose.msra.mxu0 0.0
    %832 = vmatprep.subr.mxu0 0.0
    %833 = vmatpush1.xpose.msra.mxu0 0.0
    %834 = vmatprep.subr.mxu0 0.0
    %835 = vmatpush1.xpose.msra.mxu0 0.0
    %836 = vmatprep.subr.mxu0 0.0
    %837 = vmatpush1.xpose.msra.mxu0 0.0
    %838 = vmatprep.subr.mxu0 0.0
    %839 = vmatpush1.xpose.msra.mxu0 0.0
    %840 = vmatprep.subr.mxu0 0.0
    %841 = vmatpush1.xpose.msra.mxu0 0.0
    %842 = vmatprep.subr.mxu0 0.0
    %843 = vmatpush1.xpose.msra.mxu0 0.0
    %844 = vmatprep.subr.mxu0 0.0
    %845 = vmatpush1.xpose.msra.mxu0 0.0
    %846 = vmatprep.subr.mxu0 0.0
    %847 = vmatpush1.xpose.msra.mxu0 0.0
    %848 = vmatprep.subr.mxu0 0.0
    %849 = vmatpush1.xpose.msra.mxu0 0.0
    %850 = vmatprep.subr.mxu0 0.0
    %851 = vmatpush1.xpose.msra.mxu0 0.0
    %852 = vmatprep.subr.mxu0 0.0
    %853 = vmatpush1.xpose.msra.mxu0 0.0
    %854 = vmatprep.subr.mxu0 0.0
    %855 = vmatpush1.xpose.msra.mxu0 0.0
    %856 = vmatprep.subr.mxu0 0.0
    %857 = vmatpush1.xpose.msra.mxu0 0.0
    %858 = vmatprep.subr.mxu0 0.0
    %859 = vmatpush1.xpose.msra.mxu0 0.0
    %860 = vmatprep.subr.mxu0 0.0
    %861 = vmatpush1.xpose.msra.mxu0 0.0
    %862 = vmatprep.subr.mxu0 0.0
    %863 = vmatpush1.xpose.msra.mxu0 0.0
    %864 = vmatprep.subr.mxu0 0.0
    %865 = vmatpush1.xpose.msra.mxu0 0.0
    %866 = vmatprep.subr.mxu0 0.0
    %867 = vmatpush1.xpose.msra.mxu0 0.0
    %868 = vmatprep.subr.mxu0 0.0
    %869 = vmatpush1.xpose.msra.mxu0 0.0
    %870 = vmatprep.subr.mxu0 0.0
    %871 = vmatpush1.xpose.msra.mxu0 0.0
    %872 = vmatprep.subr.mxu0 0.0
    %873 = vmatpush1.xpose.msra.mxu0 0.0
    %874 = vmatprep.subr.mxu0 0.0
    %875 = vmatpush1.xpose.msra.mxu0 0.0
    %876 = vmatprep.subr.mxu0 0.0
    %877 = vmatpush1.xpose.msra.mxu0 0.0
    %878 = vmatprep.subr.mxu0 0.0
    %879 = vmatpush1.xpose.msra.mxu0 0.0
    %880 = vmatprep.subr.mxu0 0.0
    %881 = vmatpush1.xpose.msra.mxu0 0.0
    %882 = vmatprep.subr.mxu0 0.0
    %883 = vmatpush1.xpose.msra.mxu0 0.0
    %884 = vmatprep.subr.mxu0 0.0
    %885 = vmatpush1.xpose.msra.mxu0 0.0
    %886 = vmatprep.subr.mxu0 0.0
    %887 = vmatpush1.xpose.msra.mxu0 0.0
    %888 = vmatprep.subr.mxu0 0.0
    %889 = vmatpush1.xpose.msra.mxu0 0.0
    %890 = vmatprep.mubr.f32.mxu0 0.0
    %891 = vmatmul.mubr.f32.gmra.mrb[0].mxu0 %v822
    %v892 = vpop.f32.mrb[0].mxu0
    %v893 = vadd.f32 0.0, %v892
    %v894 = vpop.f32.mrb[0].mxu0
    %895 = vdwg.mxu0
    %v896 = vsel %vm235, %v893, -inf
    %897 = vmax.xlane.f32.xlu0 %v896
    %v898 = vpop.xlane.xlu0 %897
    %v899 = vsub.f32 %v893, %v898
    %v900 = vmul.f32 %v899, 1.442695
    %v901 = vpow.pop %v900
    %v902 = vsel %vm235, %v901, 0.0
    %903 = vadd.xlane.f32.xlu0 %v902
    %v904 = vpop.xlane.xlu0 %903
    %v905 = vrcp.pop %v904
    %v906 = vmul.f32 %v901, %v905
    %907 = vrot.lane.b32.xlu0 %v149, 48
    %v908 = vpop.permute.xlu0 %907
    %v911 = vsel %vm235, %v906, 0
    %913 = vmatprep.subr.mxu0 0.0
    %914 = vmatpush1.msra.mxu0 %v908
    %915 = vmatprep.subr.mxu0 0.0
    %916 = vmatpush1.msra.mxu0 0.0
    %917 = vmatprep.subr.mxu0 0.0
    %918 = vmatpush1.msra.mxu0 0.0
    %919 = vmatprep.subr.mxu0 0.0
    %920 = vmatpush1.msra.mxu0 0.0
    %921 = vmatprep.subr.mxu0 0.0
    %922 = vmatpush1.msra.mxu0 0.0
    %923 = vmatprep.subr.mxu0 0.0
    %924 = vmatpush1.msra.mxu0 0.0
    %925 = vmatprep.subr.mxu0 0.0
    %926 = vmatpush1.msra.mxu0 0.0
    %927 = vmatprep.subr.mxu0 0.0
    %928 = vmatpush1.msra.mxu0 0.0
    %929 = vmatprep.subr.mxu0 0.0
    %930 = vmatpush1.msra.mxu0 0.0
    %931 = vmatprep.subr.mxu0 0.0
    %932 = vmatpush1.msra.mxu0 0.0
    %933 = vmatprep.subr.mxu0 0.0
    %934 = vmatpush1.msra.mxu0 0.0
    %935 = vmatprep.subr.mxu0 0.0
    %936 = vmatpush1.msra.mxu0 0.0
    %937 = vmatprep.subr.mxu0 0.0
    %938 = vmatpush1.msra.mxu0 0.0
    %939 = vmatprep.subr.mxu0 0.0
    %940 = vmatpush1.msra.mxu0 0.0
    %941 = vmatprep.subr.mxu0 0.0
    %942 = vmatpush1.msra.mxu0 0.0
    %943 = vmatprep.subr.mxu0 0.0
    %944 = vmatpush1.msra.mxu0 0.0
    %945 = vmatprep.subr.mxu0 0.0
    %946 = vmatpush1.msra.mxu0 0.0
    %947 = vmatprep.subr.mxu0 0.0
    %948 = vmatpush1.msra.mxu0 0.0
    %949 = vmatprep.subr.mxu0 0.0
    %950 = vmatpush1.msra.mxu0 0.0
    %951 = vmatprep.subr.mxu0 0.0
    %952 = vmatpush1.msra.mxu0 0.0
    %953 = vmatprep.subr.mxu0 0.0
    %954 = vmatpush1.msra.mxu0 0.0
    %955 = vmatprep.subr.mxu0 0.0
    %956 = vmatpush1.msra.mxu0 0.0
    %957 = vmatprep.subr.mxu0 0.0
    %958 = vmatpush1.msra.mxu0 0.0
    %959 = vmatprep.subr.mxu0 0.0
    %960 = vmatpush1.msra.mxu0 0.0
    %961 = vmatprep.subr.mxu0 0.0
    %962 = vmatpush1.msra.mxu0 0.0
    %963 = vmatprep.subr.mxu0 0.0
    %964 = vmatpush1.msra.mxu0 0.0
    %965 = vmatprep.subr.mxu0 0.0
    %966 = vmatpush1.msra.mxu0 0.0
    %967 = vmatprep.subr.mxu0 0.0
    %968 = vmatpush1.msra.mxu0 0.0
    %969 = vmatprep.subr.mxu0 0.0
    %970 = vmatpush1.msra.mxu0 0.0
    %971 = vmatprep.subr.mxu0 0.0
    %972 = vmatpush1.msra.mxu0 0.0
    %973 = vmatprep.subr.mxu0 0.0
    %974 = vmatpush1.msra.mxu0 0.0
    %975 = vmatprep.subr.mxu0 0.0
    %976 = vmatpush1.msra.mxu0 0.0
    %977 = vmatprep.mubr.f32.mxu0 0.0
    %978 = vmatmul.mubr.f32.gmra.mrb[0].mxu0 %v911
    %v979 = vpop.f32.mrb[0].mxu0
    %v980 = vadd.f32 0.0, %v979
    %v981 = vpop.f32.mrb[0].mxu0
    %982 = vdwg.mxu0
    %983 = vrot.lane.b32.xlu0 %v149, 108
    %v984 = vpop.permute.xlu0 %983
    %985 = vrot.lane.b32.xlu0 %v149, 76
    %v986 = vpop.permute.xlu0 %985
    %v987 = vsel %vm160, %v984, 0
    %v989 = vsel %vm160, %v986, 0
    %991 = vmatprep.subr.mxu0 0.0
    %992 = vmatpush1.xpose.msra.mxu0 %v989
    %993 = vmatprep.subr.mxu0 0.0
    %994 = vmatpush1.xpose.msra.mxu0 0.0
    %995 = vmatprep.subr.mxu0 0.0
    %996 = vmatpush1.xpose.msra.mxu0 0.0
    %997 = vmatprep.subr.mxu0 0.0
    %998 = vmatpush1.xpose.msra.mxu0 0.0
    %999 = vmatprep.subr.mxu0 0.0
    %1000 = vmatpush1.xpose.msra.mxu0 0.0
    %1001 = vmatprep.subr.mxu0 0.0
    %1002 = vmatpush1.xpose.msra.mxu0 0.0
    %1003 = vmatprep.subr.mxu0 0.0
    %1004 = vmatpush1.xpose.msra.mxu0 0.0
    %1005 = vmatprep.subr.mxu0 0.0
    %1006 = vmatpush1.xpose.msra.mxu0 0.0
    %1007 = vmatprep.subr.mxu0 0.0
    %1008 = vmatpush1.xpose.msra.mxu0 0.0
    %1009 = vmatprep.subr.mxu0 0.0
    %1010 = vmatpush1.xpose.msra.mxu0 0.0
    %1011 = vmatprep.subr.mxu0 0.0
    %1012 = vmatpush1.xpose.msra.mxu0 0.0
    %1013 = vmatprep.subr.mxu0 0.0
    %1014 = vmatpush1.xpose.msra.mxu0 0.0
    %1015 = vmatprep.subr.mxu0 0.0
    %1016 = vmatpush1.xpose.msra.mxu0 0.0
    %1017 = vmatprep.subr.mxu0 0.0
    %1018 = vmatpush1.xpose.msra.mxu0 0.0
    %1019 = vmatprep.subr.mxu0 0.0
    %1020 = vmatpush1.xpose.msra.mxu0 0.0
    %1021 = vmatprep.subr.mxu0 0.0
    %1022 = vmatpush1.xpose.msra.mxu0 0.0
    %1023 = vmatprep.subr.mxu0 0.0
    %1024 = vmatpush1.xpose.msra.mxu0 0.0
    %1025 = vmatprep.subr.mxu0 0.0
    %1026 = vmatpush1.xpose.msra.mxu0 0.0
    %1027 = vmatprep.subr.mxu0 0.0
    %1028 = vmatpush1.xpose.msra.mxu0 0.0
    %1029 = vmatprep.subr.mxu0 0.0
    %1030 = vmatpush1.xpose.msra.mxu0 0.0
    %1031 = vmatprep.subr.mxu0 0.0
    %1032 = vmatpush1.xpose.msra.mxu0 0.0
    %1033 = vmatprep.subr.mxu0 0.0
    %1034 = vmatpush1.xpose.msra.mxu0 0.0
    %1035 = vmatprep.subr.mxu0 0.0
    %1036 = vmatpush1.xpose.msra.mxu0 0.0
    %1037 = vmatprep.subr.mxu0 0.0
    %1038 = vmatpush1.xpose.msra.mxu0 0.0
    %1039 = vmatprep.subr.mxu0 0.0
    %1040 = vmatpush1.xpose.msra.mxu0 0.0
    %1041 = vmatprep.subr.mxu0 0.0
    %1042 = vmatpush1.xpose.msra.mxu0 0.0
    %1043 = vmatprep.subr.mxu0 0.0
    %1044 = vmatpush1.xpose.msra.mxu0 0.0
    %1045 = vmatprep.subr.mxu0 0.0
    %1046 = vmatpush1.xpose.msra.mxu0 0.0
    %1047 = vmatprep.subr.mxu0 0.0
    %1048 = vmatpush1.xpose.msra.mxu0 0.0
    %1049 = vmatprep.subr.mxu0 0.0
    %1050 = vmatpush1.xpose.msra.mxu0 0.0
    %1051 = vmatprep.subr.mxu0 0.0
    %1052 = vmatpush1.xpose.msra.mxu0 0.0
    %1053 = vmatprep.subr.mxu0 0.0
    %1054 = vmatpush1.xpose.msra.mxu0 0.0
    %1055 = vmatprep.mubr.f32.mxu0 0.0
    %1056 = vmatmul.mubr.f32.gmra.mrb[0].mxu0 %v987
    %v1057 = vpop.f32.mrb[0].mxu0
    %v1058 = vadd.f32 0.0, %v1057
    %v1059 = vpop.f32.mrb[0].mxu0
    %1060 = vdwg.mxu0
    %v1061 = vsel %vm235, %v1058, -inf
    %1062 = vmax.xlane.f32.xlu0 %v1061
    %v1063 = vpop.xlane.xlu0 %1062
    %v1064 = vsub.f32 %v1058, %v1063
    %v1065 = vmul.f32 %v1064, 1.442695
    %v1066 = vpow.pop %v1065
    %v1067 = vsel %vm235, %v1066, 0.0
    %1068 = vadd.xlane.f32.xlu0 %v1067
    %v1069 = vpop.xlane.xlu0 %1068
    %v1070 = vrcp.pop %v1069
    %v1071 = vmul.f32 %v1066, %v1070
    %1072 = vrot.lane.b32.xlu0 %v149, 44
    %v1073 = vpop.permute.xlu0 %1072
    %v1076 = vsel %vm235, %v1071, 0
    %1078 = vmatprep.subr.mxu0 0.0
    %1079 = vmatpush1.msra.mxu0 %v1073
    %1080 = vmatprep.subr.mxu0 0.0
    %1081 = vmatpush1.msra.mxu0 0.0
    %1082 = vmatprep.subr.mxu0 0.0
    %1083 = vmatpush1.msra.mxu0 0.0
    %1084 = vmatprep.subr.mxu0 0.0
    %1085 = vmatpush1.msra.mxu0 0.0
    %1086 = vmatprep.subr.mxu0 0.0
    %1087 = vmatpush1.msra.mxu0 0.0
    %1088 = vmatprep.subr.mxu0 0.0
    %1089 = vmatpush1.msra.mxu0 0.0
    %1090 = vmatprep.subr.mxu0 0.0
    %1091 = vmatpush1.msra.mxu0 0.0
    %1092 = vmatprep.subr.mxu0 0.0
    %1093 = vmatpush1.msra.mxu0 0.0
    %1094 = vmatprep.subr.mxu0 0.0
    %1095 = vmatpush1.msra.mxu0 0.0
    %1096 = vmatprep.subr.mxu0 0.0
    %1097 = vmatpush1.msra.mxu0 0.0
    %1098 = vmatprep.subr.mxu0 0.0
    %1099 = vmatpush1.msra.mxu0 0.0
    %1100 = vmatprep.subr.mxu0 0.0
    %1101 = vmatpush1.msra.mxu0 0.0
    %1102 = vmatprep.subr.mxu0 0.0
    %1103 = vmatpush1.msra.mxu0 0.0
    %1104 = vmatprep.subr.mxu0 0.0
    %1105 = vmatpush1.msra.mxu0 0.0
    %1106 = vmatprep.subr.mxu0 0.0
    %1107 = vmatpush1.msra.mxu0 0.0
    %1108 = vmatprep.subr.mxu0 0.0
    %1109 = vmatpush1.msra.mxu0 0.0
    %1110 = vmatprep.subr.mxu0 0.0
    %1111 = vmatpush1.msra.mxu0 0.0
    %1112 = vmatprep.subr.mxu0 0.0
    %1113 = vmatpush1.msra.mxu0 0.0
    %1114 = vmatprep.subr.mxu0 0.0
    %1115 = vmatpush1.msra.mxu0 0.0
    %1116 = vmatprep.subr.mxu0 0.0
    %1117 = vmatpush1.msra.mxu0 0.0
    %1118 = vmatprep.subr.mxu0 0.0
    %1119 = vmatpush1.msra.mxu0 0.0
    %1120 = vmatprep.subr.mxu0 0.0
    %1121 = vmatpush1.msra.mxu0 0.0
    %1122 = vmatprep.subr.mxu0 0.0
    %1123 = vmatpush1.msra.mxu0 0.0
    %1124 = vmatprep.subr.mxu0 0.0
    %1125 = vmatpush1.msra.mxu0 0.0
    %1126 = vmatprep.subr.mxu0 0.0
    %1127 = vmatpush1.msra.mxu0 0.0
    %1128 = vmatprep.subr.mxu0 0.0
    %1129 = vmatpush1.msra.mxu0 0.0
    %1130 = vmatprep.subr.mxu0 0.0
    %1131 = vmatpush1.msra.mxu0 0.0
    %1132 = vmatprep.subr.mxu0 0.0
    %1133 = vmatpush1.msra.mxu0 0.0
    %1134 = vmatprep.subr.mxu0 0.0
    %1135 = vmatpush1.msra.mxu0 0.0
    %1136 = vmatprep.subr.mxu0 0.0
    %1137 = vmatpush1.msra.mxu0 0.0
    %1138 = vmatprep.subr.mxu0 0.0
    %1139 = vmatpush1.msra.mxu0 0.0
    %1140 = vmatprep.subr.mxu0 0.0
    %1141 = vmatpush1.msra.mxu0 0.0
    %1142 = vmatprep.mubr.f32.mxu0 0.0
    %1143 = vmatmul.mubr.f32.gmra.mrb[0].mxu0 %v1076
    %v1144 = vpop.f32.mrb[0].mxu0
    %v1145 = vadd.f32 0.0, %v1144
    %v1146 = vpop.f32.mrb[0].mxu0
    %1147 = vdwg.mxu0
    %1148 = vrot.lane.b32.xlu0 %v149, 104
    %v1149 = vpop.permute.xlu0 %1148
    %1150 = vrot.lane.b32.xlu0 %v149, 72
    %v1151 = vpop.permute.xlu0 %1150
    %v1152 = vsel %vm160, %v1149, 0
    %v1154 = vsel %vm160, %v1151, 0
    %1156 = vmatprep.subr.mxu0 0.0
    %1157 = vmatpush1.xpose.msra.mxu0 %v1154
    %1158 = vmatprep.subr.mxu0 0.0
    %1159 = vmatpush1.xpose.msra.mxu0 0.0
    %1160 = vmatprep.subr.mxu0 0.0
    %1161 = vmatpush1.xpose.msra.mxu0 0.0
    %1162 = vmatprep.subr.mxu0 0.0
    %1163 = vmatpush1.xpose.msra.mxu0 0.0
    %1164 = vmatprep.subr.mxu0 0.0
    %1165 = vmatpush1.xpose.msra.mxu0 0.0
    %1166 = vmatprep.subr.mxu0 0.0
    %1167 = vmatpush1.xpose.msra.mxu0 0.0
    %1168 = vmatprep.subr.mxu0 0.0
    %1169 = vmatpush1.xpose.msra.mxu0 0.0
    %1170 = vmatprep.subr.mxu0 0.0
    %1171 = vmatpush1.xpose.msra.mxu0 0.0
    %1172 = vmatprep.subr.mxu0 0.0
    %1173 = vmatpush1.xpose.msra.mxu0 0.0
    %1174 = vmatprep.subr.mxu0 0.0
    %1175 = vmatpush1.xpose.msra.mxu0 0.0
    %1176 = vmatprep.subr.mxu0 0.0
    %1177 = vmatpush1.xpose.msra.mxu0 0.0
    %1178 = vmatprep.subr.mxu0 0.0
    %1179 = vmatpush1.xpose.msra.mxu0 0.0
    %1180 = vmatprep.subr.mxu0 0.0
    %1181 = vmatpush1.xpose.msra.mxu0 0.0
    %1182 = vmatprep.subr.mxu0 0.0
    %1183 = vmatpush1.xpose.msra.mxu0 0.0
    %1184 = vmatprep.subr.mxu0 0.0
    %1185 = vmatpush1.xpose.msra.mxu0 0.0
    %1186 = vmatprep.subr.mxu0 0.0
    %1187 = vmatpush1.xpose.msra.mxu0 0.0
    %1188 = vmatprep.subr.mxu0 0.0
    %1189 = vmatpush1.xpose.msra.mxu0 0.0
    %1190 = vmatprep.subr.mxu0 0.0
    %1191 = vmatpush1.xpose.msra.mxu0 0.0
    %1192 = vmatprep.subr.mxu0 0.0
    %1193 = vmatpush1.xpose.msra.mxu0 0.0
    %1194 = vmatprep.subr.mxu0 0.0
    %1195 = vmatpush1.xpose.msra.mxu0 0.0
    %1196 = vmatprep.subr.mxu0 0.0
    %1197 = vmatpush1.xpose.msra.mxu0 0.0
    %1198 = vmatprep.subr.mxu0 0.0
    %1199 = vmatpush1.xpose.msra.mxu0 0.0
    %1200 = vmatprep.subr.mxu0 0.0
    %1201 = vmatpush1.xpose.msra.mxu0 0.0
    %1202 = vmatprep.subr.mxu0 0.0
    %1203 = vmatpush1.xpose.msra.mxu0 0.0
    %1204 = vmatprep.subr.mxu0 0.0
    %1205 = vmatpush1.xpose.msra.mxu0 0.0
    %1206 = vmatprep.subr.mxu0 0.0
    %1207 = vmatpush1.xpose.msra.mxu0 0.0
    %1208 = vmatprep.subr.mxu0 0.0
    %1209 = vmatpush1.xpose.msra.mxu0 0.0
    %1210 = vmatprep.subr.mxu0 0.0
    %1211 = vmatpush1.xpose.msra.mxu0 0.0
    %1212 = vmatprep.subr.mxu0 0.0
    %1213 = vmatpush1.xpose.msra.mxu0 0.0
    %1214 = vmatprep.subr.mxu0 0.0
    %1215 = vmatpush1.xpose.msra.mxu0 0.0
    %1216 = vmatprep.subr.mxu0 0.0
    %1217 = vmatpush1.xpose.msra.mxu0 0.0
    %1218 = vmatprep.subr.mxu0 0.0
    %1219 = vmatpush1.xpose.msra.mxu0 0.0
    %1220 = vmatprep.mubr.f32.mxu0 0.0
    %1221 = vmatmul.mubr.f32.gmra.mrb[0].mxu0 %v1152
    %v1222 = vpop.f32.mrb[0].mxu0
    %v1223 = vadd.f32 0.0, %v1222
    %v1224 = vpop.f32.mrb[0].mxu0
    %1225 = vdwg.mxu0
    %v1226 = vsel %vm235, %v1223, -inf
    %1227 = vmax.xlane.f32.xlu0 %v1226
    %v1228 = vpop.xlane.xlu0 %1227
    %v1229 = vsub.f32 %v1223, %v1228
    %v1230 = vmul.f32 %v1229, 1.442695
    %v1231 = vpow.pop %v1230
    %v1232 = vsel %vm235, %v1231, 0.0
    %1233 = vadd.xlane.f32.xlu0 %v1232
    %v1234 = vpop.xlane.xlu0 %1233
    %v1235 = vrcp.pop %v1234
    %v1236 = vmul.f32 %v1231, %v1235
    %1237 = vrot.lane.b32.xlu0 %v149, 40
    %v1238 = vpop.permute.xlu0 %1237
    %v1241 = vsel %vm235, %v1236, 0
    %1243 = vmatprep.subr.mxu0 0.0
    %1244 = vmatpush1.msra.mxu0 %v1238
    %1245 = vmatprep.subr.mxu0 0.0
    %1246 = vmatpush1.msra.mxu0 0.0
    %1247 = vmatprep.subr.mxu0 0.0
    %1248 = vmatpush1.msra.mxu0 0.0
    %1249 = vmatprep.subr.mxu0 0.0
    %1250 = vmatpush1.msra.mxu0 0.0
    %1251 = vmatprep.subr.mxu0 0.0
    %1252 = vmatpush1.msra.mxu0 0.0
    %1253 = vmatprep.subr.mxu0 0.0
    %1254 = vmatpush1.msra.mxu0 0.0
    %1255 = vmatprep.subr.mxu0 0.0
    %1256 = vmatpush1.msra.mxu0 0.0
    %1257 = vmatprep.subr.mxu0 0.0
    %1258 = vmatpush1.msra.mxu0 0.0
    %1259 = vmatprep.subr.mxu0 0.0
    %1260 = vmatpush1.msra.mxu0 0.0
    %1261 = vmatprep.subr.mxu0 0.0
    %1262 = vmatpush1.msra.mxu0 0.0
    %1263 = vmatprep.subr.mxu0 0.0
    %1264 = vmatpush1.msra.mxu0 0.0
    %1265 = vmatprep.subr.mxu0 0.0
    %1266 = vmatpush1.msra.mxu0 0.0
    %1267 = vmatprep.subr.mxu0 0.0
    %1268 = vmatpush1.msra.mxu0 0.0
    %1269 = vmatprep.subr.mxu0 0.0
    %1270 = vmatpush1.msra.mxu0 0.0
    %1271 = vmatprep.subr.mxu0 0.0
    %1272 = vmatpush1.msra.mxu0 0.0
    %1273 = vmatprep.subr.mxu0 0.0
    %1274 = vmatpush1.msra.mxu0 0.0
    %1275 = vmatprep.subr.mxu0 0.0
    %1276 = vmatpush1.msra.mxu0 0.0
    %1277 = vmatprep.subr.mxu0 0.0
    %1278 = vmatpush1.msra.mxu0 0.0
    %1279 = vmatprep.subr.mxu0 0.0
    %1280 = vmatpush1.msra.mxu0 0.0
    %1281 = vmatprep.subr.mxu0 0.0
    %1282 = vmatpush1.msra.mxu0 0.0
    %1283 = vmatprep.subr.mxu0 0.0
    %1284 = vmatpush1.msra.mxu0 0.0
    %1285 = vmatprep.subr.mxu0 0.0
    %1286 = vmatpush1.msra.mxu0 0.0
    %1287 = vmatprep.subr.mxu0 0.0
    %1288 = vmatpush1.msra.mxu0 0.0
    %1289 = vmatprep.subr.mxu0 0.0
    %1290 = vmatpush1.msra.mxu0 0.0
    %1291 = vmatprep.subr.mxu0 0.0
    %1292 = vmatpush1.msra.mxu0 0.0
    %1293 = vmatprep.subr.mxu0 0.0
    %1294 = vmatpush1.msra.mxu0 0.0
    %1295 = vmatprep.subr.mxu0 0.0
    %1296 = vmatpush1.msra.mxu0 0.0
    %1297 = vmatprep.subr.mxu0 0.0
    %1298 = vmatpush1.msra.mxu0 0.0
    %1299 = vmatprep.subr.mxu0 0.0
    %1300 = vmatpush1.msra.mxu0 0.0
    %1301 = vmatprep.subr.mxu0 0.0
    %1302 = vmatpush1.msra.mxu0 0.0
    %1303 = vmatprep.subr.mxu0 0.0
    %1304 = vmatpush1.msra.mxu0 0.0
    %1305 = vmatprep.subr.mxu0 0.0
    %1306 = vmatpush1.msra.mxu0 0.0
    %1307 = vmatprep.mubr.f32.mxu0 0.0
    %1308 = vmatmul.mubr.f32.gmra.mrb[0].mxu0 %v1241
    %v1309 = vpop.f32.mrb[0].mxu0
    %v1310 = vadd.f32 0.0, %v1309
    %v1311 = vpop.f32.mrb[0].mxu0
    %1312 = vdwg.mxu0
    %1313 = vrot.lane.b32.xlu0 %v149, 100
    %v1314 = vpop.permute.xlu0 %1313
    %1315 = vrot.lane.b32.xlu0 %v149, 68
    %v1316 = vpop.permute.xlu0 %1315
    %v1317 = vsel %vm160, %v1314, 0
    %v1319 = vsel %vm160, %v1316, 0
    %1321 = vmatprep.subr.mxu0 0.0
    %1322 = vmatpush1.xpose.msra.mxu0 %v1319
    %1323 = vmatprep.subr.mxu0 0.0
    %1324 = vmatpush1.xpose.msra.mxu0 0.0
    %1325 = vmatprep.subr.mxu0 0.0
    %1326 = vmatpush1.xpose.msra.mxu0 0.0
    %1327 = vmatprep.subr.mxu0 0.0
    %1328 = vmatpush1.xpose.msra.mxu0 0.0
    %1329 = vmatprep.subr.mxu0 0.0
    %1330 = vmatpush1.xpose.msra.mxu0 0.0
    %1331 = vmatprep.subr.mxu0 0.0
    %1332 = vmatpush1.xpose.msra.mxu0 0.0
    %1333 = vmatprep.subr.mxu0 0.0
    %1334 = vmatpush1.xpose.msra.mxu0 0.0
    %1335 = vmatprep.subr.mxu0 0.0
    %1336 = vmatpush1.xpose.msra.mxu0 0.0
    %1337 = vmatprep.subr.mxu0 0.0
    %1338 = vmatpush1.xpose.msra.mxu0 0.0
    %1339 = vmatprep.subr.mxu0 0.0
    %1340 = vmatpush1.xpose.msra.mxu0 0.0
    %1341 = vmatprep.subr.mxu0 0.0
    %1342 = vmatpush1.xpose.msra.mxu0 0.0
    %1343 = vmatprep.subr.mxu0 0.0
    %1344 = vmatpush1.xpose.msra.mxu0 0.0
    %1345 = vmatprep.subr.mxu0 0.0
    %1346 = vmatpush1.xpose.msra.mxu0 0.0
    %1347 = vmatprep.subr.mxu0 0.0
    %1348 = vmatpush1.xpose.msra.mxu0 0.0
    %1349 = vmatprep.subr.mxu0 0.0
    %1350 = vmatpush1.xpose.msra.mxu0 0.0
    %1351 = vmatprep.subr.mxu0 0.0
    %1352 = vmatpush1.xpose.msra.mxu0 0.0
    %1353 = vmatprep.subr.mxu0 0.0
    %1354 = vmatpush1.xpose.msra.mxu0 0.0
    %1355 = vmatprep.subr.mxu0 0.0
    %1356 = vmatpush1.xpose.msra.mxu0 0.0
    %1357 = vmatprep.subr.mxu0 0.0
    %1358 = vmatpush1.xpose.msra.mxu0 0.0
    %1359 = vmatprep.subr.mxu0 0.0
    %1360 = vmatpush1.xpose.msra.mxu0 0.0
    %1361 = vmatprep.subr.mxu0 0.0
    %1362 = vmatpush1.xpose.msra.mxu0 0.0
    %1363 = vmatprep.subr.mxu0 0.0
    %1364 = vmatpush1.xpose.msra.mxu0 0.0
    %1365 = vmatprep.subr.mxu0 0.0
    %1366 = vmatpush1.xpose.msra.mxu0 0.0
    %1367 = vmatprep.subr.mxu0 0.0
    %1368 = vmatpush1.xpose.msra.mxu0 0.0
    %1369 = vmatprep.subr.mxu0 0.0
    %1370 = vmatpush1.xpose.msra.mxu0 0.0
    %1371 = vmatprep.subr.mxu0 0.0
    %1372 = vmatpush1.xpose.msra.mxu0 0.0
    %1373 = vmatprep.subr.mxu0 0.0
    %1374 = vmatpush1.xpose.msra.mxu0 0.0
    %1375 = vmatprep.subr.mxu0 0.0
    %1376 = vmatpush1.xpose.msra.mxu0 0.0
    %1377 = vmatprep.subr.mxu0 0.0
    %1378 = vmatpush1.xpose.msra.mxu0 0.0
    %1379 = vmatprep.subr.mxu0 0.0
    %1380 = vmatpush1.xpose.msra.mxu0 0.0
    %1381 = vmatprep.subr.mxu0 0.0
    %1382 = vmatpush1.xpose.msra.mxu0 0.0
    %1383 = vmatprep.subr.mxu0 0.0
    %1384 = vmatpush1.xpose.msra.mxu0 0.0
    %1385 = vmatprep.mubr.f32.mxu0 0.0
    %1386 = vmatmul.mubr.f32.gmra.mrb[0].mxu0 %v1317
    %v1387 = vpop.f32.mrb[0].mxu0
    %v1388 = vadd.f32 0.0, %v1387
    %v1389 = vpop.f32.mrb[0].mxu0
    %1390 = vdwg.mxu0
    %v1391 = vsel %vm235, %v1388, -inf
    %1392 = vmax.xlane.f32.xlu0 %v1391
    %v1393 = vpop.xlane.xlu0 %1392
    %v1394 = vsub.f32 %v1388, %v1393
    %v1395 = vmul.f32 %v1394, 1.442695
    %v1396 = vpow.pop %v1395
    %v1397 = vsel %vm235, %v1396, 0.0
    %1398 = vadd.xlane.f32.xlu0 %v1397
    %v1399 = vpop.xlane.xlu0 %1398
    %v1400 = vrcp.pop %v1399
    %v1401 = vmul.f32 %v1396, %v1400
    %1402 = vrot.lane.b32.xlu0 %v149, 36
    %v1403 = vpop.permute.xlu0 %1402
    %v1406 = vsel %vm235, %v1401, 0
    %1408 = vmatprep.subr.mxu0 0.0
    %1409 = vmatpush1.msra.mxu0 %v1403
    %1410 = vmatprep.subr.mxu0 0.0
    %1411 = vmatpush1.msra.mxu0 0.0
    %1412 = vmatprep.subr.mxu0 0.0
    %1413 = vmatpush1.msra.mxu0 0.0
    %1414 = vmatprep.subr.mxu0 0.0
    %1415 = vmatpush1.msra.mxu0 0.0
    %1416 = vmatprep.subr.mxu0 0.0
    %1417 = vmatpush1.msra.mxu0 0.0
    %1418 = vmatprep.subr.mxu0 0.0
    %1419 = vmatpush1.msra.mxu0 0.0
    %1420 = vmatprep.subr.mxu0 0.0
    %1421 = vmatpush1.msra.mxu0 0.0
    %1422 = vmatprep.subr.mxu0 0.0
    %1423 = vmatpush1.msra.mxu0 0.0
    %1424 = vmatprep.subr.mxu0 0.0
    %1425 = vmatpush1.msra.mxu0 0.0
    %1426 = vmatprep.subr.mxu0 0.0
    %1427 = vmatpush1.msra.mxu0 0.0
    %1428 = vmatprep.subr.mxu0 0.0
    %1429 = vmatpush1.msra.mxu0 0.0
    %1430 = vmatprep.subr.mxu0 0.0
    %1431 = vmatpush1.msra.mxu0 0.0
    %1432 = vmatprep.subr.mxu0 0.0
    %1433 = vmatpush1.msra.mxu0 0.0
    %1434 = vmatprep.subr.mxu0 0.0
    %1435 = vmatpush1.msra.mxu0 0.0
    %1436 = vmatprep.subr.mxu0 0.0
    %1437 = vmatpush1.msra.mxu0 0.0
    %1438 = vmatprep.subr.mxu0 0.0
    %1439 = vmatpush1.msra.mxu0 0.0
    %1440 = vmatprep.subr.mxu0 0.0
    %1441 = vmatpush1.msra.mxu0 0.0
    %1442 = vmatprep.subr.mxu0 0.0
    %1443 = vmatpush1.msra.mxu0 0.0
    %1444 = vmatprep.subr.mxu0 0.0
    %1445 = vmatpush1.msra.mxu0 0.0
    %1446 = vmatprep.subr.mxu0 0.0
    %1447 = vmatpush1.msra.mxu0 0.0
    %1448 = vmatprep.subr.mxu0 0.0
    %1449 = vmatpush1.msra.mxu0 0.0
    %1450 = vmatprep.subr.mxu0 0.0
    %1451 = vmatpush1.msra.mxu0 0.0
    %1452 = vmatprep.subr.mxu0 0.0
    %1453 = vmatpush1.msra.mxu0 0.0
    %1454 = vmatprep.subr.mxu0 0.0
    %1455 = vmatpush1.msra.mxu0 0.0
    %1456 = vmatprep.subr.mxu0 0.0
    %1457 = vmatpush1.msra.mxu0 0.0
    %1458 = vmatprep.subr.mxu0 0.0
    %1459 = vmatpush1.msra.mxu0 0.0
    %1460 = vmatprep.subr.mxu0 0.0
    %1461 = vmatpush1.msra.mxu0 0.0
    %1462 = vmatprep.subr.mxu0 0.0
    %1463 = vmatpush1.msra.mxu0 0.0
    %1464 = vmatprep.subr.mxu0 0.0
    %1465 = vmatpush1.msra.mxu0 0.0
    %1466 = vmatprep.subr.mxu0 0.0
    %1467 = vmatpush1.msra.mxu0 0.0
    %1468 = vmatprep.subr.mxu0 0.0
    %1469 = vmatpush1.msra.mxu0 0.0
    %1470 = vmatprep.subr.mxu0 0.0
    %1471 = vmatpush1.msra.mxu0 0.0
    %1472 = vmatprep.mubr.f32.mxu0 0.0
    %1473 = vmatmul.mubr.f32.gmra.mrb[0].mxu0 %v1406
    %v1474 = vpop.f32.mrb[0].mxu0
    %v1475 = vadd.f32 0.0, %v1474
    %v1476 = vpop.f32.mrb[0].mxu0
    %1477 = vdwg.mxu0
    %1479 = vrot.lane.b32.xlu0 %v485, 4
    %v1480 = vpop.permute.xlu0 %1479
    %1483 = vrot.lane.b32.xlu0 %v650, 8
    %v1484 = vpop.permute.xlu0 %1483
    %1487 = vrot.lane.b32.xlu0 %v815, 12
    %v1488 = vpop.permute.xlu0 %1487
    %1491 = vrot.lane.b32.xlu0 %v980, 16
    %v1492 = vpop.permute.xlu0 %1491
    %1495 = vrot.lane.b32.xlu0 %v1145, 20
    %v1496 = vpop.permute.xlu0 %1495
    %1499 = vrot.lane.b32.xlu0 %v1310, 24
    %v1500 = vpop.permute.xlu0 %1499
    %1503 = vrot.lane.b32.xlu0 %v1475, 28
    %v1504 = vpop.permute.xlu0 %1503
    %v1506 = vsel %vm160, %v320, %v1480
    %v1507 = vsel %vm235, %v1506, %v1484
    %vm1508 = vcmask 97280
    %v1509 = vsel %vm1508, %v1507, %v1488
    %vm1510 = vcmask 130048
    %v1511 = vsel %vm1510, %v1509, %v1492
    %vm1512 = vcmask 162816
    %v1513 = vsel %vm1512, %v1511, %v1496
    %vm1514 = vcmask 195584
    %v1515 = vsel %vm1514, %v1513, %v1500
    %vm1516 = vcmask 228352
    %v1517 = vsel %vm1516, %v1515, %v1504
    %1519 = vrot.lane.b32.xlu0 %v154, 96
    %v1520 = vpop.permute.xlu0 %1519
    %v1521 = vsel %vm160, %v154, 0
    %v1523 = vsel %vm160, %v1520, 0
    %1525 = vmatprep.subr.mxu0 0.0
    %1526 = vmatpush1.xpose.msra.mxu0 %v1523
    %1527 = vmatprep.subr.mxu0 0.0
    %1528 = vmatpush1.xpose.msra.mxu0 0.0
    %1529 = vmatprep.subr.mxu0 0.0
    %1530 = vmatpush1.xpose.msra.mxu0 0.0
    %1531 = vmatprep.subr.mxu0 0.0
    %1532 = vmatpush1.xpose.msra.mxu0 0.0
    %1533 = vmatprep.subr.mxu0 0.0
    %1534 = vmatpush1.xpose.msra.mxu0 0.0
    %1535 = vmatprep.subr.mxu0 0.0
    %1536 = vmatpush1.xpose.msra.mxu0 0.0
    %1537 = vmatprep.subr.mxu0 0.0
    %1538 = vmatpush1.xpose.msra.mxu0 0.0
    %1539 = vmatprep.subr.mxu0 0.0
    %1540 = vmatpush1.xpose.msra.mxu0 0.0
    %1541 = vmatprep.subr.mxu0 0.0
    %1542 = vmatpush1.xpose.msra.mxu0 0.0
    %1543 = vmatprep.subr.mxu0 0.0
    %1544 = vmatpush1.xpose.msra.mxu0 0.0
    %1545 = vmatprep.subr.mxu0 0.0
    %1546 = vmatpush1.xpose.msra.mxu0 0.0
    %1547 = vmatprep.subr.mxu0 0.0
    %1548 = vmatpush1.xpose.msra.mxu0 0.0
    %1549 = vmatprep.subr.mxu0 0.0
    %1550 = vmatpush1.xpose.msra.mxu0 0.0
    %1551 = vmatprep.subr.mxu0 0.0
    %1552 = vmatpush1.xpose.msra.mxu0 0.0
    %1553 = vmatprep.subr.mxu0 0.0
    %1554 = vmatpush1.xpose.msra.mxu0 0.0
    %1555 = vmatprep.subr.mxu0 0.0
    %1556 = vmatpush1.xpose.msra.mxu0 0.0
    %1557 = vmatprep.subr.mxu0 0.0
    %1558 = vmatpush1.xpose.msra.mxu0 0.0
    %1559 = vmatprep.subr.mxu0 0.0
    %1560 = vmatpush1.xpose.msra.mxu0 0.0
    %1561 = vmatprep.subr.mxu0 0.0
    %1562 = vmatpush1.xpose.msra.mxu0 0.0
    %1563 = vmatprep.subr.mxu0 0.0
    %1564 = vmatpush1.xpose.msra.mxu0 0.0
    %1565 = vmatprep.subr.mxu0 0.0
    %1566 = vmatpush1.xpose.msra.mxu0 0.0
    %1567 = vmatprep.subr.mxu0 0.0
    %1568 = vmatpush1.xpose.msra.mxu0 0.0
    %1569 = vmatprep.subr.mxu0 0.0
    %1570 = vmatpush1.xpose.msra.mxu0 0.0
    %1571 = vmatprep.subr.mxu0 0.0
    %1572 = vmatpush1.xpose.msra.mxu0 0.0
    %1573 = vmatprep.subr.mxu0 0.0
    %1574 = vmatpush1.xpose.msra.mxu0 0.0
    %1575 = vmatprep.subr.mxu0 0.0
    %1576 = vmatpush1.xpose.msra.mxu0 0.0
    %1577 = vmatprep.subr.mxu0 0.0
    %1578 = vmatpush1.xpose.msra.mxu0 0.0
    %1579 = vmatprep.subr.mxu0 0.0
    %1580 = vmatpush1.xpose.msra.mxu0 0.0
    %1581 = vmatprep.subr.mxu0 0.0
    %1582 = vmatpush1.xpose.msra.mxu0 0.0
    %1583 = vmatprep.subr.mxu0 0.0
    %1584 = vmatpush1.xpose.msra.mxu0 0.0
    %1585 = vmatprep.subr.mxu0 0.0
    %1586 = vmatpush1.xpose.msra.mxu0 0.0
    %1587 = vmatprep.subr.mxu0 0.0
    %1588 = vmatpush1.xpose.msra.mxu0 0.0
    %1589 = vmatprep.mubr.f32.mxu0 0.0
    %1590 = vmatmul.mubr.f32.gmra.mrb[0].mxu0 %v1521
    %v1591 = vpop.f32.mrb[0].mxu0
    %v1592 = vadd.f32 0.0, %v1591
    %v1593 = vpop.f32.mrb[0].mxu0
    %1594 = vdwg.mxu0
    %v1595 = vsel %vm235, %v1592, -inf
    %1596 = vmax.xlane.f32.xlu0 %v1595
    %v1597 = vpop.xlane.xlu0 %1596
    %v1598 = vsub.f32 %v1592, %v1597
    %v1599 = vmul.f32 %v1598, 1.442695
    %v1600 = vpow.pop %v1599
    %v1601 = vsel %vm235, %v1600, 0.0
    %1602 = vadd.xlane.f32.xlu0 %v1601
    %v1603 = vpop.xlane.xlu0 %1602
    %v1604 = vrcp.pop %v1603
    %v1605 = vmul.f32 %v1600, %v1604
    %1606 = vrot.lane.b32.xlu0 %v154, 64
    %v1607 = vpop.permute.xlu0 %1606
    %v1610 = vsel %vm235, %v1605, 0
    %1612 = vmatprep.subr.mxu0 0.0
    %1613 = vmatpush1.msra.mxu0 %v1607
    %1614 = vmatprep.subr.mxu0 0.0
    %1615 = vmatpush1.msra.mxu0 0.0
    %1616 = vmatprep.subr.mxu0 0.0
    %1617 = vmatpush1.msra.mxu0 0.0
    %1618 = vmatprep.subr.mxu0 0.0
    %1619 = vmatpush1.msra.mxu0 0.0
    %1620 = vmatprep.subr.mxu0 0.0
    %1621 = vmatpush1.msra.mxu0 0.0
    %1622 = vmatprep.subr.mxu0 0.0
    %1623 = vmatpush1.msra.mxu0 0.0
    %1624 = vmatprep.subr.mxu0 0.0
    %1625 = vmatpush1.msra.mxu0 0.0
    %1626 = vmatprep.subr.mxu0 0.0
    %1627 = vmatpush1.msra.mxu0 0.0
    %1628 = vmatprep.subr.mxu0 0.0
    %1629 = vmatpush1.msra.mxu0 0.0
    %1630 = vmatprep.subr.mxu0 0.0
    %1631 = vmatpush1.msra.mxu0 0.0
    %1632 = vmatprep.subr.mxu0 0.0
    %1633 = vmatpush1.msra.mxu0 0.0
    %1634 = vmatprep.subr.mxu0 0.0
    %1635 = vmatpush1.msra.mxu0 0.0
    %1636 = vmatprep.subr.mxu0 0.0
    %1637 = vmatpush1.msra.mxu0 0.0
    %1638 = vmatprep.subr.mxu0 0.0
    %1639 = vmatpush1.msra.mxu0 0.0
    %1640 = vmatprep.subr.mxu0 0.0
    %1641 = vmatpush1.msra.mxu0 0.0
    %1642 = vmatprep.subr.mxu0 0.0
    %1643 = vmatpush1.msra.mxu0 0.0
    %1644 = vmatprep.subr.mxu0 0.0
    %1645 = vmatpush1.msra.mxu0 0.0
    %1646 = vmatprep.subr.mxu0 0.0
    %1647 = vmatpush1.msra.mxu0 0.0
    %1648 = vmatprep.subr.mxu0 0.0
    %1649 = vmatpush1.msra.mxu0 0.0
    %1650 = vmatprep.subr.mxu0 0.0
    %1651 = vmatpush1.msra.mxu0 0.0
    %1652 = vmatprep.subr.mxu0 0.0
    %1653 = vmatpush1.msra.mxu0 0.0
    %1654 = vmatprep.subr.mxu0 0.0
    %1655 = vmatpush1.msra.mxu0 0.0
    %1656 = vmatprep.subr.mxu0 0.0
    %1657 = vmatpush1.msra.mxu0 0.0
    %1658 = vmatprep.subr.mxu0 0.0
    %1659 = vmatpush1.msra.mxu0 0.0
    %1660 = vmatprep.subr.mxu0 0.0
    %1661 = vmatpush1.msra.mxu0 0.0
    %1662 = vmatprep.subr.mxu0 0.0
    %1663 = vmatpush1.msra.mxu0 0.0
    %1664 = vmatprep.subr.mxu0 0.0
    %1665 = vmatpush1.msra.mxu0 0.0
    %1666 = vmatprep.subr.mxu0 0.0
    %1667 = vmatpush1.msra.mxu0 0.0
    %1668 = vmatprep.subr.mxu0 0.0
    %1669 = vmatpush1.msra.mxu0 0.0
    %1670 = vmatprep.subr.mxu0 0.0
    %1671 = vmatpush1.msra.mxu0 0.0
    %1672 = vmatprep.subr.mxu0 0.0
    %1673 = vmatpush1.msra.mxu0 0.0
    %1674 = vmatprep.subr.mxu0 0.0
    %1675 = vmatpush1.msra.mxu0 0.0
    %1676 = vmatprep.mubr.f32.mxu0 0.0
    %1677 = vmatmul.mubr.f32.gmra.mrb[0].mxu0 %v1610
    %v1678 = vpop.f32.mrb[0].mxu0
    %v1679 = vadd.f32 0.0, %v1678
    %v1680 = vpop.f32.mrb[0].mxu0
    %1681 = vdwg.mxu0
    %1682 = vrot.lane.b32.xlu0 %v154, 124
    %v1683 = vpop.permute.xlu0 %1682
    %1684 = vrot.lane.b32.xlu0 %v154, 92
    %v1685 = vpop.permute.xlu0 %1684
    %v1686 = vsel %vm160, %v1683, 0
    %v1688 = vsel %vm160, %v1685, 0
    %1690 = vmatprep.subr.mxu0 0.0
    %1691 = vmatpush1.xpose.msra.mxu0 %v1688
    %1692 = vmatprep.subr.mxu0 0.0
    %1693 = vmatpush1.xpose.msra.mxu0 0.0
    %1694 = vmatprep.subr.mxu0 0.0
    %1695 = vmatpush1.xpose.msra.mxu0 0.0
    %1696 = vmatprep.subr.mxu0 0.0
    %1697 = vmatpush1.xpose.msra.mxu0 0.0
    %1698 = vmatprep.subr.mxu0 0.0
    %1699 = vmatpush1.xpose.msra.mxu0 0.0
    %1700 = vmatprep.subr.mxu0 0.0
    %1701 = vmatpush1.xpose.msra.mxu0 0.0
    %1702 = vmatprep.subr.mxu0 0.0
    %1703 = vmatpush1.xpose.msra.mxu0 0.0
    %1704 = vmatprep.subr.mxu0 0.0
    %1705 = vmatpush1.xpose.msra.mxu0 0.0
    %1706 = vmatprep.subr.mxu0 0.0
    %1707 = vmatpush1.xpose.msra.mxu0 0.0
    %1708 = vmatprep.subr.mxu0 0.0
    %1709 = vmatpush1.xpose.msra.mxu0 0.0
    %1710 = vmatprep.subr.mxu0 0.0
    %1711 = vmatpush1.xpose.msra.mxu0 0.0
    %1712 = vmatprep.subr.mxu0 0.0
    %1713 = vmatpush1.xpose.msra.mxu0 0.0
    %1714 = vmatprep.subr.mxu0 0.0
    %1715 = vmatpush1.xpose.msra.mxu0 0.0
    %1716 = vmatprep.subr.mxu0 0.0
    %1717 = vmatpush1.xpose.msra.mxu0 0.0
    %1718 = vmatprep.subr.mxu0 0.0
    %1719 = vmatpush1.xpose.msra.mxu0 0.0
    %1720 = vmatprep.subr.mxu0 0.0
    %1721 = vmatpush1.xpose.msra.mxu0 0.0
    %1722 = vmatprep.subr.mxu0 0.0
    %1723 = vmatpush1.xpose.msra.mxu0 0.0
    %1724 = vmatprep.subr.mxu0 0.0
    %1725 = vmatpush1.xpose.msra.mxu0 0.0
    %1726 = vmatprep.subr.mxu0 0.0
    %1727 = vmatpush1.xpose.msra.mxu0 0.0
    %1728 = vmatprep.subr.mxu0 0.0
    %1729 = vmatpush1.xpose.msra.mxu0 0.0
    %1730 = vmatprep.subr.mxu0 0.0
    %1731 = vmatpush1.xpose.msra.mxu0 0.0
    %1732 = vmatprep.subr.mxu0 0.0
    %1733 = vmatpush1.xpose.msra.mxu0 0.0
    %1734 = vmatprep.subr.mxu0 0.0
    %1735 = vmatpush1.xpose.msra.mxu0 0.0
    %1736 = vmatprep.subr.mxu0 0.0
    %1737 = vmatpush1.xpose.msra.mxu0 0.0
    %1738 = vmatprep.subr.mxu0 0.0
    %1739 = vmatpush1.xpose.msra.mxu0 0.0
    %1740 = vmatprep.subr.mxu0 0.0
    %1741 = vmatpush1.xpose.msra.mxu0 0.0
    %1742 = vmatprep.subr.mxu0 0.0
    %1743 = vmatpush1.xpose.msra.mxu0 0.0
    %1744 = vmatprep.subr.mxu0 0.0
    %1745 = vmatpush1.xpose.msra.mxu0 0.0
    %1746 = vmatprep.subr.mxu0 0.0
    %1747 = vmatpush1.xpose.msra.mxu0 0.0
    %1748 = vmatprep.subr.mxu0 0.0
    %1749 = vmatpush1.xpose.msra.mxu0 0.0
    %1750 = vmatprep.subr.mxu0 0.0
    %1751 = vmatpush1.xpose.msra.mxu0 0.0
    %1752 = vmatprep.subr.mxu0 0.0
    %1753 = vmatpush1.xpose.msra.mxu0 0.0
    %1754 = vmatprep.mubr.f32.mxu0 0.0
    %1755 = vmatmul.mubr.f32.gmra.mrb[0].mxu0 %v1686
    %v1756 = vpop.f32.mrb[0].mxu0
    %v1757 = vadd.f32 0.0, %v1756
    %v1758 = vpop.f32.mrb[0].mxu0
    %1759 = vdwg.mxu0
    %v1760 = vsel %vm235, %v1757, -inf
    %1761 = vmax.xlane.f32.xlu0 %v1760
    %v1762 = vpop.xlane.xlu0 %1761
    %v1763 = vsub.f32 %v1757, %v1762
    %v1764 = vmul.f32 %v1763, 1.442695
    %v1765 = vpow.pop %v1764
    %v1766 = vsel %vm235, %v1765, 0.0
    %1767 = vadd.xlane.f32.xlu0 %v1766
    %v1768 = vpop.xlane.xlu0 %1767
    %v1769 = vrcp.pop %v1768
    %v1770 = vmul.f32 %v1765, %v1769
    %1771 = vrot.lane.b32.xlu0 %v154, 60
    %v1772 = vpop.permute.xlu0 %1771
    %v1775 = vsel %vm235, %v1770, 0
    %1777 = vmatprep.subr.mxu0 0.0
    %1778 = vmatpush1.msra.mxu0 %v1772
    %1779 = vmatprep.subr.mxu0 0.0
    %1780 = vmatpush1.msra.mxu0 0.0
    %1781 = vmatprep.subr.mxu0 0.0
    %1782 = vmatpush1.msra.mxu0 0.0
    %1783 = vmatprep.subr.mxu0 0.0
    %1784 = vmatpush1.msra.mxu0 0.0
    %1785 = vmatprep.subr.mxu0 0.0
    %1786 = vmatpush1.msra.mxu0 0.0
    %1787 = vmatprep.subr.mxu0 0.0
    %1788 = vmatpush1.msra.mxu0 0.0
    %1789 = vmatprep.subr.mxu0 0.0
    %1790 = vmatpush1.msra.mxu0 0.0
    %1791 = vmatprep.subr.mxu0 0.0
    %1792 = vmatpush1.msra.mxu0 0.0
    %1793 = vmatprep.subr.mxu0 0.0
    %1794 = vmatpush1.msra.mxu0 0.0
    %1795 = vmatprep.subr.mxu0 0.0
    %1796 = vmatpush1.msra.mxu0 0.0
    %1797 = vmatprep.subr.mxu0 0.0
    %1798 = vmatpush1.msra.mxu0 0.0
    %1799 = vmatprep.subr.mxu0 0.0
    %1800 = vmatpush1.msra.mxu0 0.0
    %1801 = vmatprep.subr.mxu0 0.0
    %1802 = vmatpush1.msra.mxu0 0.0
    %1803 = vmatprep.subr.mxu0 0.0
    %1804 = vmatpush1.msra.mxu0 0.0
    %1805 = vmatprep.subr.mxu0 0.0
    %1806 = vmatpush1.msra.mxu0 0.0
    %1807 = vmatprep.subr.mxu0 0.0
    %1808 = vmatpush1.msra.mxu0 0.0
    %1809 = vmatprep.subr.mxu0 0.0
    %1810 = vmatpush1.msra.mxu0 0.0
    %1811 = vmatprep.subr.mxu0 0.0
    %1812 = vmatpush1.msra.mxu0 0.0
    %1813 = vmatprep.subr.mxu0 0.0
    %1814 = vmatpush1.msra.mxu0 0.0
    %1815 = vmatprep.subr.mxu0 0.0
    %1816 = vmatpush1.msra.mxu0 0.0
    %1817 = vmatprep.subr.mxu0 0.0
    %1818 = vmatpush1.msra.mxu0 0.0
    %1819 = vmatprep.subr.mxu0 0.0
    %1820 = vmatpush1.msra.mxu0 0.0
    %1821 = vmatprep.subr.mxu0 0.0
    %1822 = vmatpush1.msra.mxu0 0.0
    %1823 = vmatprep.subr.mxu0 0.0
    %1824 = vmatpush1.msra.mxu0 0.0
    %1825 = vmatprep.subr.mxu0 0.0
    %1826 = vmatpush1.msra.mxu0 0.0
    %1827 = vmatprep.subr.mxu0 0.0
    %1828 = vmatpush1.msra.mxu0 0.0
    %1829 = vmatprep.subr.mxu0 0.0
    %1830 = vmatpush1.msra.mxu0 0.0
    %1831 = vmatprep.subr.mxu0 0.0
    %1832 = vmatpush1.msra.mxu0 0.0
    %1833 = vmatprep.subr.mxu0 0.0
    %1834 = vmatpush1.msra.mxu0 0.0
    %1835 = vmatprep.subr.mxu0 0.0
    %1836 = vmatpush1.msra.mxu0 0.0
    %1837 = vmatprep.subr.mxu0 0.0
    %1838 = vmatpush1.msra.mxu0 0.0
    %1839 = vmatprep.subr.mxu0 0.0
    %1840 = vmatpush1.msra.mxu0 0.0
    %1841 = vmatprep.mubr.f32.mxu0 0.0
    %1842 = vmatmul.mubr.f32.gmra.mrb[0].mxu0 %v1775
    %v1843 = vpop.f32.mrb[0].mxu0
    %v1844 = vadd.f32 0.0, %v1843
    %v1845 = vpop.f32.mrb[0].mxu0
    %1846 = vdwg.mxu0
    %1847 = vrot.lane.b32.xlu0 %v154, 120
    %v1848 = vpop.permute.xlu0 %1847
    %1849 = vrot.lane.b32.xlu0 %v154, 88
    %v1850 = vpop.permute.xlu0 %1849
    %v1851 = vsel %vm160, %v1848, 0
    %v1853 = vsel %vm160, %v1850, 0
    %1855 = vmatprep.subr.mxu0 0.0
    %1856 = vmatpush1.xpose.msra.mxu0 %v1853
    %1857 = vmatprep.subr.mxu0 0.0
    %1858 = vmatpush1.xpose.msra.mxu0 0.0
    %1859 = vmatprep.subr.mxu0 0.0
    %1860 = vmatpush1.xpose.msra.mxu0 0.0
    %1861 = vmatprep.subr.mxu0 0.0
    %1862 = vmatpush1.xpose.msra.mxu0 0.0
    %1863 = vmatprep.subr.mxu0 0.0
    %1864 = vmatpush1.xpose.msra.mxu0 0.0
    %1865 = vmatprep.subr.mxu0 0.0
    %1866 = vmatpush1.xpose.msra.mxu0 0.0
    %1867 = vmatprep.subr.mxu0 0.0
    %1868 = vmatpush1.xpose.msra.mxu0 0.0
    %1869 = vmatprep.subr.mxu0 0.0
    %1870 = vmatpush1.xpose.msra.mxu0 0.0
    %1871 = vmatprep.subr.mxu0 0.0
    %1872 = vmatpush1.xpose.msra.mxu0 0.0
    %1873 = vmatprep.subr.mxu0 0.0
    %1874 = vmatpush1.xpose.msra.mxu0 0.0
    %1875 = vmatprep.subr.mxu0 0.0
    %1876 = vmatpush1.xpose.msra.mxu0 0.0
    %1877 = vmatprep.subr.mxu0 0.0
    %1878 = vmatpush1.xpose.msra.mxu0 0.0
    %1879 = vmatprep.subr.mxu0 0.0
    %1880 = vmatpush1.xpose.msra.mxu0 0.0
    %1881 = vmatprep.subr.mxu0 0.0
    %1882 = vmatpush1.xpose.msra.mxu0 0.0
    %1883 = vmatprep.subr.mxu0 0.0
    %1884 = vmatpush1.xpose.msra.mxu0 0.0
    %1885 = vmatprep.subr.mxu0 0.0
    %1886 = vmatpush1.xpose.msra.mxu0 0.0
    %1887 = vmatprep.subr.mxu0 0.0
    %1888 = vmatpush1.xpose.msra.mxu0 0.0
    %1889 = vmatprep.subr.mxu0 0.0
    %1890 = vmatpush1.xpose.msra.mxu0 0.0
    %1891 = vmatprep.subr.mxu0 0.0
    %1892 = vmatpush1.xpose.msra.mxu0 0.0
    %1893 = vmatprep.subr.mxu0 0.0
    %1894 = vmatpush1.xpose.msra.mxu0 0.0
    %1895 = vmatprep.subr.mxu0 0.0
    %1896 = vmatpush1.xpose.msra.mxu0 0.0
    %1897 = vmatprep.subr.mxu0 0.0
    %1898 = vmatpush1.xpose.msra.mxu0 0.0
    %1899 = vmatprep.subr.mxu0 0.0
    %1900 = vmatpush1.xpose.msra.mxu0 0.0
    %1901 = vmatprep.subr.mxu0 0.0
    %1902 = vmatpush1.xpose.msra.mxu0 0.0
    %1903 = vmatprep.subr.mxu0 0.0
    %1904 = vmatpush1.xpose.msra.mxu0 0.0
    %1905 = vmatprep.subr.mxu0 0.0
    %1906 = vmatpush1.xpose.msra.mxu0 0.0
    %1907 = vmatprep.subr.mxu0 0.0
    %1908 = vmatpush1.xpose.msra.mxu0 0.0
    %1909 = vmatprep.subr.mxu0 0.0
    %1910 = vmatpush1.xpose.msra.mxu0 0.0
    %1911 = vmatprep.subr.mxu0 0.0
    %1912 = vmatpush1.xpose.msra.mxu0 0.0
    %1913 = vmatprep.subr.mxu0 0.0
    %1914 = vmatpush1.xpose.msra.mxu0 0.0
    %1915 = vmatprep.subr.mxu0 0.0
    %1916 = vmatpush1.xpose.msra.mxu0 0.0
    %1917 = vmatprep.subr.mxu0 0.0
    %1918 = vmatpush1.xpose.msra.mxu0 0.0
    %1919 = vmatprep.mubr.f32.mxu0 0.0
    %1920 = vmatmul.mubr.f32.gmra.mrb[0].mxu0 %v1851
    %v1921 = vpop.f32.mrb[0].mxu0
    %v1922 = vadd.f32 0.0, %v1921
    %v1923 = vpop.f32.mrb[0].mxu0
    %1924 = vdwg.mxu0
    %v1925 = vsel %vm235, %v1922, -inf
    %1926 = vmax.xlane.f32.xlu0 %v1925
    %v1927 = vpop.xlane.xlu0 %1926
    %v1928 = vsub.f32 %v1922, %v1927
    %v1929 = vmul.f32 %v1928, 1.442695
    %v1930 = vpow.pop %v1929
    %v1931 = vsel %vm235, %v1930, 0.0
    %1932 = vadd.xlane.f32.xlu0 %v1931
    %v1933 = vpop.xlane.xlu0 %1932
    %v1934 = vrcp.pop %v1933
    %v1935 = vmul.f32 %v1930, %v1934
    %1936 = vrot.lane.b32.xlu0 %v154, 56
    %v1937 = vpop.permute.xlu0 %1936
    %v1940 = vsel %vm235, %v1935, 0
    %1942 = vmatprep.subr.mxu0 0.0
    %1943 = vmatpush1.msra.mxu0 %v1937
    %1944 = vmatprep.subr.mxu0 0.0
    %1945 = vmatpush1.msra.mxu0 0.0
    %1946 = vmatprep.subr.mxu0 0.0
    %1947 = vmatpush1.msra.mxu0 0.0
    %1948 = vmatprep.subr.mxu0 0.0
    %1949 = vmatpush1.msra.mxu0 0.0
    %1950 = vmatprep.subr.mxu0 0.0
    %1951 = vmatpush1.msra.mxu0 0.0
    %1952 = vmatprep.subr.mxu0 0.0
    %1953 = vmatpush1.msra.mxu0 0.0
    %1954 = vmatprep.subr.mxu0 0.0
    %1955 = vmatpush1.msra.mxu0 0.0
    %1956 = vmatprep.subr.mxu0 0.0
    %1957 = vmatpush1.msra.mxu0 0.0
    %1958 = vmatprep.subr.mxu0 0.0
    %1959 = vmatpush1.msra.mxu0 0.0
    %1960 = vmatprep.subr.mxu0 0.0
    %1961 = vmatpush1.msra.mxu0 0.0
    %1962 = vmatprep.subr.mxu0 0.0
    %1963 = vmatpush1.msra.mxu0 0.0
    %1964 = vmatprep.subr.mxu0 0.0
    %1965 = vmatpush1.msra.mxu0 0.0
    %1966 = vmatprep.subr.mxu0 0.0
    %1967 = vmatpush1.msra.mxu0 0.0
    %1968 = vmatprep.subr.mxu0 0.0
    %1969 = vmatpush1.msra.mxu0 0.0
    %1970 = vmatprep.subr.mxu0 0.0
    %1971 = vmatpush1.msra.mxu0 0.0
    %1972 = vmatprep.subr.mxu0 0.0
    %1973 = vmatpush1.msra.mxu0 0.0
    %1974 = vmatprep.subr.mxu0 0.0
    %1975 = vmatpush1.msra.mxu0 0.0
    %1976 = vmatprep.subr.mxu0 0.0
    %1977 = vmatpush1.msra.mxu0 0.0
    %1978 = vmatprep.subr.mxu0 0.0
    %1979 = vmatpush1.msra.mxu0 0.0
    %1980 = vmatprep.subr.mxu0 0.0
    %1981 = vmatpush1.msra.mxu0 0.0
    %1982 = vmatprep.subr.mxu0 0.0
    %1983 = vmatpush1.msra.mxu0 0.0
    %1984 = vmatprep.subr.mxu0 0.0
    %1985 = vmatpush1.msra.mxu0 0.0
    %1986 = vmatprep.subr.mxu0 0.0
    %1987 = vmatpush1.msra.mxu0 0.0
    %1988 = vmatprep.subr.mxu0 0.0
    %1989 = vmatpush1.msra.mxu0 0.0
    %1990 = vmatprep.subr.mxu0 0.0
    %1991 = vmatpush1.msra.mxu0 0.0
    %1992 = vmatprep.subr.mxu0 0.0
    %1993 = vmatpush1.msra.mxu0 0.0
    %1994 = vmatprep.subr.mxu0 0.0
    %1995 = vmatpush1.msra.mxu0 0.0
    %1996 = vmatprep.subr.mxu0 0.0
    %1997 = vmatpush1.msra.mxu0 0.0
    %1998 = vmatprep.subr.mxu0 0.0
    %1999 = vmatpush1.msra.mxu0 0.0
    %2000 = vmatprep.subr.mxu0 0.0
    %2001 = vmatpush1.msra.mxu0 0.0
    %2002 = vmatprep.subr.mxu0 0.0
    %2003 = vmatpush1.msra.mxu0 0.0
    %2004 = vmatprep.subr.mxu0 0.0
    %2005 = vmatpush1.msra.mxu0 0.0
    %2006 = vmatprep.mubr.f32.mxu0 0.0
    %2007 = vmatmul.mubr.f32.gmra.mrb[0].mxu0 %v1940
    %v2008 = vpop.f32.mrb[0].mxu0
    %v2009 = vadd.f32 0.0, %v2008
    %v2010 = vpop.f32.mrb[0].mxu0
    %2011 = vdwg.mxu0
    %2012 = vrot.lane.b32.xlu0 %v154, 116
    %v2013 = vpop.permute.xlu0 %2012
    %2014 = vrot.lane.b32.xlu0 %v154, 84
    %v2015 = vpop.permute.xlu0 %2014
    %v2016 = vsel %vm160, %v2013, 0
    %v2018 = vsel %vm160, %v2015, 0
    %2020 = vmatprep.subr.mxu0 0.0
    %2021 = vmatpush1.xpose.msra.mxu0 %v2018
    %2022 = vmatprep.subr.mxu0 0.0
    %2023 = vmatpush1.xpose.msra.mxu0 0.0
    %2024 = vmatprep.subr.mxu0 0.0
    %2025 = vmatpush1.xpose.msra.mxu0 0.0
    %2026 = vmatprep.subr.mxu0 0.0
    %2027 = vmatpush1.xpose.msra.mxu0 0.0
    %2028 = vmatprep.subr.mxu0 0.0
    %2029 = vmatpush1.xpose.msra.mxu0 0.0
    %2030 = vmatprep.subr.mxu0 0.0
    %2031 = vmatpush1.xpose.msra.mxu0 0.0
    %2032 = vmatprep.subr.mxu0 0.0
    %2033 = vmatpush1.xpose.msra.mxu0 0.0
    %2034 = vmatprep.subr.mxu0 0.0
    %2035 = vmatpush1.xpose.msra.mxu0 0.0
    %2036 = vmatprep.subr.mxu0 0.0
    %2037 = vmatpush1.xpose.msra.mxu0 0.0
    %2038 = vmatprep.subr.mxu0 0.0
    %2039 = vmatpush1.xpose.msra.mxu0 0.0
    %2040 = vmatprep.subr.mxu0 0.0
    %2041 = vmatpush1.xpose.msra.mxu0 0.0
    %2042 = vmatprep.subr.mxu0 0.0
    %2043 = vmatpush1.xpose.msra.mxu0 0.0
    %2044 = vmatprep.subr.mxu0 0.0
    %2045 = vmatpush1.xpose.msra.mxu0 0.0
    %2046 = vmatprep.subr.mxu0 0.0
    %2047 = vmatpush1.xpose.msra.mxu0 0.0
    %2048 = vmatprep.subr.mxu0 0.0
    %2049 = vmatpush1.xpose.msra.mxu0 0.0
    %2050 = vmatprep.subr.mxu0 0.0
    %2051 = vmatpush1.xpose.msra.mxu0 0.0
    %2052 = vmatprep.subr.mxu0 0.0
    %2053 = vmatpush1.xpose.msra.mxu0 0.0
    %2054 = vmatprep.subr.mxu0 0.0
    %2055 = vmatpush1.xpose.msra.mxu0 0.0
    %2056 = vmatprep.subr.mxu0 0.0
    %2057 = vmatpush1.xpose.msra.mxu0 0.0
    %2058 = vmatprep.subr.mxu0 0.0
    %2059 = vmatpush1.xpose.msra.mxu0 0.0
    %2060 = vmatprep.subr.mxu0 0.0
    %2061 = vmatpush1.xpose.msra.mxu0 0.0
    %2062 = vmatprep.subr.mxu0 0.0
    %2063 = vmatpush1.xpose.msra.mxu0 0.0
    %2064 = vmatprep.subr.mxu0 0.0
    %2065 = vmatpush1.xpose.msra.mxu0 0.0
    %2066 = vmatprep.subr.mxu0 0.0
    %2067 = vmatpush1.xpose.msra.mxu0 0.0
    %2068 = vmatprep.subr.mxu0 0.0
    %2069 = vmatpush1.xpose.msra.mxu0 0.0
    %2070 = vmatprep.subr.mxu0 0.0
    %2071 = vmatpush1.xpose.msra.mxu0 0.0
    %2072 = vmatprep.subr.mxu0 0.0
    %2073 = vmatpush1.xpose.msra.mxu0 0.0
    %2074 = vmatprep.subr.mxu0 0.0
    %2075 = vmatpush1.xpose.msra.mxu0 0.0
    %2076 = vmatprep.subr.mxu0 0.0
    %2077 = vmatpush1.xpose.msra.mxu0 0.0
    %2078 = vmatprep.subr.mxu0 0.0
    %2079 = vmatpush1.xpose.msra.mxu0 0.0
    %2080 = vmatprep.subr.mxu0 0.0
    %2081 = vmatpush1.xpose.msra.mxu0 0.0
    %2082 = vmatprep.subr.mxu0 0.0
    %2083 = vmatpush1.xpose.msra.mxu0 0.0
    %2084 = vmatprep.mubr.f32.mxu0 0.0
    %2085 = vmatmul.mubr.f32.gmra.mrb[0].mxu0 %v2016
    %v2086 = vpop.f32.mrb[0].mxu0
    %v2087 = vadd.f32 0.0, %v2086
    %v2088 = vpop.f32.mrb[0].mxu0
    %2089 = vdwg.mxu0
    %v2090 = vsel %vm235, %v2087, -inf
    %2091 = vmax.xlane.f32.xlu0 %v2090
    %v2092 = vpop.xlane.xlu0 %2091
    %v2093 = vsub.f32 %v2087, %v2092
    %v2094 = vmul.f32 %v2093, 1.442695
    %v2095 = vpow.pop %v2094
    %v2096 = vsel %vm235, %v2095, 0.0
    %2097 = vadd.xlane.f32.xlu0 %v2096
    %v2098 = vpop.xlane.xlu0 %2097
    %v2099 = vrcp.pop %v2098
    %v2100 = vmul.f32 %v2095, %v2099
    %2101 = vrot.lane.b32.xlu0 %v154, 52
    %v2102 = vpop.permute.xlu0 %2101
    %v2105 = vsel %vm235, %v2100, 0
    %2107 = vmatprep.subr.mxu0 0.0
    %2108 = vmatpush1.msra.mxu0 %v2102
    %2109 = vmatprep.subr.mxu0 0.0
    %2110 = vmatpush1.msra.mxu0 0.0
    %2111 = vmatprep.subr.mxu0 0.0
    %2112 = vmatpush1.msra.mxu0 0.0
    %2113 = vmatprep.subr.mxu0 0.0
    %2114 = vmatpush1.msra.mxu0 0.0
    %2115 = vmatprep.subr.mxu0 0.0
    %2116 = vmatpush1.msra.mxu0 0.0
    %2117 = vmatprep.subr.mxu0 0.0
    %2118 = vmatpush1.msra.mxu0 0.0
    %2119 = vmatprep.subr.mxu0 0.0
    %2120 = vmatpush1.msra.mxu0 0.0
    %2121 = vmatprep.subr.mxu0 0.0
    %2122 = vmatpush1.msra.mxu0 0.0
    %2123 = vmatprep.subr.mxu0 0.0
    %2124 = vmatpush1.msra.mxu0 0.0
    %2125 = vmatprep.subr.mxu0 0.0
    %2126 = vmatpush1.msra.mxu0 0.0
    %2127 = vmatprep.subr.mxu0 0.0
    %2128 = vmatpush1.msra.mxu0 0.0
    %2129 = vmatprep.subr.mxu0 0.0
    %2130 = vmatpush1.msra.mxu0 0.0
    %2131 = vmatprep.subr.mxu0 0.0
    %2132 = vmatpush1.msra.mxu0 0.0
    %2133 = vmatprep.subr.mxu0 0.0
    %2134 = vmatpush1.msra.mxu0 0.0
    %2135 = vmatprep.subr.mxu0 0.0
    %2136 = vmatpush1.msra.mxu0 0.0
    %2137 = vmatprep.subr.mxu0 0.0
    %2138 = vmatpush1.msra.mxu0 0.0
    %2139 = vmatprep.subr.mxu0 0.0
    %2140 = vmatpush1.msra.mxu0 0.0
    %2141 = vmatprep.subr.mxu0 0.0
    %2142 = vmatpush1.msra.mxu0 0.0
    %2143 = vmatprep.subr.mxu0 0.0
    %2144 = vmatpush1.msra.mxu0 0.0
    %2145 = vmatprep.subr.mxu0 0.0
    %2146 = vmatpush1.msra.mxu0 0.0
    %2147 = vmatprep.subr.mxu0 0.0
    %2148 = vmatpush1.msra.mxu0 0.0
    %2149 = vmatprep.subr.mxu0 0.0
    %2150 = vmatpush1.msra.mxu0 0.0
    %2151 = vmatprep.subr.mxu0 0.0
    %2152 = vmatpush1.msra.mxu0 0.0
    %2153 = vmatprep.subr.mxu0 0.0
    %2154 = vmatpush1.msra.mxu0 0.0
    %2155 = vmatprep.subr.mxu0 0.0
    %2156 = vmatpush1.msra.mxu0 0.0
    %2157 = vmatprep.subr.mxu0 0.0
    %2158 = vmatpush1.msra.mxu0 0.0
    %2159 = vmatprep.subr.mxu0 0.0
    %2160 = vmatpush1.msra.mxu0 0.0
    %2161 = vmatprep.subr.mxu0 0.0
    %2162 = vmatpush1.msra.mxu0 0.0
    %2163 = vmatprep.subr.mxu0 0.0
    %2164 = vmatpush1.msra.mxu0 0.0
    %2165 = vmatprep.subr.mxu0 0.0
    %2166 = vmatpush1.msra.mxu0 0.0
    %2167 = vmatprep.subr.mxu0 0.0
    %2168 = vmatpush1.msra.mxu0 0.0
    %2169 = vmatprep.subr.mxu0 0.0
    %2170 = vmatpush1.msra.mxu0 0.0
    %2171 = vmatprep.mubr.f32.mxu0 0.0
    %2172 = vmatmul.mubr.f32.gmra.mrb[0].mxu0 %v2105
    %v2173 = vpop.f32.mrb[0].mxu0
    %v2174 = vadd.f32 0.0, %v2173
    %v2175 = vpop.f32.mrb[0].mxu0
    %2176 = vdwg.mxu0
    %2177 = vrot.lane.b32.xlu0 %v154, 112
    %v2178 = vpop.permute.xlu0 %2177
    %2179 = vrot.lane.b32.xlu0 %v154, 80
    %v2180 = vpop.permute.xlu0 %2179
    %v2181 = vsel %vm160, %v2178, 0
    %v2183 = vsel %vm160, %v2180, 0
    %2185 = vmatprep.subr.mxu0 0.0
    %2186 = vmatpush1.xpose.msra.mxu0 %v2183
    %2187 = vmatprep.subr.mxu0 0.0
    %2188 = vmatpush1.xpose.msra.mxu0 0.0
    %2189 = vmatprep.subr.mxu0 0.0
    %2190 = vmatpush1.xpose.msra.mxu0 0.0
    %2191 = vmatprep.subr.mxu0 0.0
    %2192 = vmatpush1.xpose.msra.mxu0 0.0
    %2193 = vmatprep.subr.mxu0 0.0
    %2194 = vmatpush1.xpose.msra.mxu0 0.0
    %2195 = vmatprep.subr.mxu0 0.0
    %2196 = vmatpush1.xpose.msra.mxu0 0.0
    %2197 = vmatprep.subr.mxu0 0.0
    %2198 = vmatpush1.xpose.msra.mxu0 0.0
    %2199 = vmatprep.subr.mxu0 0.0
    %2200 = vmatpush1.xpose.msra.mxu0 0.0
    %2201 = vmatprep.subr.mxu0 0.0
    %2202 = vmatpush1.xpose.msra.mxu0 0.0
    %2203 = vmatprep.subr.mxu0 0.0
    %2204 = vmatpush1.xpose.msra.mxu0 0.0
    %2205 = vmatprep.subr.mxu0 0.0
    %2206 = vmatpush1.xpose.msra.mxu0 0.0
    %2207 = vmatprep.subr.mxu0 0.0
    %2208 = vmatpush1.xpose.msra.mxu0 0.0
    %2209 = vmatprep.subr.mxu0 0.0
    %2210 = vmatpush1.xpose.msra.mxu0 0.0
    %2211 = vmatprep.subr.mxu0 0.0
    %2212 = vmatpush1.xpose.msra.mxu0 0.0
    %2213 = vmatprep.subr.mxu0 0.0
    %2214 = vmatpush1.xpose.msra.mxu0 0.0
    %2215 = vmatprep.subr.mxu0 0.0
    %2216 = vmatpush1.xpose.msra.mxu0 0.0
    %2217 = vmatprep.subr.mxu0 0.0
    %2218 = vmatpush1.xpose.msra.mxu0 0.0
    %2219 = vmatprep.subr.mxu0 0.0
    %2220 = vmatpush1.xpose.msra.mxu0 0.0
    %2221 = vmatprep.subr.mxu0 0.0
    %2222 = vmatpush1.xpose.msra.mxu0 0.0
    %2223 = vmatprep.subr.mxu0 0.0
    %2224 = vmatpush1.xpose.msra.mxu0 0.0
    %2225 = vmatprep.subr.mxu0 0.0
    %2226 = vmatpush1.xpose.msra.mxu0 0.0
    %2227 = vmatprep.subr.mxu0 0.0
    %2228 = vmatpush1.xpose.msra.mxu0 0.0
    %2229 = vmatprep.subr.mxu0 0.0
    %2230 = vmatpush1.xpose.msra.mxu0 0.0
    %2231 = vmatprep.subr.mxu0 0.0
    %2232 = vmatpush1.xpose.msra.mxu0 0.0
    %2233 = vmatprep.subr.mxu0 0.0
    %2234 = vmatpush1.xpose.msra.mxu0 0.0
    %2235 = vmatprep.subr.mxu0 0.0
    %2236 = vmatpush1.xpose.msra.mxu0 0.0
    %2237 = vmatprep.subr.mxu0 0.0
    %2238 = vmatpush1.xpose.msra.mxu0 0.0
    %2239 = vmatprep.subr.mxu0 0.0
    %2240 = vmatpush1.xpose.msra.mxu0 0.0
    %2241 = vmatprep.subr.mxu0 0.0
    %2242 = vmatpush1.xpose.msra.mxu0 0.0
    %2243 = vmatprep.subr.mxu0 0.0
    %2244 = vmatpush1.xpose.msra.mxu0 0.0
    %2245 = vmatprep.subr.mxu0 0.0
    %2246 = vmatpush1.xpose.msra.mxu0 0.0
    %2247 = vmatprep.subr.mxu0 0.0
    %2248 = vmatpush1.xpose.msra.mxu0 0.0
    %2249 = vmatprep.mubr.f32.mxu0 0.0
    %2250 = vmatmul.mubr.f32.gmra.mrb[0].mxu0 %v2181
    %v2251 = vpop.f32.mrb[0].mxu0
    %v2252 = vadd.f32 0.0, %v2251
    %v2253 = vpop.f32.mrb[0].mxu0
    %2254 = vdwg.mxu0
    %v2255 = vsel %vm235, %v2252, -inf
    %2256 = vmax.xlane.f32.xlu0 %v2255
    %v2257 = vpop.xlane.xlu0 %2256
    %v2258 = vsub.f32 %v2252, %v2257
    %v2259 = vmul.f32 %v2258, 1.442695
    %v2260 = vpow.pop %v2259
    %v2261 = vsel %vm235, %v2260, 0.0
    %2262 = vadd.xlane.f32.xlu0 %v2261
    %v2263 = vpop.xlane.xlu0 %2262
    %v2264 = vrcp.pop %v2263
    %v2265 = vmul.f32 %v2260, %v2264
    %2266 = vrot.lane.b32.xlu0 %v154, 48
    %v2267 = vpop.permute.xlu0 %2266
    %v2270 = vsel %vm235, %v2265, 0
    %2272 = vmatprep.subr.mxu0 0.0
    %2273 = vmatpush1.msra.mxu0 %v2267
    %2274 = vmatprep.subr.mxu0 0.0
    %2275 = vmatpush1.msra.mxu0 0.0
    %2276 = vmatprep.subr.mxu0 0.0
    %2277 = vmatpush1.msra.mxu0 0.0
    %2278 = vmatprep.subr.mxu0 0.0
    %2279 = vmatpush1.msra.mxu0 0.0
    %2280 = vmatprep.subr.mxu0 0.0
    %2281 = vmatpush1.msra.mxu0 0.0
    %2282 = vmatprep.subr.mxu0 0.0
    %2283 = vmatpush1.msra.mxu0 0.0
    %2284 = vmatprep.subr.mxu0 0.0
    %2285 = vmatpush1.msra.mxu0 0.0
    %2286 = vmatprep.subr.mxu0 0.0
    %2287 = vmatpush1.msra.mxu0 0.0
    %2288 = vmatprep.subr.mxu0 0.0
    %2289 = vmatpush1.msra.mxu0 0.0
    %2290 = vmatprep.subr.mxu0 0.0
    %2291 = vmatpush1.msra.mxu0 0.0
    %2292 = vmatprep.subr.mxu0 0.0
    %2293 = vmatpush1.msra.mxu0 0.0
    %2294 = vmatprep.subr.mxu0 0.0
    %2295 = vmatpush1.msra.mxu0 0.0
    %2296 = vmatprep.subr.mxu0 0.0
    %2297 = vmatpush1.msra.mxu0 0.0
    %2298 = vmatprep.subr.mxu0 0.0
    %2299 = vmatpush1.msra.mxu0 0.0
    %2300 = vmatprep.subr.mxu0 0.0
    %2301 = vmatpush1.msra.mxu0 0.0
    %2302 = vmatprep.subr.mxu0 0.0
    %2303 = vmatpush1.msra.mxu0 0.0
    %2304 = vmatprep.subr.mxu0 0.0
    %2305 = vmatpush1.msra.mxu0 0.0
    %2306 = vmatprep.subr.mxu0 0.0
    %2307 = vmatpush1.msra.mxu0 0.0
    %2308 = vmatprep.subr.mxu0 0.0
    %2309 = vmatpush1.msra.mxu0 0.0
    %2310 = vmatprep.subr.mxu0 0.0
    %2311 = vmatpush1.msra.mxu0 0.0
    %2312 = vmatprep.subr.mxu0 0.0
    %2313 = vmatpush1.msra.mxu0 0.0
    %2314 = vmatprep.subr.mxu0 0.0
    %2315 = vmatpush1.msra.mxu0 0.0
    %2316 = vmatprep.subr.mxu0 0.0
    %2317 = vmatpush1.msra.mxu0 0.0
    %2318 = vmatprep.subr.mxu0 0.0
    %2319 = vmatpush1.msra.mxu0 0.0
    %2320 = vmatprep.subr.mxu0 0.0
    %2321 = vmatpush1.msra.mxu0 0.0
    %2322 = vmatprep.subr.mxu0 0.0
    %2323 = vmatpush1.msra.mxu0 0.0
    %2324 = vmatprep.subr.mxu0 0.0
    %2325 = vmatpush1.msra.mxu0 0.0
    %2326 = vmatprep.subr.mxu0 0.0
    %2327 = vmatpush1.msra.mxu0 0.0
    %2328 = vmatprep.subr.mxu0 0.0
    %2329 = vmatpush1.msra.mxu0 0.0
    %2330 = vmatprep.subr.mxu0 0.0
    %2331 = vmatpush1.msra.mxu0 0.0
    %2332 = vmatprep.subr.mxu0 0.0
    %2333 = vmatpush1.msra.mxu0 0.0
    %2334 = vmatprep.subr.mxu0 0.0
    %2335 = vmatpush1.msra.mxu0 0.0
    %2336 = vmatprep.mubr.f32.mxu0 0.0
    %2337 = vmatmul.mubr.f32.gmra.mrb[0].mxu0 %v2270
    %v2338 = vpop.f32.mrb[0].mxu0
    %v2339 = vadd.f32 0.0, %v2338
    %v2340 = vpop.f32.mrb[0].mxu0
    %2341 = vdwg.mxu0
    %2342 = vrot.lane.b32.xlu0 %v154, 108
    %v2343 = vpop.permute.xlu0 %2342
    %2344 = vrot.lane.b32.xlu0 %v154, 76
    %v2345 = vpop.permute.xlu0 %2344
    %v2346 = vsel %vm160, %v2343, 0
    %v2348 = vsel %vm160, %v2345, 0
    %2350 = vmatprep.subr.mxu0 0.0
    %2351 = vmatpush1.xpose.msra.mxu0 %v2348
    %2352 = vmatprep.subr.mxu0 0.0
    %2353 = vmatpush1.xpose.msra.mxu0 0.0
    %2354 = vmatprep.subr.mxu0 0.0
    %2355 = vmatpush1.xpose.msra.mxu0 0.0
    %2356 = vmatprep.subr.mxu0 0.0
    %2357 = vmatpush1.xpose.msra.mxu0 0.0
    %2358 = vmatprep.subr.mxu0 0.0
    %2359 = vmatpush1.xpose.msra.mxu0 0.0
    %2360 = vmatprep.subr.mxu0 0.0
    %2361 = vmatpush1.xpose.msra.mxu0 0.0
    %2362 = vmatprep.subr.mxu0 0.0
    %2363 = vmatpush1.xpose.msra.mxu0 0.0
    %2364 = vmatprep.subr.mxu0 0.0
    %2365 = vmatpush1.xpose.msra.mxu0 0.0
    %2366 = vmatprep.subr.mxu0 0.0
    %2367 = vmatpush1.xpose.msra.mxu0 0.0
    %2368 = vmatprep.subr.mxu0 0.0
    %2369 = vmatpush1.xpose.msra.mxu0 0.0
    %2370 = vmatprep.subr.mxu0 0.0
    %2371 = vmatpush1.xpose.msra.mxu0 0.0
    %2372 = vmatprep.subr.mxu0 0.0
    %2373 = vmatpush1.xpose.msra.mxu0 0.0
    %2374 = vmatprep.subr.mxu0 0.0
    %2375 = vmatpush1.xpose.msra.mxu0 0.0
    %2376 = vmatprep.subr.mxu0 0.0
    %2377 = vmatpush1.xpose.msra.mxu0 0.0
    %2378 = vmatprep.subr.mxu0 0.0
    %2379 = vmatpush1.xpose.msra.mxu0 0.0
    %2380 = vmatprep.subr.mxu0 0.0
    %2381 = vmatpush1.xpose.msra.mxu0 0.0
    %2382 = vmatprep.subr.mxu0 0.0
    %2383 = vmatpush1.xpose.msra.mxu0 0.0
    %2384 = vmatprep.subr.mxu0 0.0
    %2385 = vmatpush1.xpose.msra.mxu0 0.0
    %2386 = vmatprep.subr.mxu0 0.0
    %2387 = vmatpush1.xpose.msra.mxu0 0.0
    %2388 = vmatprep.subr.mxu0 0.0
    %2389 = vmatpush1.xpose.msra.mxu0 0.0
    %2390 = vmatprep.subr.mxu0 0.0
    %2391 = vmatpush1.xpose.msra.mxu0 0.0
    %2392 = vmatprep.subr.mxu0 0.0
    %2393 = vmatpush1.xpose.msra.mxu0 0.0
    %2394 = vmatprep.subr.mxu0 0.0
    %2395 = vmatpush1.xpose.msra.mxu0 0.0
    %2396 = vmatprep.subr.mxu0 0.0
    %2397 = vmatpush1.xpose.msra.mxu0 0.0
    %2398 = vmatprep.subr.mxu0 0.0
    %2399 = vmatpush1.xpose.msra.mxu0 0.0
    %2400 = vmatprep.subr.mxu0 0.0
    %2401 = vmatpush1.xpose.msra.mxu0 0.0
    %2402 = vmatprep.subr.mxu0 0.0
    %2403 = vmatpush1.xpose.msra.mxu0 0.0
    %2404 = vmatprep.subr.mxu0 0.0
    %2405 = vmatpush1.xpose.msra.mxu0 0.0
    %2406 = vmatprep.subr.mxu0 0.0
    %2407 = vmatpush1.xpose.msra.mxu0 0.0
    %2408 = vmatprep.subr.mxu0 0.0
    %2409 = vmatpush1.xpose.msra.mxu0 0.0
    %2410 = vmatprep.subr.mxu0 0.0
    %2411 = vmatpush1.xpose.msra.mxu0 0.0
    %2412 = vmatprep.subr.mxu0 0.0
    %2413 = vmatpush1.xpose.msra.mxu0 0.0
    %2414 = vmatprep.mubr.f32.mxu0 0.0
    %2415 = vmatmul.mubr.f32.gmra.mrb[0].mxu0 %v2346
    %v2416 = vpop.f32.mrb[0].mxu0
    %v2417 = vadd.f32 0.0, %v2416
    %v2418 = vpop.f32.mrb[0].mxu0
    %2419 = vdwg.mxu0
    %v2420 = vsel %vm235, %v2417, -inf
    %2421 = vmax.xlane.f32.xlu0 %v2420
    %v2422 = vpop.xlane.xlu0 %2421
    %v2423 = vsub.f32 %v2417, %v2422
    %v2424 = vmul.f32 %v2423, 1.442695
    %v2425 = vpow.pop %v2424
    %v2426 = vsel %vm235, %v2425, 0.0
    %2427 = vadd.xlane.f32.xlu0 %v2426
    %v2428 = vpop.xlane.xlu0 %2427
    %v2429 = vrcp.pop %v2428
    %v2430 = vmul.f32 %v2425, %v2429
    %2431 = vrot.lane.b32.xlu0 %v154, 44
    %v2432 = vpop.permute.xlu0 %2431
    %v2435 = vsel %vm235, %v2430, 0
    %2437 = vmatprep.subr.mxu0 0.0
    %2438 = vmatpush1.msra.mxu0 %v2432
    %2439 = vmatprep.subr.mxu0 0.0
    %2440 = vmatpush1.msra.mxu0 0.0
    %2441 = vmatprep.subr.mxu0 0.0
    %2442 = vmatpush1.msra.mxu0 0.0
    %2443 = vmatprep.subr.mxu0 0.0
    %2444 = vmatpush1.msra.mxu0 0.0
    %2445 = vmatprep.subr.mxu0 0.0
    %2446 = vmatpush1.msra.mxu0 0.0
    %2447 = vmatprep.subr.mxu0 0.0
    %2448 = vmatpush1.msra.mxu0 0.0
    %2449 = vmatprep.subr.mxu0 0.0
    %2450 = vmatpush1.msra.mxu0 0.0
    %2451 = vmatprep.subr.mxu0 0.0
    %2452 = vmatpush1.msra.mxu0 0.0
    %2453 = vmatprep.subr.mxu0 0.0
    %2454 = vmatpush1.msra.mxu0 0.0
    %2455 = vmatprep.subr.mxu0 0.0
    %2456 = vmatpush1.msra.mxu0 0.0
    %2457 = vmatprep.subr.mxu0 0.0
    %2458 = vmatpush1.msra.mxu0 0.0
    %2459 = vmatprep.subr.mxu0 0.0
    %2460 = vmatpush1.msra.mxu0 0.0
    %2461 = vmatprep.subr.mxu0 0.0
    %2462 = vmatpush1.msra.mxu0 0.0
    %2463 = vmatprep.subr.mxu0 0.0
    %2464 = vmatpush1.msra.mxu0 0.0
    %2465 = vmatprep.subr.mxu0 0.0
    %2466 = vmatpush1.msra.mxu0 0.0
    %2467 = vmatprep.subr.mxu0 0.0
    %2468 = vmatpush1.msra.mxu0 0.0
    %2469 = vmatprep.subr.mxu0 0.0
    %2470 = vmatpush1.msra.mxu0 0.0
    %2471 = vmatprep.subr.mxu0 0.0
    %2472 = vmatpush1.msra.mxu0 0.0
    %2473 = vmatprep.subr.mxu0 0.0
    %2474 = vmatpush1.msra.mxu0 0.0
    %2475 = vmatprep.subr.mxu0 0.0
    %2476 = vmatpush1.msra.mxu0 0.0
    %2477 = vmatprep.subr.mxu0 0.0
    %2478 = vmatpush1.msra.mxu0 0.0
    %2479 = vmatprep.subr.mxu0 0.0
    %2480 = vmatpush1.msra.mxu0 0.0
    %2481 = vmatprep.subr.mxu0 0.0
    %2482 = vmatpush1.msra.mxu0 0.0
    %2483 = vmatprep.subr.mxu0 0.0
    %2484 = vmatpush1.msra.mxu0 0.0
    %2485 = vmatprep.subr.mxu0 0.0
    %2486 = vmatpush1.msra.mxu0 0.0
    %2487 = vmatprep.subr.mxu0 0.0
    %2488 = vmatpush1.msra.mxu0 0.0
    %2489 = vmatprep.subr.mxu0 0.0
    %2490 = vmatpush1.msra.mxu0 0.0
    %2491 = vmatprep.subr.mxu0 0.0
    %2492 = vmatpush1.msra.mxu0 0.0
    %2493 = vmatprep.subr.mxu0 0.0
    %2494 = vmatpush1.msra.mxu0 0.0
    %2495 = vmatprep.subr.mxu0 0.0
    %2496 = vmatpush1.msra.mxu0 0.0
    %2497 = vmatprep.subr.mxu0 0.0
    %2498 = vmatpush1.msra.mxu0 0.0
    %2499 = vmatprep.subr.mxu0 0.0
    %2500 = vmatpush1.msra.mxu0 0.0
    %2501 = vmatprep.mubr.f32.mxu0 0.0
    %2502 = vmatmul.mubr.f32.gmra.mrb[0].mxu0 %v2435
    %v2503 = vpop.f32.mrb[0].mxu0
    %v2504 = vadd.f32 0.0, %v2503
    %v2505 = vpop.f32.mrb[0].mxu0
    %2506 = vdwg.mxu0
    %2507 = vrot.lane.b32.xlu0 %v154, 104
    %v2508 = vpop.permute.xlu0 %2507
    %2509 = vrot.lane.b32.xlu0 %v154, 72
    %v2510 = vpop.permute.xlu0 %2509
    %v2511 = vsel %vm160, %v2508, 0
    %v2513 = vsel %vm160, %v2510, 0
    %2515 = vmatprep.subr.mxu0 0.0
    %2516 = vmatpush1.xpose.msra.mxu0 %v2513
    %2517 = vmatprep.subr.mxu0 0.0
    %2518 = vmatpush1.xpose.msra.mxu0 0.0
    %2519 = vmatprep.subr.mxu0 0.0
    %2520 = vmatpush1.xpose.msra.mxu0 0.0
    %2521 = vmatprep.subr.mxu0 0.0
    %2522 = vmatpush1.xpose.msra.mxu0 0.0
    %2523 = vmatprep.subr.mxu0 0.0
    %2524 = vmatpush1.xpose.msra.mxu0 0.0
    %2525 = vmatprep.subr.mxu0 0.0
    %2526 = vmatpush1.xpose.msra.mxu0 0.0
    %2527 = vmatprep.subr.mxu0 0.0
    %2528 = vmatpush1.xpose.msra.mxu0 0.0
    %2529 = vmatprep.subr.mxu0 0.0
    %2530 = vmatpush1.xpose.msra.mxu0 0.0
    %2531 = vmatprep.subr.mxu0 0.0
    %2532 = vmatpush1.xpose.msra.mxu0 0.0
    %2533 = vmatprep.subr.mxu0 0.0
    %2534 = vmatpush1.xpose.msra.mxu0 0.0
    %2535 = vmatprep.subr.mxu0 0.0
    %2536 = vmatpush1.xpose.msra.mxu0 0.0
    %2537 = vmatprep.subr.mxu0 0.0
    %2538 = vmatpush1.xpose.msra.mxu0 0.0
    %2539 = vmatprep.subr.mxu0 0.0
    %2540 = vmatpush1.xpose.msra.mxu0 0.0
    %2541 = vmatprep.subr.mxu0 0.0
    %2542 = vmatpush1.xpose.msra.mxu0 0.0
    %2543 = vmatprep.subr.mxu0 0.0
    %2544 = vmatpush1.xpose.msra.mxu0 0.0
    %2545 = vmatprep.subr.mxu0 0.0
    %2546 = vmatpush1.xpose.msra.mxu0 0.0
    %2547 = vmatprep.subr.mxu0 0.0
    %2548 = vmatpush1.xpose.msra.mxu0 0.0
    %2549 = vmatprep.subr.mxu0 0.0
    %2550 = vmatpush1.xpose.msra.mxu0 0.0
    %2551 = vmatprep.subr.mxu0 0.0
    %2552 = vmatpush1.xpose.msra.mxu0 0.0
    %2553 = vmatprep.subr.mxu0 0.0
    %2554 = vmatpush1.xpose.msra.mxu0 0.0
    %2555 = vmatprep.subr.mxu0 0.0
    %2556 = vmatpush1.xpose.msra.mxu0 0.0
    %2557 = vmatprep.subr.mxu0 0.0
    %2558 = vmatpush1.xpose.msra.mxu0 0.0
    %2559 = vmatprep.subr.mxu0 0.0
    %2560 = vmatpush1.xpose.msra.mxu0 0.0
    %2561 = vmatprep.subr.mxu0 0.0
    %2562 = vmatpush1.xpose.msra.mxu0 0.0
    %2563 = vmatprep.subr.mxu0 0.0
    %2564 = vmatpush1.xpose.msra.mxu0 0.0
    %2565 = vmatprep.subr.mxu0 0.0
    %2566 = vmatpush1.xpose.msra.mxu0 0.0
    %2567 = vmatprep.subr.mxu0 0.0
    %2568 = vmatpush1.xpose.msra.mxu0 0.0
    %2569 = vmatprep.subr.mxu0 0.0
    %2570 = vmatpush1.xpose.msra.mxu0 0.0
    %2571 = vmatprep.subr.mxu0 0.0
    %2572 = vmatpush1.xpose.msra.mxu0 0.0
    %2573 = vmatprep.subr.mxu0 0.0
    %2574 = vmatpush1.xpose.msra.mxu0 0.0
    %2575 = vmatprep.subr.mxu0 0.0
    %2576 = vmatpush1.xpose.msra.mxu0 0.0
    %2577 = vmatprep.subr.mxu0 0.0
    %2578 = vmatpush1.xpose.msra.mxu0 0.0
    %2579 = vmatprep.mubr.f32.mxu0 0.0
    %2580 = vmatmul.mubr.f32.gmra.mrb[0].mxu0 %v2511
    %v2581 = vpop.f32.mrb[0].mxu0
    %v2582 = vadd.f32 0.0, %v2581
    %v2583 = vpop.f32.mrb[0].mxu0
    %2584 = vdwg.mxu0
    %v2585 = vsel %vm235, %v2582, -inf
    %2586 = vmax.xlane.f32.xlu0 %v2585
    %v2587 = vpop.xlane.xlu0 %2586
    %v2588 = vsub.f32 %v2582, %v2587
    %v2589 = vmul.f32 %v2588, 1.442695
    %v2590 = vpow.pop %v2589
    %v2591 = vsel %vm235, %v2590, 0.0
    %2592 = vadd.xlane.f32.xlu0 %v2591
    %v2593 = vpop.xlane.xlu0 %2592
    %v2594 = vrcp.pop %v2593
    %v2595 = vmul.f32 %v2590, %v2594
    %2596 = vrot.lane.b32.xlu0 %v154, 40
    %v2597 = vpop.permute.xlu0 %2596
    %v2600 = vsel %vm235, %v2595, 0
    %2602 = vmatprep.subr.mxu0 0.0
    %2603 = vmatpush1.msra.mxu0 %v2597
    %2604 = vmatprep.subr.mxu0 0.0
    %2605 = vmatpush1.msra.mxu0 0.0
    %2606 = vmatprep.subr.mxu0 0.0
    %2607 = vmatpush1.msra.mxu0 0.0
    %2608 = vmatprep.subr.mxu0 0.0
    %2609 = vmatpush1.msra.mxu0 0.0
    %2610 = vmatprep.subr.mxu0 0.0
    %2611 = vmatpush1.msra.mxu0 0.0
    %2612 = vmatprep.subr.mxu0 0.0
    %2613 = vmatpush1.msra.mxu0 0.0
    %2614 = vmatprep.subr.mxu0 0.0
    %2615 = vmatpush1.msra.mxu0 0.0
    %2616 = vmatprep.subr.mxu0 0.0
    %2617 = vmatpush1.msra.mxu0 0.0
    %2618 = vmatprep.subr.mxu0 0.0
    %2619 = vmatpush1.msra.mxu0 0.0
    %2620 = vmatprep.subr.mxu0 0.0
    %2621 = vmatpush1.msra.mxu0 0.0
    %2622 = vmatprep.subr.mxu0 0.0
    %2623 = vmatpush1.msra.mxu0 0.0
    %2624 = vmatprep.subr.mxu0 0.0
    %2625 = vmatpush1.msra.mxu0 0.0
    %2626 = vmatprep.subr.mxu0 0.0
    %2627 = vmatpush1.msra.mxu0 0.0
    %2628 = vmatprep.subr.mxu0 0.0
    %2629 = vmatpush1.msra.mxu0 0.0
    %2630 = vmatprep.subr.mxu0 0.0
    %2631 = vmatpush1.msra.mxu0 0.0
    %2632 = vmatprep.subr.mxu0 0.0
    %2633 = vmatpush1.msra.mxu0 0.0
    %2634 = vmatprep.subr.mxu0 0.0
    %2635 = vmatpush1.msra.mxu0 0.0
    %2636 = vmatprep.subr.mxu0 0.0
    %2637 = vmatpush1.msra.mxu0 0.0
    %2638 = vmatprep.subr.mxu0 0.0
    %2639 = vmatpush1.msra.mxu0 0.0
    %2640 = vmatprep.subr.mxu0 0.0
    %2641 = vmatpush1.msra.mxu0 0.0
    %2642 = vmatprep.subr.mxu0 0.0
    %2643 = vmatpush1.msra.mxu0 0.0
    %2644 = vmatprep.subr.mxu0 0.0
    %2645 = vmatpush1.msra.mxu0 0.0
    %2646 = vmatprep.subr.mxu0 0.0
    %2647 = vmatpush1.msra.mxu0 0.0
    %2648 = vmatprep.subr.mxu0 0.0
    %2649 = vmatpush1.msra.mxu0 0.0
    %2650 = vmatprep.subr.mxu0 0.0
    %2651 = vmatpush1.msra.mxu0 0.0
    %2652 = vmatprep.subr.mxu0 0.0
    %2653 = vmatpush1.msra.mxu0 0.0
    %2654 = vmatprep.subr.mxu0 0.0
    %2655 = vmatpush1.msra.mxu0 0.0
    %2656 = vmatprep.subr.mxu0 0.0
    %2657 = vmatpush1.msra.mxu0 0.0
    %2658 = vmatprep.subr.mxu0 0.0
    %2659 = vmatpush1.msra.mxu0 0.0
    %2660 = vmatprep.subr.mxu0 0.0
    %2661 = vmatpush1.msra.mxu0 0.0
    %2662 = vmatprep.subr.mxu0 0.0
    %2663 = vmatpush1.msra.mxu0 0.0
    %2664 = vmatprep.subr.mxu0 0.0
    %2665 = vmatpush1.msra.mxu0 0.0
    %2666 = vmatprep.mubr.f32.mxu0 0.0
    %2667 = vmatmul.mubr.f32.gmra.mrb[0].mxu0 %v2600
    %v2668 = vpop.f32.mrb[0].mxu0
    %v2669 = vadd.f32 0.0, %v2668
    %v2670 = vpop.f32.mrb[0].mxu0
    %2671 = vdwg.mxu0
    %2672 = vrot.lane.b32.xlu0 %v154, 100
    %v2673 = vpop.permute.xlu0 %2672
    %2674 = vrot.lane.b32.xlu0 %v154, 68
    %v2675 = vpop.permute.xlu0 %2674
    %v2676 = vsel %vm160, %v2673, 0
    %v2678 = vsel %vm160, %v2675, 0
    %2680 = vmatprep.subr.mxu0 0.0
    %2681 = vmatpush1.xpose.msra.mxu0 %v2678
    %2682 = vmatprep.subr.mxu0 0.0
    %2683 = vmatpush1.xpose.msra.mxu0 0.0
    %2684 = vmatprep.subr.mxu0 0.0
    %2685 = vmatpush1.xpose.msra.mxu0 0.0
    %2686 = vmatprep.subr.mxu0 0.0
    %2687 = vmatpush1.xpose.msra.mxu0 0.0
    %2688 = vmatprep.subr.mxu0 0.0
    %2689 = vmatpush1.xpose.msra.mxu0 0.0
    %2690 = vmatprep.subr.mxu0 0.0
    %2691 = vmatpush1.xpose.msra.mxu0 0.0
    %2692 = vmatprep.subr.mxu0 0.0
    %2693 = vmatpush1.xpose.msra.mxu0 0.0
    %2694 = vmatprep.subr.mxu0 0.0
    %2695 = vmatpush1.xpose.msra.mxu0 0.0
    %2696 = vmatprep.subr.mxu0 0.0
    %2697 = vmatpush1.xpose.msra.mxu0 0.0
    %2698 = vmatprep.subr.mxu0 0.0
    %2699 = vmatpush1.xpose.msra.mxu0 0.0
    %2700 = vmatprep.subr.mxu0 0.0
    %2701 = vmatpush1.xpose.msra.mxu0 0.0
    %2702 = vmatprep.subr.mxu0 0.0
    %2703 = vmatpush1.xpose.msra.mxu0 0.0
    %2704 = vmatprep.subr.mxu0 0.0
    %2705 = vmatpush1.xpose.msra.mxu0 0.0
    %2706 = vmatprep.subr.mxu0 0.0
    %2707 = vmatpush1.xpose.msra.mxu0 0.0
    %2708 = vmatprep.subr.mxu0 0.0
    %2709 = vmatpush1.xpose.msra.mxu0 0.0
    %2710 = vmatprep.subr.mxu0 0.0
    %2711 = vmatpush1.xpose.msra.mxu0 0.0
    %2712 = vmatprep.subr.mxu0 0.0
    %2713 = vmatpush1.xpose.msra.mxu0 0.0
    %2714 = vmatprep.subr.mxu0 0.0
    %2715 = vmatpush1.xpose.msra.mxu0 0.0
    %2716 = vmatprep.subr.mxu0 0.0
    %2717 = vmatpush1.xpose.msra.mxu0 0.0
    %2718 = vmatprep.subr.mxu0 0.0
    %2719 = vmatpush1.xpose.msra.mxu0 0.0
    %2720 = vmatprep.subr.mxu0 0.0
    %2721 = vmatpush1.xpose.msra.mxu0 0.0
    %2722 = vmatprep.subr.mxu0 0.0
    %2723 = vmatpush1.xpose.msra.mxu0 0.0
    %2724 = vmatprep.subr.mxu0 0.0
    %2725 = vmatpush1.xpose.msra.mxu0 0.0
    %2726 = vmatprep.subr.mxu0 0.0
    %2727 = vmatpush1.xpose.msra.mxu0 0.0
    %2728 = vmatprep.subr.mxu0 0.0
    %2729 = vmatpush1.xpose.msra.mxu0 0.0
    %2730 = vmatprep.subr.mxu0 0.0
    %2731 = vmatpush1.xpose.msra.mxu0 0.0
    %2732 = vmatprep.subr.mxu0 0.0
    %2733 = vmatpush1.xpose.msra.mxu0 0.0
    %2734 = vmatprep.subr.mxu0 0.0
    %2735 = vmatpush1.xpose.msra.mxu0 0.0
    %2736 = vmatprep.subr.mxu0 0.0
    %2737 = vmatpush1.xpose.msra.mxu0 0.0
    %2738 = vmatprep.subr.mxu0 0.0
    %2739 = vmatpush1.xpose.msra.mxu0 0.0
    %2740 = vmatprep.subr.mxu0 0.0
    %2741 = vmatpush1.xpose.msra.mxu0 0.0
    %2742 = vmatprep.subr.mxu0 0.0
    %2743 = vmatpush1.xpose.msra.mxu0 0.0
    %2744 = vmatprep.mubr.f32.mxu0 0.0
    %2745 = vmatmul.mubr.f32.gmra.mrb[0].mxu0 %v2676
    %v2746 = vpop.f32.mrb[0].mxu0
    %v2747 = vadd.f32 0.0, %v2746
    %v2748 = vpop.f32.mrb[0].mxu0
    %2749 = vdwg.mxu0
    %v2750 = vsel %vm235, %v2747, -inf
    %2751 = vmax.xlane.f32.xlu0 %v2750
    %v2752 = vpop.xlane.xlu0 %2751
    %v2753 = vsub.f32 %v2747, %v2752
    %v2754 = vmul.f32 %v2753, 1.442695
    %v2755 = vpow.pop %v2754
    %v2756 = vsel %vm235, %v2755, 0.0
    %2757 = vadd.xlane.f32.xlu0 %v2756
    %v2758 = vpop.xlane.xlu0 %2757
    %v2759 = vrcp.pop %v2758
    %v2760 = vmul.f32 %v2755, %v2759
    %2761 = vrot.lane.b32.xlu0 %v154, 36
    %v2762 = vpop.permute.xlu0 %2761
    %v2765 = vsel %vm235, %v2760, 0
    %2767 = vmatprep.subr.mxu0 0.0
    %2768 = vmatpush1.msra.mxu0 %v2762
    %2769 = vmatprep.subr.mxu0 0.0
    %2770 = vmatpush1.msra.mxu0 0.0
    %2771 = vmatprep.subr.mxu0 0.0
    %2772 = vmatpush1.msra.mxu0 0.0
    %2773 = vmatprep.subr.mxu0 0.0
    %2774 = vmatpush1.msra.mxu0 0.0
    %2775 = vmatprep.subr.mxu0 0.0
    %2776 = vmatpush1.msra.mxu0 0.0
    %2777 = vmatprep.subr.mxu0 0.0
    %2778 = vmatpush1.msra.mxu0 0.0
    %2779 = vmatprep.subr.mxu0 0.0
    %2780 = vmatpush1.msra.mxu0 0.0
    %2781 = vmatprep.subr.mxu0 0.0
    %2782 = vmatpush1.msra.mxu0 0.0
    %2783 = vmatprep.subr.mxu0 0.0
    %2784 = vmatpush1.msra.mxu0 0.0
    %2785 = vmatprep.subr.mxu0 0.0
    %2786 = vmatpush1.msra.mxu0 0.0
    %2787 = vmatprep.subr.mxu0 0.0
    %2788 = vmatpush1.msra.mxu0 0.0
    %2789 = vmatprep.subr.mxu0 0.0
    %2790 = vmatpush1.msra.mxu0 0.0
    %2791 = vmatprep.subr.mxu0 0.0
    %2792 = vmatpush1.msra.mxu0 0.0
    %2793 = vmatprep.subr.mxu0 0.0
    %2794 = vmatpush1.msra.mxu0 0.0
    %2795 = vmatprep.subr.mxu0 0.0
    %2796 = vmatpush1.msra.mxu0 0.0
    %2797 = vmatprep.subr.mxu0 0.0
    %2798 = vmatpush1.msra.mxu0 0.0
    %2799 = vmatprep.subr.mxu0 0.0
    %2800 = vmatpush1.msra.mxu0 0.0
    %2801 = vmatprep.subr.mxu0 0.0
    %2802 = vmatpush1.msra.mxu0 0.0
    %2803 = vmatprep.subr.mxu0 0.0
    %2804 = vmatpush1.msra.mxu0 0.0
    %2805 = vmatprep.subr.mxu0 0.0
    %2806 = vmatpush1.msra.mxu0 0.0
    %2807 = vmatprep.subr.mxu0 0.0
    %2808 = vmatpush1.msra.mxu0 0.0
    %2809 = vmatprep.subr.mxu0 0.0
    %2810 = vmatpush1.msra.mxu0 0.0
    %2811 = vmatprep.subr.mxu0 0.0
    %2812 = vmatpush1.msra.mxu0 0.0
    %2813 = vmatprep.subr.mxu0 0.0
    %2814 = vmatpush1.msra.mxu0 0.0
    %2815 = vmatprep.subr.mxu0 0.0
    %2816 = vmatpush1.msra.mxu0 0.0
    %2817 = vmatprep.subr.mxu0 0.0
    %2818 = vmatpush1.msra.mxu0 0.0
    %2819 = vmatprep.subr.mxu0 0.0
    %2820 = vmatpush1.msra.mxu0 0.0
    %2821 = vmatprep.subr.mxu0 0.0
    %2822 = vmatpush1.msra.mxu0 0.0
    %2823 = vmatprep.subr.mxu0 0.0
    %2824 = vmatpush1.msra.mxu0 0.0
    %2825 = vmatprep.subr.mxu0 0.0
    %2826 = vmatpush1.msra.mxu0 0.0
    %2827 = vmatprep.subr.mxu0 0.0
    %2828 = vmatpush1.msra.mxu0 0.0
    %2829 = vmatprep.subr.mxu0 0.0
    %2830 = vmatpush1.msra.mxu0 0.0
    %2831 = vmatprep.mubr.f32.mxu0 0.0
    %2832 = vmatmul.mubr.f32.gmra.mrb[0].mxu0 %v2765
    %v2833 = vpop.f32.mrb[0].mxu0
    %v2834 = vadd.f32 0.0, %v2833
    %v2835 = vpop.f32.mrb[0].mxu0
    %2836 = vdwg.mxu0
    %2838 = vrot.lane.b32.xlu0 %v1844, 4
    %v2839 = vpop.permute.xlu0 %2838
    %2842 = vrot.lane.b32.xlu0 %v2009, 8
    %v2843 = vpop.permute.xlu0 %2842
    %2846 = vrot.lane.b32.xlu0 %v2174, 12
    %v2847 = vpop.permute.xlu0 %2846
    %2850 = vrot.lane.b32.xlu0 %v2339, 16
    %v2851 = vpop.permute.xlu0 %2850
    %2854 = vrot.lane.b32.xlu0 %v2504, 20
    %v2855 = vpop.permute.xlu0 %2854
    %2858 = vrot.lane.b32.xlu0 %v2669, 24
    %v2859 = vpop.permute.xlu0 %2858
    %2862 = vrot.lane.b32.xlu0 %v2834, 28
    %v2863 = vpop.permute.xlu0 %2862
    %v2865 = vsel %vm160, %v1679, %v2839
    %v2866 = vsel %vm235, %v2865, %v2843
    %v2867 = vsel %vm1508, %v2866, %v2847
    %v2868 = vsel %vm1510, %v2867, %v2851
    %v2869 = vsel %vm1512, %v2868, %v2855
    %v2870 = vsel %vm1514, %v2869, %v2859
    %v2871 = vsel %vm1516, %v2870, %v2863
    %v2872 = vld [vmem:[#allocation7] sm:$0xff]
    %v2873 = vld [vmem:[#allocation7 + $0x8] sm:$0xff]
    %v2874 = vld [vmem:[#allocation7 + $0x10] sm:$0xff]
    %v2875 = vld [vmem:[#allocation7 + $0x18] sm:$0xff]
    %v2876 = vld [vmem:[%s4] sm:$0x1]
    %v2878 = vlaneseq
    %v2879 = vshrl.u32 %v2878, 7
    %v2880 = vsub.s32 0, %v2879
    %v2881 = vrot.slane %v2876, %v2880
    %v2884 = vsel %vm75, %v1517, 0
    %v2887 = vsel %vm75, %v2871, 0
    %2889 = vmatprep.subr.mxu0 0.0
    %2890 = vmatpush1.msra.mxu0 %v2872
    %2891 = vmatprep.subr.mxu0 0.0
    %2892 = vmatpush1.msra.mxu0 %v2873
    %2893 = vmatprep.subr.mxu0 0.0
    %2894 = vmatpush1.msra.mxu0 %v2874
    %2895 = vmatprep.subr.mxu0 0.0
    %2896 = vmatpush1.msra.mxu0 %v2875
    %2897 = vmatprep.subr.mxu0 0.0
    %2898 = vmatpush1.msra.mxu0 0.0
    %2899 = vmatprep.subr.mxu0 0.0
    %2900 = vmatpush1.msra.mxu0 0.0
    %2901 = vmatprep.subr.mxu0 0.0
    %2902 = vmatpush1.msra.mxu0 0.0
    %2903 = vmatprep.subr.mxu0 0.0
    %2904 = vmatpush1.msra.mxu0 0.0
    %2905 = vmatprep.subr.mxu0 0.0
    %2906 = vmatpush1.msra.mxu0 0.0
    %2907 = vmatprep.subr.mxu0 0.0
    %2908 = vmatpush1.msra.mxu0 0.0
    %2909 = vmatprep.subr.mxu0 0.0
    %2910 = vmatpush1.msra.mxu0 0.0
    %2911 = vmatprep.subr.mxu0 0.0
    %2912 = vmatpush1.msra.mxu0 0.0
    %2913 = vmatprep.subr.mxu0 0.0
    %2914 = vmatpush1.msra.mxu0 0.0
    %2915 = vmatprep.subr.mxu0 0.0
    %2916 = vmatpush1.msra.mxu0 0.0
    %2917 = vmatprep.subr.mxu0 0.0
    %2918 = vmatpush1.msra.mxu0 0.0
    %2919 = vmatprep.subr.mxu0 0.0
    %2920 = vmatpush1.msra.mxu0 0.0
    %2921 = vmatprep.subr.mxu0 0.0
    %2922 = vmatpush1.msra.mxu0 0.0
    %2923 = vmatprep.subr.mxu0 0.0
    %2924 = vmatpush1.msra.mxu0 0.0
    %2925 = vmatprep.subr.mxu0 0.0
    %2926 = vmatpush1.msra.mxu0 0.0
    %2927 = vmatprep.subr.mxu0 0.0
    %2928 = vmatpush1.msra.mxu0 0.0
    %2929 = vmatprep.subr.mxu0 0.0
    %2930 = vmatpush1.msra.mxu0 0.0
    %2931 = vmatprep.subr.mxu0 0.0
    %2932 = vmatpush1.msra.mxu0 0.0
    %2933 = vmatprep.subr.mxu0 0.0
    %2934 = vmatpush1.msra.mxu0 0.0
    %2935 = vmatprep.subr.mxu0 0.0
    %2936 = vmatpush1.msra.mxu0 0.0
    %2937 = vmatprep.subr.mxu0 0.0
    %2938 = vmatpush1.msra.mxu0 0.0
    %2939 = vmatprep.subr.mxu0 0.0
    %2940 = vmatpush1.msra.mxu0 0.0
    %2941 = vmatprep.subr.mxu0 0.0
    %2942 = vmatpush1.msra.mxu0 0.0
    %2943 = vmatprep.subr.mxu0 0.0
    %2944 = vmatpush1.msra.mxu0 0.0
    %2945 = vmatprep.subr.mxu0 0.0
    %2946 = vmatpush1.msra.mxu0 0.0
    %2947 = vmatprep.subr.mxu0 0.0
    %2948 = vmatpush1.msra.mxu0 0.0
    %2949 = vmatprep.subr.mxu0 0.0
    %2950 = vmatpush1.msra.mxu0 0.0
    %2951 = vmatprep.subr.mxu0 0.0
    %2952 = vmatpush1.msra.mxu0 0.0
    %2953 = vmatprep.mubr.f32.mxu0 0.0
    %2954 = vmatmul.mubr.f32.gmra.mrb[0].mxu0 %v2884
    %v2955 = vpop.f32.mrb[0].mxu0
    %v2956 = vadd.f32 %v2881, %v2955
    %v2957 = vpop.f32.mrb[0].mxu0
    %2958 = vmatprep.mubr.f32.mxu0 0.0
    %2959 = vmatmul.mubr.f32.gmra.mrb[0].mxu0 %v2887
    %v2960 = vpop.f32.mrb[0].mxu0
    %v2961 = vadd.f32 %v2881, %v2960
    %v2962 = vpop.f32.mrb[0].mxu0
    %2963 = vdwg.mxu0
    %2964 = vst.msk [vmem:[#allocation8] sm:$0xff] %vm75, %v2956
    %2965 = vst.msk [vmem:[#allocation8 + $0x8] sm:$0xff] %vm75, %v2961
    // Predicated region
    $region34: #{attention_forward.1} parent=1 // pred_check
      _
    $region35: #{attention_forward.1} parent=1 // pred_check_branch
      %2967 = sbr.rel (0) target = $region37
    $region36: #{attention_forward.1} parent=1 // pred_region
      %s2969 = ssub.s32 256, 256
      %2970 = vsyncadd [#allocation4], %s2969
      %s2971 = sshll.u32 [#allocation8], 4
      %s2972 = int_to_ptr.vmem [resolvable:$true] %s2971
      %2977 = dma.vmem_to_hbm [thread:$0]  %s2972, 256, %s5, [#allocation4], 128, 128, 8
    $region37: #{attention_forward.1} parent=1 // pred_fallthru
      _
    // Predicated region
    $region38: #{attention_forward.1} parent=1 // pred_check
      _
    $region39: #{attention_forward.1} parent=1 // pred_check_branch
      %2979 = sbr.rel (0) target = $region41
    $region40: #{attention_forward.1} parent=1 // pred_region
      %2980 = dma.done [#allocation4], 256
    $region41: #{attention_forward.1} parent=1 // pred_fallthru
      _
    %2981 = vsyncpa [#allocation3], 1
    %2982 = vsyncpa [#allocation6], 1
    %2983 = vsyncpa [#allocation4], 1

</llo_original>
